<compile_context>
chip_gen: v5e
topology: v5e:2x2
jax: 0.10.0
libtpu: 0.0.40
codegen_flags: <defaults>
</compile_context>

<pallas_src>
import functools

import jax
import jax.numpy as jnp
from jax import lax
from jax.experimental import pallas as pl
from jax.experimental.pallas import tpu as pltpu

HIDDEN = 768          # nn.LayerNorm(768) is hard-coded in the module
CONCAT = 2 * HIDDEN   # 1536, input dim of hidden_1
NUM_CLASSES = 2
PAD_N = 128           # classifier lane-padded width (lane-dense output tile)
CE_LANE = NUM_CLASSES  # pad lane of the combined output carrying per-row CE
ALPHA = 0.1
LN_EPS = 1e-12
MAX_TILE_B = 512
# F.gelu default is the exact erf GELU; the tanh approximation routes the
# transcendental to the EUP slot (co-issues with MXU/VALU), deviation ~3e-4.
GELU_APPROX_TANH = True


def _round_up(x, m):
    return ((x + m - 1) // m) * m


def _choose_tile_b(b):
    """16-aligned (bf16 sublane packing) batch tile; grid>=2 for larger batches."""
    if b >= 32:
        return min(MAX_TILE_B, _round_up(pl.cdiv(b, 2), 16))
    return _round_up(max(b, 1), 16)


# ----------------------------------------------------------------------------
# Pallas kernel: the full classification head + per-row CE
# ----------------------------------------------------------------------------
def _head_kernel(tl_ref,       # (TILE_B, 768)  bf16  tl CLS tile
                 en_ref,       # (TILE_B, 768)  bf16  en CLS tile
                 w1a_ref,      # (768, 768)     bf16  hidden_1.weight[:, :768].T
                 w1b_ref,      # (768, 768)     bf16  hidden_1.weight[:, 768:].T
                 b1_ref,       # (1, 768)       f32   hidden_1.bias
                 g_ref,        # (1, 768)       f32   layer_norm.weight
                 beta_ref,     # (1, 768)       f32   layer_norm.bias
                 w2_ref,       # (768, 128)     bf16  classifier.weight.T, padded
                 b2_ref,       # (1, 128)       f32   classifier.bias, padded
                 lbl_ref,      # (TILE_B, 1)    i32   labels
                 out_ref):     # out (TILE_B, 128) f32: lanes 0..1 logits, lane 2 CE
    # hidden_1 without the host-side concat: concat(tl, en) @ W1 == tl@W1a + en@W1b
    h = (jnp.dot(tl_ref[...], w1a_ref[...], preferred_element_type=jnp.float32)
         + jnp.dot(en_ref[...], w1b_ref[...], preferred_element_type=jnp.float32)
         + b1_ref[...])

    # GELU on the EUP (tanh) instead of a VALU erf polynomial.
    h = jax.nn.gelu(h, approximate=GELU_APPROX_TANH)

    # LayerNorm(768, eps=1e-12), f32; fused single-pass statistics.
    mu = jnp.mean(h, axis=-1, keepdims=True)
    m2 = jnp.mean(h * h, axis=-1, keepdims=True)
    var = jnp.maximum(m2 - mu * mu, 0.0)          # guard fp cancellation
    hn = (h - mu) * lax.rsqrt(var + LN_EPS)
    hn = hn * g_ref[...] + beta_ref[...]

    # Dropout: evaluation mode -> identity
    # TODO(synk): training-mode dropout (p=0.1) not applied; eval semantics used.

    # Classifier, lane-padded to 128 output columns (single clean MXU tile).
    logits = (jnp.dot(hn.astype(jnp.bfloat16), w2_ref[...],
                      preferred_element_type=jnp.float32) + b2_ref[...])

    # CrossEntropy via stable log-softmax over the 2 real classes only
    # (padded lanes masked to -1e30 so they contribute nothing to max/LSE).
    cls_ids = lax.broadcasted_iota(jnp.int32, logits.shape, 1)
    cls_valid = cls_ids < NUM_CLASSES
    masked = jnp.where(cls_valid, logits, jnp.float32(-1e30))
    m = jnp.max(masked, axis=-1, keepdims=True)
    lse = m + jnp.log(jnp.sum(jnp.exp(masked - m), axis=-1, keepdims=True))
    logp = logits - lse

    # -logp[label] per row (padded batch rows are sliced away in the wrapper).
    ce = -jnp.sum(jnp.where(cls_ids == lbl_ref[...], logp, 0.0),
                  axis=-1, keepdims=True)

    # Single lane-dense f32 output: logits in lanes 0..1, per-row CE in lane 2.
    out_ref[...] = jnp.where(cls_ids == CE_LANE, ce, logits)


# ----------------------------------------------------------------------------
# One-time weight preprocessing (hoisted out of the per-step forward)
# ----------------------------------------------------------------------------
def prepare_head_params(params):
    w1 = params["w1"].astype(jnp.bfloat16)               # (1536, 768) = W1.T
    w1a, w1b = w1[:HIDDEN], w1[HIDDEN:]                  # tl half / en half
    b1 = params["b1"].astype(jnp.float32).reshape(1, HIDDEN)
    g = params["ln_g"].astype(jnp.float32).reshape(1, HIDDEN)
    beta = params["ln_b"].astype(jnp.float32).reshape(1, HIDDEN)
    w2 = jnp.zeros((HIDDEN, PAD_N), jnp.bfloat16).at[:, :NUM_CLASSES].set(
        params["w2"].astype(jnp.bfloat16))
    b2 = jnp.zeros((1, PAD_N), jnp.float32).at[:, :NUM_CLASSES].set(
        params["b2"].astype(jnp.float32).reshape(1, NUM_CLASSES))
    return {"w1a": w1a, "w1b": w1b, "b1": b1, "ln_g": g, "ln_b": beta,
            "w2": w2, "b2": b2}


def bilingual_cls_head(tl_cls, en_cls, head, labels, reg_scalar):
    """Classification head + CE loss in a single batch-tiled Pallas kernel."""
    b = tl_cls.shape[0]
    tile_b = _choose_tile_b(b)
    b_pad = _round_up(b, tile_b)
    grid = b_pad // tile_b

    def pad_rows(x):
        return jnp.pad(x, ((0, b_pad - b), (0, 0))) if b_pad != b else x

    # bf16 matmul operands; f32 elementwise params (v5e has no bf16 VPU/EUP).
    tl = pad_rows(tl_cls.astype(jnp.bfloat16))
    en = pad_rows(en_cls.astype(jnp.bfloat16))
    lbl = pad_rows(labels.astype(jnp.int32).reshape(b, 1))

    flops = 2 * b_pad * (2 * HIDDEN * HIDDEN + HIDDEN * PAD_N)
    transcendentals = b_pad * (HIDDEN + PAD_N)
    bytes_accessed = (2 * HIDDEN * HIDDEN * 2 + HIDDEN * PAD_N * 2   # weights bf16
                      + 2 * b_pad * HIDDEN * 2                       # activations bf16
                      + b_pad * PAD_N * 4                            # combined output
                      + 3 * HIDDEN * 4 + PAD_N * 4 + b_pad * 4)      # biases/labels

    wmap = lambda i: (0, 0)   # weights: constant block -> VMEM-resident across tiles
    bmap = lambda i: (i, 0)   # batch-tiled arrays

    out = pl.pallas_call(
        _head_kernel,
        out_shape=jax.ShapeDtypeStruct((b_pad, PAD_N), jnp.float32),
        grid_spec=pltpu.PrefetchScalarGridSpec(
            num_scalar_prefetch=0,
            grid=(grid,),
            in_specs=[
                pl.BlockSpec((tile_b, HIDDEN), bmap),   # tl
                pl.BlockSpec((tile_b, HIDDEN), bmap),   # en
                pl.BlockSpec((HIDDEN, HIDDEN), wmap),   # w1a
                pl.BlockSpec((HIDDEN, HIDDEN), wmap),   # w1b
                pl.BlockSpec((1, HIDDEN), wmap),        # b1
                pl.BlockSpec((1, HIDDEN), wmap),        # ln gamma
                pl.BlockSpec((1, HIDDEN), wmap),        # ln beta
                pl.BlockSpec((HIDDEN, PAD_N), wmap),    # w2 (padded)
                pl.BlockSpec((1, PAD_N), wmap),         # b2 (padded)
                pl.BlockSpec((tile_b, 1), bmap),        # labels
            ],
            out_specs=pl.BlockSpec((tile_b, PAD_N), bmap),  # lane-dense combined out
        ),
        compiler_params=pltpu.CompilerParams(
            dimension_semantics=("parallel",),
            vmem_limit_bytes=32 * 1024 * 1024),
        cost_estimate=pl.CostEstimate(
            flops=flops, transcendentals=transcendentals,
            bytes_accessed=bytes_accessed),
    )(tl, en, head["w1a"], head["w1b"], head["b1"], head["ln_g"], head["ln_b"],
      head["w2"], head["b2"], lbl)

    logits = out[:b, :NUM_CLASSES]
    ce_rows = out[:b, CE_LANE]
    loss = jnp.sum(ce_rows) / b + reg_scalar   # CE mean + alpha*(reg_tl+reg_en)
    return logits, loss


# ----------------------------------------------------------------------------
# Glue: toy encoders + regularizer (plain JAX)
# ----------------------------------------------------------------------------
def toy_encoder(emb_table, input_ids, attention_mask):
    # TODO(synk): full pretrained RoBERTa / BERT transformer encoders have no
    # clean self-contained Pallas equivalent; stand-in is an embedding lookup
    # with masked mean pooling producing the "CLS" vector (B, 768).
    e = emb_table[input_ids]                                   # (B, S, 768)
    mask = attention_mask[..., None].astype(e.dtype)
    return (e * mask).sum(axis=1) / jnp.maximum(mask.sum(axis=1), 1.0)


def get_difference(params, default_params):
    # sum_i sqrt(mean((p_i - p0_i)^2) + 1e-16)   (RegularizedCLSModel.get_difference)
    return sum(
        jnp.sqrt(jnp.mean((p - q) ** 2) + 1e-16)
        for p, q in zip(params, default_params)
    )


def init_params(key, vocab_size):
    ks = jax.random.split(key, 6)
    scale1 = 1.0 / jnp.sqrt(CONCAT)
    scale2 = 1.0 / jnp.sqrt(HIDDEN)
    params = {
        "w1": jax.random.normal(ks[0], (CONCAT, HIDDEN), jnp.float32) * scale1,
        "b1": jnp.zeros((1, HIDDEN), jnp.float32),
        "ln_g": jnp.ones((1, HIDDEN), jnp.float32),
        "ln_b": jnp.zeros((1, HIDDEN), jnp.float32),
        "w2": jax.random.normal(ks[1], (HIDDEN, NUM_CLASSES), jnp.float32) * scale2,
        "b2": jnp.zeros((1, NUM_CLASSES), jnp.float32),
        "tl_emb": jax.random.normal(ks[2], (vocab_size, HIDDEN), jnp.float32) * 0.02,
        "en_emb": jax.random.normal(ks[3], (vocab_size, HIDDEN), jnp.float32) * 0.02,
    }
    return params


@jax.jit
def forward(params, head, tl_ids, tl_mask, en_ids, en_mask, labels):
    tl_cls = toy_encoder(params["tl_emb"], tl_ids, tl_mask)   # last_hidden_state[:, 0] stand-in
    en_cls = toy_encoder(params["en_emb"], en_ids, en_mask)

    # Regularizer: parameters equal their defaults at init (fresh model), so each
    # term is sqrt(0 + 1e-16) = 1e-8 per parameter tensor.
    tl_params = [params["tl_emb"]]
    en_params = [params["en_emb"]]
    diff = get_difference(tl_params, tl_params) + get_difference(en_params, en_params)
    reg = ALPHA * diff   # folded into the loss on the wrapper side (no kernel operand)

    logits, loss = bilingual_cls_head(tl_cls, en_cls, head, labels, reg)
    return logits, loss


if __name__ == "__main__":
    key = jax.random.PRNGKey(0)
    k_param, k_tl, k_en, k_lab, k_mask = jax.random.split(key, 5)

    B, S, VOCAB = 8, 16, 100
    params = init_params(k_param, VOCAB)
    head = prepare_head_params(params)   # one-time weight prep, outside the jitted step

    tl_ids = jax.random.randint(k_tl, (B, S), 0, VOCAB, dtype=jnp.int32)
    en_ids = jax.random.randint(k_en, (B, S), 0, VOCAB, dtype=jnp.int32)
    tl_mask = jnp.ones((B, S), jnp.float32)
    en_mask = (jax.random.uniform(k_mask, (B, S)) > 0.2).astype(jnp.float32)
    en_mask = en_mask.at[:, 0].set(1.0)
    labels = jax.random.randint(k_lab, (B,), 0, NUM_CLASSES, dtype=jnp.int32)

    logits, loss = forward(params, head, tl_ids, tl_mask, en_ids, en_mask, labels)
    jax.block_until_ready((logits, loss))

    assert logits.shape == (B, NUM_CLASSES)
    assert loss.shape == ()
    assert bool(jnp.isfinite(loss))
    assert bool(jnp.all(jnp.isfinite(logits)))
    print("KERNEL_OK")
</pallas_src>

<mosaic_0001>
module attributes {stable_mosaic.version = 11 : i64} {
  func.func @_head_kernel(%arg0: i32, %arg1: memref<16x768xbf16, #tpu.memory_space<vmem>>, %arg2: memref<16x768xbf16, #tpu.memory_space<vmem>>, %arg3: memref<768x768xbf16, #tpu.memory_space<vmem>>, %arg4: memref<768x768xbf16, #tpu.memory_space<vmem>>, %arg5: memref<1x768xf32, #tpu.memory_space<vmem>>, %arg6: memref<1x768xf32, #tpu.memory_space<vmem>>, %arg7: memref<1x768xf32, #tpu.memory_space<vmem>>, %arg8: memref<768x128xbf16, #tpu.memory_space<vmem>>, %arg9: memref<1x128xf32, #tpu.memory_space<vmem>>, %arg10: memref<16x1xi32, #tpu.memory_space<vmem>>, %arg11: memref<16x128xf32, #tpu.memory_space<vmem>>) attributes {dimension_semantics = [#tpu.dimension_semantics<parallel>], iteration_bounds = array<i64: 1>, scalar_prefetch = 0 : i64, scratch_operands = 0 : i64, tpu.core_type = #tpu.core_type<tc>, window_params = [{transform_indices = @transform_0, window_bounds = array<i64: 16, 768>}, {transform_indices = @transform_1, window_bounds = array<i64: 16, 768>}, {pipeline_mode = #tpu.pipeline_mode<synchronous>, transform_indices = @transform_2, window_bounds = array<i64: 768, 768>}, {pipeline_mode = #tpu.pipeline_mode<synchronous>, transform_indices = @transform_3, window_bounds = array<i64: 768, 768>}, {pipeline_mode = #tpu.pipeline_mode<synchronous>, transform_indices = @transform_4, window_bounds = array<i64: 1, 768>}, {pipeline_mode = #tpu.pipeline_mode<synchronous>, transform_indices = @transform_5, window_bounds = array<i64: 1, 768>}, {pipeline_mode = #tpu.pipeline_mode<synchronous>, transform_indices = @transform_6, window_bounds = array<i64: 1, 768>}, {pipeline_mode = #tpu.pipeline_mode<synchronous>, transform_indices = @transform_7, window_bounds = array<i64: 768, 128>}, {pipeline_mode = #tpu.pipeline_mode<synchronous>, transform_indices = @transform_8, window_bounds = array<i64: 1, 128>}, {transform_indices = @transform_9, window_bounds = array<i64: 16, 1>}, {transform_indices = @transform_10, window_bounds = array<i64: 16, 128>}]} {
    %c0 = arith.constant 0 : index
    %c0_0 = arith.constant 0 : index
    %0 = vector.load %arg1[%c0, %c0_0] : memref<16x768xbf16, #tpu.memory_space<vmem>>, vector<16x768xbf16>
    %c0_1 = arith.constant 0 : index
    %c0_2 = arith.constant 0 : index
    %1 = vector.load %arg3[%c0_1, %c0_2] : memref<768x768xbf16, #tpu.memory_space<vmem>>, vector<768x768xbf16>
    %cst = arith.constant dense<0.000000e+00> : vector<16x768xf32>
    %2 = tpu.matmul %0, %1, %cst {dimension_numbers = #tpu.dot_dimension_numbers<[1], [0], [0], [1], [0, 0, 1, 1], [], []>} : vector<16x768xbf16>, vector<768x768xbf16>, vector<16x768xf32> -> vector<16x768xf32>
    %c0_3 = arith.constant 0 : index
    %c0_4 = arith.constant 0 : index
    %3 = vector.load %arg2[%c0_3, %c0_4] : memref<16x768xbf16, #tpu.memory_space<vmem>>, vector<16x768xbf16>
    %c0_5 = arith.constant 0 : index
    %c0_6 = arith.constant 0 : index
    %4 = vector.load %arg4[%c0_5, %c0_6] : memref<768x768xbf16, #tpu.memory_space<vmem>>, vector<768x768xbf16>
    %cst_7 = arith.constant dense<0.000000e+00> : vector<16x768xf32>
    %5 = tpu.matmul %3, %4, %cst_7 {dimension_numbers = #tpu.dot_dimension_numbers<[1], [0], [0], [1], [0, 0, 1, 1], [], []>} : vector<16x768xbf16>, vector<768x768xbf16>, vector<16x768xf32> -> vector<16x768xf32>
    %6 = arith.addf %2, %5 : vector<16x768xf32>
    %c0_8 = arith.constant 0 : index
    %c0_9 = arith.constant 0 : index
    %7 = vector.load %arg5[%c0_8, %c0_9] : memref<1x768xf32, #tpu.memory_space<vmem>>, vector<1x768xf32>
    %8 = vector.broadcast %7 : vector<1x768xf32> to vector<16x768xf32>
    %9 = arith.addf %6, %8 : vector<16x768xf32>
    %10 = arith.mulf %9, %9 : vector<16x768xf32>
    %11 = arith.mulf %9, %10 : vector<16x768xf32>
    %cst_10 = arith.constant 4.471500e-02 : f32
    %12 = vector.broadcast %cst_10 : f32 to vector<16x768xf32>
    %13 = arith.mulf %12, %11 : vector<16x768xf32>
    %14 = arith.addf %9, %13 : vector<16x768xf32>
    %cst_11 = arith.constant 0.797884583 : f32
    %15 = vector.broadcast %cst_11 : f32 to vector<16x768xf32>
    %16 = arith.mulf %15, %14 : vector<16x768xf32>
    %17 = math.tanh %16 : vector<16x768xf32>
    %cst_12 = arith.constant 1.000000e+00 : f32
    %18 = vector.broadcast %cst_12 : f32 to vector<16x768xf32>
    %19 = arith.addf %18, %17 : vector<16x768xf32>
    %cst_13 = arith.constant 5.000000e-01 : f32
    %20 = vector.broadcast %cst_13 : f32 to vector<16x768xf32>
    %21 = arith.mulf %20, %19 : vector<16x768xf32>
    %22 = arith.mulf %9, %21 : vector<16x768xf32>
    %cst_14 = arith.constant dense<0.000000e+00> : vector<16xf32>
    %23 = vector.multi_reduction <add>, %22, %cst_14 [1] : vector<16x768xf32> to vector<16xf32>
    %24 = vector.shape_cast %23 : vector<16xf32> to vector<16x1xf32>
    %cst_15 = arith.constant 7.680000e+02 : f32
    %25 = vector.broadcast %cst_15 : f32 to vector<16x1xf32>
    %26 = arith.divf %24, %25 : vector<16x1xf32>
    %27 = arith.mulf %22, %22 : vector<16x768xf32>
    %cst_16 = arith.constant dense<0.000000e+00> : vector<16xf32>
    %28 = vector.multi_reduction <add>, %27, %cst_16 [1] : vector<16x768xf32> to vector<16xf32>
    %29 = vector.shape_cast %28 : vector<16xf32> to vector<16x1xf32>
    %cst_17 = arith.constant 7.680000e+02 : f32
    %30 = vector.broadcast %cst_17 : f32 to vector<16x1xf32>
    %31 = arith.divf %29, %30 : vector<16x1xf32>
    %32 = arith.mulf %26, %26 : vector<16x1xf32>
    %33 = arith.subf %31, %32 : vector<16x1xf32>
    %cst_18 = arith.constant 0.000000e+00 : f32
    %34 = vector.broadcast %cst_18 : f32 to vector<16x1xf32>
    %35 = arith.maximumf %33, %34 : vector<16x1xf32>
    %36 = vector.broadcast %26 : vector<16x1xf32> to vector<16x768xf32>
    %37 = arith.subf %22, %36 : vector<16x768xf32>
    %cst_19 = arith.constant 9.99999996E-13 : f32
    %38 = vector.broadcast %cst_19 : f32 to vector<16x1xf32>
    %39 = arith.addf %35, %38 : vector<16x1xf32>
    %40 = math.rsqrt %39 : vector<16x1xf32>
    %41 = vector.broadcast %40 : vector<16x1xf32> to vector<16x768xf32>
    %42 = arith.mulf %37, %41 : vector<16x768xf32>
    %c0_20 = arith.constant 0 : index
    %c0_21 = arith.constant 0 : index
    %43 = vector.load %arg6[%c0_20, %c0_21] : memref<1x768xf32, #tpu.memory_space<vmem>>, vector<1x768xf32>
    %44 = vector.broadcast %43 : vector<1x768xf32> to vector<16x768xf32>
    %45 = arith.mulf %42, %44 : vector<16x768xf32>
    %c0_22 = arith.constant 0 : index
    %c0_23 = arith.constant 0 : index
    %46 = vector.load %arg7[%c0_22, %c0_23] : memref<1x768xf32, #tpu.memory_space<vmem>>, vector<1x768xf32>
    %47 = vector.broadcast %46 : vector<1x768xf32> to vector<16x768xf32>
    %48 = arith.addf %45, %47 : vector<16x768xf32>
    %49 = arith.truncf %48 : vector<16x768xf32> to vector<16x768xbf16>
    %c0_24 = arith.constant 0 : index
    %c0_25 = arith.constant 0 : index
    %50 = vector.load %arg8[%c0_24, %c0_25] : memref<768x128xbf16, #tpu.memory_space<vmem>>, vector<768x128xbf16>
    %cst_26 = arith.constant dense<0.000000e+00> : vector<16x128xf32>
    %51 = tpu.matmul %49, %50, %cst_26 {dimension_numbers = #tpu.dot_dimension_numbers<[1], [0], [0], [1], [0, 0, 1, 1], [], []>} : vector<16x768xbf16>, vector<768x128xbf16>, vector<16x128xf32> -> vector<16x128xf32>
    %c0_27 = arith.constant 0 : index
    %c0_28 = arith.constant 0 : index
    %52 = vector.load %arg9[%c0_27, %c0_28] : memref<1x128xf32, #tpu.memory_space<vmem>>, vector<1x128xf32>
    %53 = vector.broadcast %52 : vector<1x128xf32> to vector<16x128xf32>
    %54 = arith.addf %51, %53 : vector<16x128xf32>
    %55 = tpu.iota {dimensions = array<i32: 1>} : vector<16x128xi32>
    %c2_i32 = arith.constant 2 : i32
    %56 = vector.broadcast %c2_i32 : i32 to vector<16x128xi32>
    %57 = arith.cmpi slt, %55, %56 : vector<16x128xi32>
    %cst_29 = arith.constant -1.000000e+30 : f32
    %58 = vector.broadcast %cst_29 : f32 to vector<16x128xf32>
    %59 = arith.select %57, %54, %58 : vector<16x128xi1>, vector<16x128xf32>
    %cst_30 = arith.constant dense<0xFF800000> : vector<16xf32>
    %60 = vector.multi_reduction <maximumf>, %59, %cst_30 [1] : vector<16x128xf32> to vector<16xf32>
    %61 = vector.shape_cast %60 : vector<16xf32> to vector<16x1xf32>
    %62 = vector.broadcast %61 : vector<16x1xf32> to vector<16x128xf32>
    %63 = arith.subf %59, %62 : vector<16x128xf32>
    %64 = math.exp %63 : vector<16x128xf32>
    %cst_31 = arith.constant dense<0.000000e+00> : vector<16xf32>
    %65 = vector.multi_reduction <add>, %64, %cst_31 [1] : vector<16x128xf32> to vector<16xf32>
    %66 = vector.shape_cast %65 : vector<16xf32> to vector<16x1xf32>
    %67 = math.log %66 : vector<16x1xf32>
    %68 = arith.addf %61, %67 : vector<16x1xf32>
    %69 = vector.broadcast %68 : vector<16x1xf32> to vector<16x128xf32>
    %70 = arith.subf %54, %69 : vector<16x128xf32>
    %c0_32 = arith.constant 0 : index
    %c0_33 = arith.constant 0 : index
    %71 = vector.load %arg10[%c0_32, %c0_33] : memref<16x1xi32, #tpu.memory_space<vmem>>, vector<16x1xi32>
    %72 = vector.broadcast %71 : vector<16x1xi32> to vector<16x128xi32>
    %73 = arith.cmpi eq, %55, %72 : vector<16x128xi32>
    %cst_34 = arith.constant 0.000000e+00 : f32
    %74 = vector.broadcast %cst_34 : f32 to vector<16x128xf32>
    %75 = arith.select %73, %70, %74 : vector<16x128xi1>, vector<16x128xf32>
    %cst_35 = arith.constant dense<0.000000e+00> : vector<16xf32>
    %76 = vector.multi_reduction <add>, %75, %cst_35 [1] : vector<16x128xf32> to vector<16xf32>
    %77 = vector.shape_cast %76 : vector<16xf32> to vector<16x1xf32>
    %cst_36 = arith.constant 0.000000e+00 : f32
    %78 = vector.broadcast %cst_36 : f32 to vector<16x1xf32>
    %79 = arith.subf %78, %77 : vector<16x1xf32>
    %c2_i32_37 = arith.constant 2 : i32
    %80 = vector.broadcast %c2_i32_37 : i32 to vector<16x128xi32>
    %81 = arith.cmpi eq, %55, %80 : vector<16x128xi32>
    %82 = vector.shape_cast %79 : vector<16x1xf32> to vector<16x1xf32>
    %83 = vector.broadcast %82 : vector<16x1xf32> to vector<16x128xf32>
    %84 = arith.select %81, %83, %54 : vector<16x128xi1>, vector<16x128xf32>
    %c0_38 = arith.constant 0 : index
    %c0_39 = arith.constant 0 : index
    %85 = vector.load %arg11[%c0_38, %c0_39] : memref<16x128xf32, #tpu.memory_space<vmem>>, vector<16x128xf32>
    tpu.vector_store %arg11[%c0_38, %c0_39], %84 {strides = array<i32>} : memref<16x128xf32, #tpu.memory_space<vmem>>, vector<16x128xf32>,
    return
  }
  func.func @transform_0(%arg0: i32) -> (i32, i32) {
    %c0_i32 = arith.constant 0 : i32
    %c0_i32_0 = arith.constant 0 : i32
    return %arg0, %c0_i32 : i32, i32
  }
  func.func @transform_1(%arg0: i32) -> (i32, i32) {
    %c0_i32 = arith.constant 0 : i32
    %c0_i32_0 = arith.constant 0 : i32
    return %arg0, %c0_i32 : i32, i32
  }
  func.func @transform_2(%arg0: i32) -> (i32, i32) {
    %c0_i32 = arith.constant 0 : i32
    %c0_i32_0 = arith.constant 0 : i32
    %c0_i32_1 = arith.constant 0 : i32
    return %c0_i32, %c0_i32_0 : i32, i32
  }
  func.func @transform_3(%arg0: i32) -> (i32, i32) {
    %c0_i32 = arith.constant 0 : i32
    %c0_i32_0 = arith.constant 0 : i32
    %c0_i32_1 = arith.constant 0 : i32
    return %c0_i32, %c0_i32_0 : i32, i32
  }
  func.func @transform_4(%arg0: i32) -> (i32, i32) {
    %c0_i32 = arith.constant 0 : i32
    %c0_i32_0 = arith.constant 0 : i32
    %c0_i32_1 = arith.constant 0 : i32
    return %c0_i32, %c0_i32_0 : i32, i32
  }
  func.func @transform_5(%arg0: i32) -> (i32, i32) {
    %c0_i32 = arith.constant 0 : i32
    %c0_i32_0 = arith.constant 0 : i32
    %c0_i32_1 = arith.constant 0 : i32
    return %c0_i32, %c0_i32_0 : i32, i32
  }
  func.func @transform_6(%arg0: i32) -> (i32, i32) {
    %c0_i32 = arith.constant 0 : i32
    %c0_i32_0 = arith.constant 0 : i32
    %c0_i32_1 = arith.constant 0 : i32
    return %c0_i32, %c0_i32_0 : i32, i32
  }
  func.func @transform_7(%arg0: i32) -> (i32, i32) {
    %c0_i32 = arith.constant 0 : i32
    %c0_i32_0 = arith.constant 0 : i32
    %c0_i32_1 = arith.constant 0 : i32
    return %c0_i32, %c0_i32_0 : i32, i32
  }
  func.func @transform_8(%arg0: i32) -> (i32, i32) {
    %c0_i32 = arith.constant 0 : i32
    %c0_i32_0 = arith.constant 0 : i32
    %c0_i32_1 = arith.constant 0 : i32
    return %c0_i32, %c0_i32_0 : i32, i32
  }
  func.func @transform_9(%arg0: i32) -> (i32, i32) {
    %c0_i32 = arith.constant 0 : i32
    %c0_i32_0 = arith.constant 0 : i32
    return %arg0, %c0_i32 : i32, i32
  }
  func.func @transform_10(%arg0: i32) -> (i32, i32) {
    %c0_i32 = arith.constant 0 : i32
    %c0_i32_0 = arith.constant 0 : i32
    return %arg0, %c0_i32 : i32, i32
  }
}

</mosaic_0001>

<llo_original>
// kernel: forward.1
$region0: #{forward.1}
  #allocation0 [shape = 'u32[]', space=smem, size = 0x4, offset = 0x4, fixed_abs, tag = 'smem constant byte address 0x4 - core index']
  #allocation1 [shape = 'u32[72,128]{1,0:T(1,128)}', space=vmem, size = 0x9000, scoped, tag = 'internal scratch']
  %s0 = inlined_call_operand.vmem [shape: bf16[16,768], index: 0, kind: input, shape index: {}]
  %s1 = inlined_call_operand.vmem [shape: bf16[16,768], index: 1, kind: input, shape index: {}]
  %s2 = inlined_call_operand.vmem [shape: bf16[768,768], index: 2, kind: input, shape index: {}]
  %s3 = inlined_call_operand.vmem [shape: bf16[768,768], index: 3, kind: input, shape index: {}]
  %s4 = inlined_call_operand.vmem [shape: f32[1,768], index: 4, kind: input, shape index: {}]
  %s5 = inlined_call_operand.vmem [shape: f32[1,768], index: 5, kind: input, shape index: {}]
  %s6 = inlined_call_operand.vmem [shape: f32[1,768], index: 6, kind: input, shape index: {}]
  %s7 = inlined_call_operand.vmem [shape: bf16[768,128], index: 7, kind: input, shape index: {}]
  %s8 = inlined_call_operand.vmem [shape: f32[1,128], index: 8, kind: input, shape index: {}]
  %s9 = inlined_call_operand.vmem [shape: s32[16,1], index: 9, kind: input, shape index: {}]
  %s10 = inlined_call_operand.vmem [shape: f32[16,128], index: 10, kind: output, shape index: {}]
  %s11 = sld [smem:[#allocation0]]
  $region50: #{forward.1} parent=0
    _
  %s13 = ssub.s32 1, %s11
  %s14 = scalar_select 0, %s13, %s11
  // Predicated region
  $region2: #{forward.1} parent=0 // pred_check
    _
  $region3: #{forward.1} parent=0 // pred_check_branch
    %16 = sbr.rel (0) target = $region5
  $region4: #{forward.1} parent=0 // pred_region
    _
  $region5: #{forward.1} parent=0 // pred_fallthru
    _
  // Predicated region
  $region6: #{forward.1} parent=0 // pred_check
    _
  $region7: #{forward.1} parent=0 // pred_check_branch
    %18 = sbr.rel (0) target = $region9
  $region8: #{forward.1} parent=0 // pred_region
    _
  $region9: #{forward.1} parent=0 // pred_fallthru
    _
  // Predicated region
  $region10: #{forward.1} parent=0 // pred_check
    _
  $region11: #{forward.1} parent=0 // pred_check_branch
    %20 = sbr.rel (0) target = $region13
  $region12: #{forward.1} parent=0 // pred_region
    _
  $region13: #{forward.1} parent=0 // pred_fallthru
    _
  // Predicated region
  $region14: #{forward.1} parent=0 // pred_check
    _
  $region15: #{forward.1} parent=0 // pred_check_branch
    %22 = sbr.rel (0) target = $region17
  $region16: #{forward.1} parent=0 // pred_region
    _
  $region17: #{forward.1} parent=0 // pred_fallthru
    _
  // Predicated region
  $region18: #{forward.1} parent=0 // pred_check
    _
  $region19: #{forward.1} parent=0 // pred_check_branch
    %24 = sbr.rel (0) target = $region21
  $region20: #{forward.1} parent=0 // pred_region
    _
  $region21: #{forward.1} parent=0 // pred_fallthru
    _
  // Predicated region
  $region22: #{forward.1} parent=0 // pred_check
    _
  $region23: #{forward.1} parent=0 // pred_check_branch
    %26 = sbr.rel (0) target = $region25
  $region24: #{forward.1} parent=0 // pred_region
    _
  $region25: #{forward.1} parent=0 // pred_fallthru
    _
  // Predicated region
  $region26: #{forward.1} parent=0 // pred_check
    _
  $region27: #{forward.1} parent=0 // pred_check_branch
    %28 = sbr.rel (0) target = $region29
  $region28: #{forward.1} parent=0 // pred_region
    _
  $region29: #{forward.1} parent=0 // pred_fallthru
    _
  // Predicated region
  $region30: #{forward.1} parent=0 // pred_check
    _
  $region31: #{forward.1} parent=0 // pred_check_branch
    %30 = sbr.rel (0) target = $region33
  $region32: #{forward.1} parent=0 // pred_region
    _
  $region33: #{forward.1} parent=0 // pred_fallthru
    _
  // Predicated region
  $region34: #{forward.1} parent=0 // pred_check
    _
  $region35: #{forward.1} parent=0 // pred_check_branch
    %32 = sbr.rel (0) target = $region37
  $region36: #{forward.1} parent=0 // pred_region
    _
  $region37: #{forward.1} parent=0 // pred_fallthru
    _
  // Predicated region
  $region38: #{forward.1} parent=0 // pred_check
    _
  $region39: #{forward.1} parent=0 // pred_check_branch
    %34 = sbr.rel (0) target = $region41
  $region40: #{forward.1} parent=0 // pred_region
    _
  $region41: #{forward.1} parent=0 // pred_fallthru
    _
  %v35 = vld [vmem:[%s0] sm:$0xff]
  %v36 = vld [vmem:[%s0 + $0x8] sm:$0xff]
  %v37 = vld [vmem:[%s0 + $0x10] sm:$0xff]
  %v38 = vld [vmem:[%s0 + $0x18] sm:$0xff]
  %v39 = vld [vmem:[%s0 + $0x20] sm:$0xff]
  %v40 = vld [vmem:[%s0 + $0x28] sm:$0xff]
  %v41 = vld [vmem:[%s2] sm:$0xff]
  %v42 = vld [vmem:[%s2 + $0x8] sm:$0xff]
  %v43 = vld [vmem:[%s2 + $0x10] sm:$0xff]
  %v44 = vld [vmem:[%s2 + $0x18] sm:$0xff]
  %v45 = vld [vmem:[%s2 + $0x20] sm:$0xff]
  %v46 = vld [vmem:[%s2 + $0x28] sm:$0xff]
  %v47 = vld [vmem:[%s2 + $0x30] sm:$0xff]
  %v48 = vld [vmem:[%s2 + $0x38] sm:$0xff]
  %v49 = vld [vmem:[%s2 + $0x40] sm:$0xff]
  %v50 = vld [vmem:[%s2 + $0x48] sm:$0xff]
  %v51 = vld [vmem:[%s2 + $0x50] sm:$0xff]
  %v52 = vld [vmem:[%s2 + $0x58] sm:$0xff]
  %v53 = vld [vmem:[%s2 + $0x60] sm:$0xff]
  %v54 = vld [vmem:[%s2 + $0x68] sm:$0xff]
  %v55 = vld [vmem:[%s2 + $0x70] sm:$0xff]
  %v56 = vld [vmem:[%s2 + $0x78] sm:$0xff]
  %v57 = vld [vmem:[%s2 + $0x80] sm:$0xff]
  %v58 = vld [vmem:[%s2 + $0x88] sm:$0xff]
  %v59 = vld [vmem:[%s2 + $0x90] sm:$0xff]
  %v60 = vld [vmem:[%s2 + $0x98] sm:$0xff]
  %v61 = vld [vmem:[%s2 + $0xa0] sm:$0xff]
  %v62 = vld [vmem:[%s2 + $0xa8] sm:$0xff]
  %v63 = vld [vmem:[%s2 + $0xb0] sm:$0xff]
  %v64 = vld [vmem:[%s2 + $0xb8] sm:$0xff]
  %v65 = vld [vmem:[%s2 + $0xc0] sm:$0xff]
  %v66 = vld [vmem:[%s2 + $0xc8] sm:$0xff]
  %v67 = vld [vmem:[%s2 + $0xd0] sm:$0xff]
  %v68 = vld [vmem:[%s2 + $0xd8] sm:$0xff]
  %v69 = vld [vmem:[%s2 + $0xe0] sm:$0xff]
  %v70 = vld [vmem:[%s2 + $0xe8] sm:$0xff]
  %v71 = vld [vmem:[%s2 + $0xf0] sm:$0xff]
  %v72 = vld [vmem:[%s2 + $0xf8] sm:$0xff]
  %v73 = vld [vmem:[%s2 + $0x100] sm:$0xff]
  %v74 = vld [vmem:[%s2 + $0x108] sm:$0xff]
  %v75 = vld [vmem:[%s2 + $0x110] sm:$0xff]
  %v76 = vld [vmem:[%s2 + $0x118] sm:$0xff]
  %v77 = vld [vmem:[%s2 + $0x120] sm:$0xff]
  %v78 = vld [vmem:[%s2 + $0x128] sm:$0xff]
  %v79 = vld [vmem:[%s2 + $0x130] sm:$0xff]
  %v80 = vld [vmem:[%s2 + $0x138] sm:$0xff]
  %v81 = vld [vmem:[%s2 + $0x140] sm:$0xff]
  %v82 = vld [vmem:[%s2 + $0x148] sm:$0xff]
  %v83 = vld [vmem:[%s2 + $0x150] sm:$0xff]
  %v84 = vld [vmem:[%s2 + $0x158] sm:$0xff]
  %v85 = vld [vmem:[%s2 + $0x160] sm:$0xff]
  %v86 = vld [vmem:[%s2 + $0x168] sm:$0xff]
  %v87 = vld [vmem:[%s2 + $0x170] sm:$0xff]
  %v88 = vld [vmem:[%s2 + $0x178] sm:$0xff]
  %v89 = vld [vmem:[%s2 + $0x180] sm:$0xff]
  %v90 = vld [vmem:[%s2 + $0x188] sm:$0xff]
  %v91 = vld [vmem:[%s2 + $0x190] sm:$0xff]
  %v92 = vld [vmem:[%s2 + $0x198] sm:$0xff]
  %v93 = vld [vmem:[%s2 + $0x1a0] sm:$0xff]
  %v94 = vld [vmem:[%s2 + $0x1a8] sm:$0xff]
  %v95 = vld [vmem:[%s2 + $0x1b0] sm:$0xff]
  %v96 = vld [vmem:[%s2 + $0x1b8] sm:$0xff]
  %v97 = vld [vmem:[%s2 + $0x1c0] sm:$0xff]
  %v98 = vld [vmem:[%s2 + $0x1c8] sm:$0xff]
  %v99 = vld [vmem:[%s2 + $0x1d0] sm:$0xff]
  %v100 = vld [vmem:[%s2 + $0x1d8] sm:$0xff]
  %v101 = vld [vmem:[%s2 + $0x1e0] sm:$0xff]
  %v102 = vld [vmem:[%s2 + $0x1e8] sm:$0xff]
  %v103 = vld [vmem:[%s2 + $0x1f0] sm:$0xff]
  %v104 = vld [vmem:[%s2 + $0x1f8] sm:$0xff]
  %v105 = vld [vmem:[%s2 + $0x200] sm:$0xff]
  %v106 = vld [vmem:[%s2 + $0x208] sm:$0xff]
  %v107 = vld [vmem:[%s2 + $0x210] sm:$0xff]
  %v108 = vld [vmem:[%s2 + $0x218] sm:$0xff]
  %v109 = vld [vmem:[%s2 + $0x220] sm:$0xff]
  %v110 = vld [vmem:[%s2 + $0x228] sm:$0xff]
  %v111 = vld [vmem:[%s2 + $0x230] sm:$0xff]
  %v112 = vld [vmem:[%s2 + $0x238] sm:$0xff]
  %v113 = vld [vmem:[%s2 + $0x240] sm:$0xff]
  %v114 = vld [vmem:[%s2 + $0x248] sm:$0xff]
  %v115 = vld [vmem:[%s2 + $0x250] sm:$0xff]
  %v116 = vld [vmem:[%s2 + $0x258] sm:$0xff]
  %v117 = vld [vmem:[%s2 + $0x260] sm:$0xff]
  %v118 = vld [vmem:[%s2 + $0x268] sm:$0xff]
  %v119 = vld [vmem:[%s2 + $0x270] sm:$0xff]
  %v120 = vld [vmem:[%s2 + $0x278] sm:$0xff]
  %v121 = vld [vmem:[%s2 + $0x280] sm:$0xff]
  %v122 = vld [vmem:[%s2 + $0x288] sm:$0xff]
  %v123 = vld [vmem:[%s2 + $0x290] sm:$0xff]
  %v124 = vld [vmem:[%s2 + $0x298] sm:$0xff]
  %v125 = vld [vmem:[%s2 + $0x2a0] sm:$0xff]
  %v126 = vld [vmem:[%s2 + $0x2a8] sm:$0xff]
  %v127 = vld [vmem:[%s2 + $0x2b0] sm:$0xff]
  %v128 = vld [vmem:[%s2 + $0x2b8] sm:$0xff]
  %v129 = vld [vmem:[%s2 + $0x2c0] sm:$0xff]
  %v130 = vld [vmem:[%s2 + $0x2c8] sm:$0xff]
  %v131 = vld [vmem:[%s2 + $0x2d0] sm:$0xff]
  %v132 = vld [vmem:[%s2 + $0x2d8] sm:$0xff]
  %v133 = vld [vmem:[%s2 + $0x2e0] sm:$0xff]
  %v134 = vld [vmem:[%s2 + $0x2e8] sm:$0xff]
  %v135 = vld [vmem:[%s2 + $0x2f0] sm:$0xff]
  %v136 = vld [vmem:[%s2 + $0x2f8] sm:$0xff]
  %v137 = vld [vmem:[%s2 + $0x300] sm:$0xff]
  %v138 = vld [vmem:[%s2 + $0x308] sm:$0xff]
  %v139 = vld [vmem:[%s2 + $0x310] sm:$0xff]
  %v140 = vld [vmem:[%s2 + $0x318] sm:$0xff]
  %v141 = vld [vmem:[%s2 + $0x320] sm:$0xff]
  %v142 = vld [vmem:[%s2 + $0x328] sm:$0xff]
  %v143 = vld [vmem:[%s2 + $0x330] sm:$0xff]
  %v144 = vld [vmem:[%s2 + $0x338] sm:$0xff]
  %v145 = vld [vmem:[%s2 + $0x340] sm:$0xff]
  %v146 = vld [vmem:[%s2 + $0x348] sm:$0xff]
  %v147 = vld [vmem:[%s2 + $0x350] sm:$0xff]
  %v148 = vld [vmem:[%s2 + $0x358] sm:$0xff]
  %v149 = vld [vmem:[%s2 + $0x360] sm:$0xff]
  %v150 = vld [vmem:[%s2 + $0x368] sm:$0xff]
  %v151 = vld [vmem:[%s2 + $0x370] sm:$0xff]
  %v152 = vld [vmem:[%s2 + $0x378] sm:$0xff]
  %v153 = vld [vmem:[%s2 + $0x380] sm:$0xff]
  %v154 = vld [vmem:[%s2 + $0x388] sm:$0xff]
  %v155 = vld [vmem:[%s2 + $0x390] sm:$0xff]
  %v156 = vld [vmem:[%s2 + $0x398] sm:$0xff]
  %v157 = vld [vmem:[%s2 + $0x3a0] sm:$0xff]
  %v158 = vld [vmem:[%s2 + $0x3a8] sm:$0xff]
  %v159 = vld [vmem:[%s2 + $0x3b0] sm:$0xff]
  %v160 = vld [vmem:[%s2 + $0x3b8] sm:$0xff]
  %v161 = vld [vmem:[%s2 + $0x3c0] sm:$0xff]
  %v162 = vld [vmem:[%s2 + $0x3c8] sm:$0xff]
  %v163 = vld [vmem:[%s2 + $0x3d0] sm:$0xff]
  %v164 = vld [vmem:[%s2 + $0x3d8] sm:$0xff]
  %v165 = vld [vmem:[%s2 + $0x3e0] sm:$0xff]
  %v166 = vld [vmem:[%s2 + $0x3e8] sm:$0xff]
  %v167 = vld [vmem:[%s2 + $0x3f0] sm:$0xff]
  %v168 = vld [vmem:[%s2 + $0x3f8] sm:$0xff]
  %v169 = vld [vmem:[%s2 + $0x400] sm:$0xff]
  %v170 = vld [vmem:[%s2 + $0x408] sm:$0xff]
  %v171 = vld [vmem:[%s2 + $0x410] sm:$0xff]
  %v172 = vld [vmem:[%s2 + $0x418] sm:$0xff]
  %v173 = vld [vmem:[%s2 + $0x420] sm:$0xff]
  %v174 = vld [vmem:[%s2 + $0x428] sm:$0xff]
  %v175 = vld [vmem:[%s2 + $0x430] sm:$0xff]
  %v176 = vld [vmem:[%s2 + $0x438] sm:$0xff]
  %v177 = vld [vmem:[%s2 + $0x440] sm:$0xff]
  %v178 = vld [vmem:[%s2 + $0x448] sm:$0xff]
  %v179 = vld [vmem:[%s2 + $0x450] sm:$0xff]
  %v180 = vld [vmem:[%s2 + $0x458] sm:$0xff]
  %v181 = vld [vmem:[%s2 + $0x460] sm:$0xff]
  %v182 = vld [vmem:[%s2 + $0x468] sm:$0xff]
  %v183 = vld [vmem:[%s2 + $0x470] sm:$0xff]
  %v184 = vld [vmem:[%s2 + $0x478] sm:$0xff]
  %v185 = vld [vmem:[%s2 + $0x480] sm:$0xff]
  %v186 = vld [vmem:[%s2 + $0x488] sm:$0xff]
  %v187 = vld [vmem:[%s2 + $0x490] sm:$0xff]
  %v188 = vld [vmem:[%s2 + $0x498] sm:$0xff]
  %v189 = vld [vmem:[%s2 + $0x4a0] sm:$0xff]
  %v190 = vld [vmem:[%s2 + $0x4a8] sm:$0xff]
  %v191 = vld [vmem:[%s2 + $0x4b0] sm:$0xff]
  %v192 = vld [vmem:[%s2 + $0x4b8] sm:$0xff]
  %v193 = vld [vmem:[%s2 + $0x4c0] sm:$0xff]
  %v194 = vld [vmem:[%s2 + $0x4c8] sm:$0xff]
  %v195 = vld [vmem:[%s2 + $0x4d0] sm:$0xff]
  %v196 = vld [vmem:[%s2 + $0x4d8] sm:$0xff]
  %v197 = vld [vmem:[%s2 + $0x4e0] sm:$0xff]
  %v198 = vld [vmem:[%s2 + $0x4e8] sm:$0xff]
  %v199 = vld [vmem:[%s2 + $0x4f0] sm:$0xff]
  %v200 = vld [vmem:[%s2 + $0x4f8] sm:$0xff]
  %v201 = vld [vmem:[%s2 + $0x500] sm:$0xff]
  %v202 = vld [vmem:[%s2 + $0x508] sm:$0xff]
  %v203 = vld [vmem:[%s2 + $0x510] sm:$0xff]
  %v204 = vld [vmem:[%s2 + $0x518] sm:$0xff]
  %v205 = vld [vmem:[%s2 + $0x520] sm:$0xff]
  %v206 = vld [vmem:[%s2 + $0x528] sm:$0xff]
  %v207 = vld [vmem:[%s2 + $0x530] sm:$0xff]
  %v208 = vld [vmem:[%s2 + $0x538] sm:$0xff]
  %v209 = vld [vmem:[%s2 + $0x540] sm:$0xff]
  %v210 = vld [vmem:[%s2 + $0x548] sm:$0xff]
  %v211 = vld [vmem:[%s2 + $0x550] sm:$0xff]
  %v212 = vld [vmem:[%s2 + $0x558] sm:$0xff]
  %v213 = vld [vmem:[%s2 + $0x560] sm:$0xff]
  %v214 = vld [vmem:[%s2 + $0x568] sm:$0xff]
  %v215 = vld [vmem:[%s2 + $0x570] sm:$0xff]
  %v216 = vld [vmem:[%s2 + $0x578] sm:$0xff]
  %v217 = vld [vmem:[%s2 + $0x580] sm:$0xff]
  %v218 = vld [vmem:[%s2 + $0x588] sm:$0xff]
  %v219 = vld [vmem:[%s2 + $0x590] sm:$0xff]
  %v220 = vld [vmem:[%s2 + $0x598] sm:$0xff]
  %v221 = vld [vmem:[%s2 + $0x5a0] sm:$0xff]
  %v222 = vld [vmem:[%s2 + $0x5a8] sm:$0xff]
  %v223 = vld [vmem:[%s2 + $0x5b0] sm:$0xff]
  %v224 = vld [vmem:[%s2 + $0x5b8] sm:$0xff]
  %v225 = vld [vmem:[%s2 + $0x5c0] sm:$0xff]
  %v226 = vld [vmem:[%s2 + $0x5c8] sm:$0xff]
  %v227 = vld [vmem:[%s2 + $0x5d0] sm:$0xff]
  %v228 = vld [vmem:[%s2 + $0x5d8] sm:$0xff]
  %v229 = vld [vmem:[%s2 + $0x5e0] sm:$0xff]
  %v230 = vld [vmem:[%s2 + $0x5e8] sm:$0xff]
  %v231 = vld [vmem:[%s2 + $0x5f0] sm:$0xff]
  %v232 = vld [vmem:[%s2 + $0x5f8] sm:$0xff]
  %v233 = vld [vmem:[%s2 + $0x600] sm:$0xff]
  %v234 = vld [vmem:[%s2 + $0x608] sm:$0xff]
  %v235 = vld [vmem:[%s2 + $0x610] sm:$0xff]
  %v236 = vld [vmem:[%s2 + $0x618] sm:$0xff]
  %v237 = vld [vmem:[%s2 + $0x620] sm:$0xff]
  %v238 = vld [vmem:[%s2 + $0x628] sm:$0xff]
  %v239 = vld [vmem:[%s2 + $0x630] sm:$0xff]
  %v240 = vld [vmem:[%s2 + $0x638] sm:$0xff]
  %v241 = vld [vmem:[%s2 + $0x640] sm:$0xff]
  %v242 = vld [vmem:[%s2 + $0x648] sm:$0xff]
  %v243 = vld [vmem:[%s2 + $0x650] sm:$0xff]
  %v244 = vld [vmem:[%s2 + $0x658] sm:$0xff]
  %v245 = vld [vmem:[%s2 + $0x660] sm:$0xff]
  %v246 = vld [vmem:[%s2 + $0x668] sm:$0xff]
  %v247 = vld [vmem:[%s2 + $0x670] sm:$0xff]
  %v248 = vld [vmem:[%s2 + $0x678] sm:$0xff]
  %v249 = vld [vmem:[%s2 + $0x680] sm:$0xff]
  %v250 = vld [vmem:[%s2 + $0x688] sm:$0xff]
  %v251 = vld [vmem:[%s2 + $0x690] sm:$0xff]
  %v252 = vld [vmem:[%s2 + $0x698] sm:$0xff]
  %v253 = vld [vmem:[%s2 + $0x6a0] sm:$0xff]
  %v254 = vld [vmem:[%s2 + $0x6a8] sm:$0xff]
  %v255 = vld [vmem:[%s2 + $0x6b0] sm:$0xff]
  %v256 = vld [vmem:[%s2 + $0x6b8] sm:$0xff]
  %v257 = vld [vmem:[%s2 + $0x6c0] sm:$0xff]
  %v258 = vld [vmem:[%s2 + $0x6c8] sm:$0xff]
  %v259 = vld [vmem:[%s2 + $0x6d0] sm:$0xff]
  %v260 = vld [vmem:[%s2 + $0x6d8] sm:$0xff]
  %v261 = vld [vmem:[%s2 + $0x6e0] sm:$0xff]
  %v262 = vld [vmem:[%s2 + $0x6e8] sm:$0xff]
  %v263 = vld [vmem:[%s2 + $0x6f0] sm:$0xff]
  %v264 = vld [vmem:[%s2 + $0x6f8] sm:$0xff]
  %v265 = vld [vmem:[%s2 + $0x700] sm:$0xff]
  %v266 = vld [vmem:[%s2 + $0x708] sm:$0xff]
  %v267 = vld [vmem:[%s2 + $0x710] sm:$0xff]
  %v268 = vld [vmem:[%s2 + $0x718] sm:$0xff]
  %v269 = vld [vmem:[%s2 + $0x720] sm:$0xff]
  %v270 = vld [vmem:[%s2 + $0x728] sm:$0xff]
  %v271 = vld [vmem:[%s2 + $0x730] sm:$0xff]
  %v272 = vld [vmem:[%s2 + $0x738] sm:$0xff]
  %v273 = vld [vmem:[%s2 + $0x740] sm:$0xff]
  %v274 = vld [vmem:[%s2 + $0x748] sm:$0xff]
  %v275 = vld [vmem:[%s2 + $0x750] sm:$0xff]
  %v276 = vld [vmem:[%s2 + $0x758] sm:$0xff]
  %v277 = vld [vmem:[%s2 + $0x760] sm:$0xff]
  %v278 = vld [vmem:[%s2 + $0x768] sm:$0xff]
  %v279 = vld [vmem:[%s2 + $0x770] sm:$0xff]
  %v280 = vld [vmem:[%s2 + $0x778] sm:$0xff]
  %v281 = vld [vmem:[%s2 + $0x780] sm:$0xff]
  %v282 = vld [vmem:[%s2 + $0x788] sm:$0xff]
  %v283 = vld [vmem:[%s2 + $0x790] sm:$0xff]
  %v284 = vld [vmem:[%s2 + $0x798] sm:$0xff]
  %v285 = vld [vmem:[%s2 + $0x7a0] sm:$0xff]
  %v286 = vld [vmem:[%s2 + $0x7a8] sm:$0xff]
  %v287 = vld [vmem:[%s2 + $0x7b0] sm:$0xff]
  %v288 = vld [vmem:[%s2 + $0x7b8] sm:$0xff]
  %v289 = vld [vmem:[%s2 + $0x7c0] sm:$0xff]
  %v290 = vld [vmem:[%s2 + $0x7c8] sm:$0xff]
  %v291 = vld [vmem:[%s2 + $0x7d0] sm:$0xff]
  %v292 = vld [vmem:[%s2 + $0x7d8] sm:$0xff]
  %v293 = vld [vmem:[%s2 + $0x7e0] sm:$0xff]
  %v294 = vld [vmem:[%s2 + $0x7e8] sm:$0xff]
  %v295 = vld [vmem:[%s2 + $0x7f0] sm:$0xff]
  %v296 = vld [vmem:[%s2 + $0x7f8] sm:$0xff]
  %v297 = vld [vmem:[%s2 + $0x800] sm:$0xff]
  %v298 = vld [vmem:[%s2 + $0x808] sm:$0xff]
  %v299 = vld [vmem:[%s2 + $0x810] sm:$0xff]
  %v300 = vld [vmem:[%s2 + $0x818] sm:$0xff]
  %v301 = vld [vmem:[%s2 + $0x820] sm:$0xff]
  %v302 = vld [vmem:[%s2 + $0x828] sm:$0xff]
  %v303 = vld [vmem:[%s2 + $0x830] sm:$0xff]
  %v304 = vld [vmem:[%s2 + $0x838] sm:$0xff]
  %v305 = vld [vmem:[%s2 + $0x840] sm:$0xff]
  %v306 = vld [vmem:[%s2 + $0x848] sm:$0xff]
  %v307 = vld [vmem:[%s2 + $0x850] sm:$0xff]
  %v308 = vld [vmem:[%s2 + $0x858] sm:$0xff]
  %v309 = vld [vmem:[%s2 + $0x860] sm:$0xff]
  %v310 = vld [vmem:[%s2 + $0x868] sm:$0xff]
  %v311 = vld [vmem:[%s2 + $0x870] sm:$0xff]
  %v312 = vld [vmem:[%s2 + $0x878] sm:$0xff]
  %v313 = vld [vmem:[%s2 + $0x880] sm:$0xff]
  %v314 = vld [vmem:[%s2 + $0x888] sm:$0xff]
  %v315 = vld [vmem:[%s2 + $0x890] sm:$0xff]
  %v316 = vld [vmem:[%s2 + $0x898] sm:$0xff]
  %v317 = vld [vmem:[%s2 + $0x8a0] sm:$0xff]
  %v318 = vld [vmem:[%s2 + $0x8a8] sm:$0xff]
  %v319 = vld [vmem:[%s2 + $0x8b0] sm:$0xff]
  %v320 = vld [vmem:[%s2 + $0x8b8] sm:$0xff]
  %v321 = vld [vmem:[%s2 + $0x8c0] sm:$0xff]
  %v322 = vld [vmem:[%s2 + $0x8c8] sm:$0xff]
  %v323 = vld [vmem:[%s2 + $0x8d0] sm:$0xff]
  %v324 = vld [vmem:[%s2 + $0x8d8] sm:$0xff]
  %v325 = vld [vmem:[%s2 + $0x8e0] sm:$0xff]
  %v326 = vld [vmem:[%s2 + $0x8e8] sm:$0xff]
  %v327 = vld [vmem:[%s2 + $0x8f0] sm:$0xff]
  %v328 = vld [vmem:[%s2 + $0x8f8] sm:$0xff]
  %v329 = vld [vmem:[%s1] sm:$0xff]
  %v330 = vld [vmem:[%s1 + $0x8] sm:$0xff]
  %v331 = vld [vmem:[%s1 + $0x10] sm:$0xff]
  %v332 = vld [vmem:[%s1 + $0x18] sm:$0xff]
  %v333 = vld [vmem:[%s1 + $0x20] sm:$0xff]
  %v334 = vld [vmem:[%s1 + $0x28] sm:$0xff]
  %v335 = vld [vmem:[%s3] sm:$0xff]
  %v336 = vld [vmem:[%s3 + $0x8] sm:$0xff]
  %v337 = vld [vmem:[%s3 + $0x10] sm:$0xff]
  %v338 = vld [vmem:[%s3 + $0x18] sm:$0xff]
  %v339 = vld [vmem:[%s3 + $0x20] sm:$0xff]
  %v340 = vld [vmem:[%s3 + $0x28] sm:$0xff]
  %v341 = vld [vmem:[%s3 + $0x30] sm:$0xff]
  %v342 = vld [vmem:[%s3 + $0x38] sm:$0xff]
  %v343 = vld [vmem:[%s3 + $0x40] sm:$0xff]
  %v344 = vld [vmem:[%s3 + $0x48] sm:$0xff]
  %v345 = vld [vmem:[%s3 + $0x50] sm:$0xff]
  %v346 = vld [vmem:[%s3 + $0x58] sm:$0xff]
  %v347 = vld [vmem:[%s3 + $0x60] sm:$0xff]
  %v348 = vld [vmem:[%s3 + $0x68] sm:$0xff]
  %v349 = vld [vmem:[%s3 + $0x70] sm:$0xff]
  %v350 = vld [vmem:[%s3 + $0x78] sm:$0xff]
  %v351 = vld [vmem:[%s3 + $0x80] sm:$0xff]
  %v352 = vld [vmem:[%s3 + $0x88] sm:$0xff]
  %v353 = vld [vmem:[%s3 + $0x90] sm:$0xff]
  %v354 = vld [vmem:[%s3 + $0x98] sm:$0xff]
  %v355 = vld [vmem:[%s3 + $0xa0] sm:$0xff]
  %v356 = vld [vmem:[%s3 + $0xa8] sm:$0xff]
  %v357 = vld [vmem:[%s3 + $0xb0] sm:$0xff]
  %v358 = vld [vmem:[%s3 + $0xb8] sm:$0xff]
  %v359 = vld [vmem:[%s3 + $0xc0] sm:$0xff]
  %v360 = vld [vmem:[%s3 + $0xc8] sm:$0xff]
  %v361 = vld [vmem:[%s3 + $0xd0] sm:$0xff]
  %v362 = vld [vmem:[%s3 + $0xd8] sm:$0xff]
  %v363 = vld [vmem:[%s3 + $0xe0] sm:$0xff]
  %v364 = vld [vmem:[%s3 + $0xe8] sm:$0xff]
  %v365 = vld [vmem:[%s3 + $0xf0] sm:$0xff]
  %v366 = vld [vmem:[%s3 + $0xf8] sm:$0xff]
  %v367 = vld [vmem:[%s3 + $0x100] sm:$0xff]
  %v368 = vld [vmem:[%s3 + $0x108] sm:$0xff]
  %v369 = vld [vmem:[%s3 + $0x110] sm:$0xff]
  %v370 = vld [vmem:[%s3 + $0x118] sm:$0xff]
  %v371 = vld [vmem:[%s3 + $0x120] sm:$0xff]
  %v372 = vld [vmem:[%s3 + $0x128] sm:$0xff]
  %v373 = vld [vmem:[%s3 + $0x130] sm:$0xff]
  %v374 = vld [vmem:[%s3 + $0x138] sm:$0xff]
  %v375 = vld [vmem:[%s3 + $0x140] sm:$0xff]
  %v376 = vld [vmem:[%s3 + $0x148] sm:$0xff]
  %v377 = vld [vmem:[%s3 + $0x150] sm:$0xff]
  %v378 = vld [vmem:[%s3 + $0x158] sm:$0xff]
  %v379 = vld [vmem:[%s3 + $0x160] sm:$0xff]
  %v380 = vld [vmem:[%s3 + $0x168] sm:$0xff]
  %v381 = vld [vmem:[%s3 + $0x170] sm:$0xff]
  %v382 = vld [vmem:[%s3 + $0x178] sm:$0xff]
  %v383 = vld [vmem:[%s3 + $0x180] sm:$0xff]
  %v384 = vld [vmem:[%s3 + $0x188] sm:$0xff]
  %v385 = vld [vmem:[%s3 + $0x190] sm:$0xff]
  %v386 = vld [vmem:[%s3 + $0x198] sm:$0xff]
  %v387 = vld [vmem:[%s3 + $0x1a0] sm:$0xff]
  %v388 = vld [vmem:[%s3 + $0x1a8] sm:$0xff]
  %v389 = vld [vmem:[%s3 + $0x1b0] sm:$0xff]
  %v390 = vld [vmem:[%s3 + $0x1b8] sm:$0xff]
  %v391 = vld [vmem:[%s3 + $0x1c0] sm:$0xff]
  %v392 = vld [vmem:[%s3 + $0x1c8] sm:$0xff]
  %v393 = vld [vmem:[%s3 + $0x1d0] sm:$0xff]
  %v394 = vld [vmem:[%s3 + $0x1d8] sm:$0xff]
  %v395 = vld [vmem:[%s3 + $0x1e0] sm:$0xff]
  %v396 = vld [vmem:[%s3 + $0x1e8] sm:$0xff]
  %v397 = vld [vmem:[%s3 + $0x1f0] sm:$0xff]
  %v398 = vld [vmem:[%s3 + $0x1f8] sm:$0xff]
  %v399 = vld [vmem:[%s3 + $0x200] sm:$0xff]
  %v400 = vld [vmem:[%s3 + $0x208] sm:$0xff]
  %v401 = vld [vmem:[%s3 + $0x210] sm:$0xff]
  %v402 = vld [vmem:[%s3 + $0x218] sm:$0xff]
  %v403 = vld [vmem:[%s3 + $0x220] sm:$0xff]
  %v404 = vld [vmem:[%s3 + $0x228] sm:$0xff]
  %v405 = vld [vmem:[%s3 + $0x230] sm:$0xff]
  %v406 = vld [vmem:[%s3 + $0x238] sm:$0xff]
  %v407 = vld [vmem:[%s3 + $0x240] sm:$0xff]
  %v408 = vld [vmem:[%s3 + $0x248] sm:$0xff]
  %v409 = vld [vmem:[%s3 + $0x250] sm:$0xff]
  %v410 = vld [vmem:[%s3 + $0x258] sm:$0xff]
  %v411 = vld [vmem:[%s3 + $0x260] sm:$0xff]
  %v412 = vld [vmem:[%s3 + $0x268] sm:$0xff]
  %v413 = vld [vmem:[%s3 + $0x270] sm:$0xff]
  %v414 = vld [vmem:[%s3 + $0x278] sm:$0xff]
  %v415 = vld [vmem:[%s3 + $0x280] sm:$0xff]
  %v416 = vld [vmem:[%s3 + $0x288] sm:$0xff]
  %v417 = vld [vmem:[%s3 + $0x290] sm:$0xff]
  %v418 = vld [vmem:[%s3 + $0x298] sm:$0xff]
  %v419 = vld [vmem:[%s3 + $0x2a0] sm:$0xff]
  %v420 = vld [vmem:[%s3 + $0x2a8] sm:$0xff]
  %v421 = vld [vmem:[%s3 + $0x2b0] sm:$0xff]
  %v422 = vld [vmem:[%s3 + $0x2b8] sm:$0xff]
  %v423 = vld [vmem:[%s3 + $0x2c0] sm:$0xff]
  %v424 = vld [vmem:[%s3 + $0x2c8] sm:$0xff]
  %v425 = vld [vmem:[%s3 + $0x2d0] sm:$0xff]
  %v426 = vld [vmem:[%s3 + $0x2d8] sm:$0xff]
  %v427 = vld [vmem:[%s3 + $0x2e0] sm:$0xff]
  %v428 = vld [vmem:[%s3 + $0x2e8] sm:$0xff]
  %v429 = vld [vmem:[%s3 + $0x2f0] sm:$0xff]
  %v430 = vld [vmem:[%s3 + $0x2f8] sm:$0xff]
  %v431 = vld [vmem:[%s3 + $0x300] sm:$0xff]
  %v432 = vld [vmem:[%s3 + $0x308] sm:$0xff]
  %v433 = vld [vmem:[%s3 + $0x310] sm:$0xff]
  %v434 = vld [vmem:[%s3 + $0x318] sm:$0xff]
  %v435 = vld [vmem:[%s3 + $0x320] sm:$0xff]
  %v436 = vld [vmem:[%s3 + $0x328] sm:$0xff]
  %v437 = vld [vmem:[%s3 + $0x330] sm:$0xff]
  %v438 = vld [vmem:[%s3 + $0x338] sm:$0xff]
  %v439 = vld [vmem:[%s3 + $0x340] sm:$0xff]
  %v440 = vld [vmem:[%s3 + $0x348] sm:$0xff]
  %v441 = vld [vmem:[%s3 + $0x350] sm:$0xff]
  %v442 = vld [vmem:[%s3 + $0x358] sm:$0xff]
  %v443 = vld [vmem:[%s3 + $0x360] sm:$0xff]
  %v444 = vld [vmem:[%s3 + $0x368] sm:$0xff]
  %v445 = vld [vmem:[%s3 + $0x370] sm:$0xff]
  %v446 = vld [vmem:[%s3 + $0x378] sm:$0xff]
  %v447 = vld [vmem:[%s3 + $0x380] sm:$0xff]
  %v448 = vld [vmem:[%s3 + $0x388] sm:$0xff]
  %v449 = vld [vmem:[%s3 + $0x390] sm:$0xff]
  %v450 = vld [vmem:[%s3 + $0x398] sm:$0xff]
  %v451 = vld [vmem:[%s3 + $0x3a0] sm:$0xff]
  %v452 = vld [vmem:[%s3 + $0x3a8] sm:$0xff]
  %v453 = vld [vmem:[%s3 + $0x3b0] sm:$0xff]
  %v454 = vld [vmem:[%s3 + $0x3b8] sm:$0xff]
  %v455 = vld [vmem:[%s3 + $0x3c0] sm:$0xff]
  %v456 = vld [vmem:[%s3 + $0x3c8] sm:$0xff]
  %v457 = vld [vmem:[%s3 + $0x3d0] sm:$0xff]
  %v458 = vld [vmem:[%s3 + $0x3d8] sm:$0xff]
  %v459 = vld [vmem:[%s3 + $0x3e0] sm:$0xff]
  %v460 = vld [vmem:[%s3 + $0x3e8] sm:$0xff]
  %v461 = vld [vmem:[%s3 + $0x3f0] sm:$0xff]
  %v462 = vld [vmem:[%s3 + $0x3f8] sm:$0xff]
  %v463 = vld [vmem:[%s3 + $0x400] sm:$0xff]
  %v464 = vld [vmem:[%s3 + $0x408] sm:$0xff]
  %v465 = vld [vmem:[%s3 + $0x410] sm:$0xff]
  %v466 = vld [vmem:[%s3 + $0x418] sm:$0xff]
  %v467 = vld [vmem:[%s3 + $0x420] sm:$0xff]
  %v468 = vld [vmem:[%s3 + $0x428] sm:$0xff]
  %v469 = vld [vmem:[%s3 + $0x430] sm:$0xff]
  %v470 = vld [vmem:[%s3 + $0x438] sm:$0xff]
  %v471 = vld [vmem:[%s3 + $0x440] sm:$0xff]
  %v472 = vld [vmem:[%s3 + $0x448] sm:$0xff]
  %v473 = vld [vmem:[%s3 + $0x450] sm:$0xff]
  %v474 = vld [vmem:[%s3 + $0x458] sm:$0xff]
  %v475 = vld [vmem:[%s3 + $0x460] sm:$0xff]
  %v476 = vld [vmem:[%s3 + $0x468] sm:$0xff]
  %v477 = vld [vmem:[%s3 + $0x470] sm:$0xff]
  %v478 = vld [vmem:[%s3 + $0x478] sm:$0xff]
  %v479 = vld [vmem:[%s3 + $0x480] sm:$0xff]
  %v480 = vld [vmem:[%s3 + $0x488] sm:$0xff]
  %v481 = vld [vmem:[%s3 + $0x490] sm:$0xff]
  %v482 = vld [vmem:[%s3 + $0x498] sm:$0xff]
  %v483 = vld [vmem:[%s3 + $0x4a0] sm:$0xff]
  %v484 = vld [vmem:[%s3 + $0x4a8] sm:$0xff]
  %v485 = vld [vmem:[%s3 + $0x4b0] sm:$0xff]
  %v486 = vld [vmem:[%s3 + $0x4b8] sm:$0xff]
  %v487 = vld [vmem:[%s3 + $0x4c0] sm:$0xff]
  %v488 = vld [vmem:[%s3 + $0x4c8] sm:$0xff]
  %v489 = vld [vmem:[%s3 + $0x4d0] sm:$0xff]
  %v490 = vld [vmem:[%s3 + $0x4d8] sm:$0xff]
  %v491 = vld [vmem:[%s3 + $0x4e0] sm:$0xff]
  %v492 = vld [vmem:[%s3 + $0x4e8] sm:$0xff]
  %v493 = vld [vmem:[%s3 + $0x4f0] sm:$0xff]
  %v494 = vld [vmem:[%s3 + $0x4f8] sm:$0xff]
  %v495 = vld [vmem:[%s3 + $0x500] sm:$0xff]
  %v496 = vld [vmem:[%s3 + $0x508] sm:$0xff]
  %v497 = vld [vmem:[%s3 + $0x510] sm:$0xff]
  %v498 = vld [vmem:[%s3 + $0x518] sm:$0xff]
  %v499 = vld [vmem:[%s3 + $0x520] sm:$0xff]
  %v500 = vld [vmem:[%s3 + $0x528] sm:$0xff]
  %v501 = vld [vmem:[%s3 + $0x530] sm:$0xff]
  %v502 = vld [vmem:[%s3 + $0x538] sm:$0xff]
  %v503 = vld [vmem:[%s3 + $0x540] sm:$0xff]
  %v504 = vld [vmem:[%s3 + $0x548] sm:$0xff]
  %v505 = vld [vmem:[%s3 + $0x550] sm:$0xff]
  %v506 = vld [vmem:[%s3 + $0x558] sm:$0xff]
  %v507 = vld [vmem:[%s3 + $0x560] sm:$0xff]
  %v508 = vld [vmem:[%s3 + $0x568] sm:$0xff]
  %v509 = vld [vmem:[%s3 + $0x570] sm:$0xff]
  %v510 = vld [vmem:[%s3 + $0x578] sm:$0xff]
  %v511 = vld [vmem:[%s3 + $0x580] sm:$0xff]
  %v512 = vld [vmem:[%s3 + $0x588] sm:$0xff]
  %v513 = vld [vmem:[%s3 + $0x590] sm:$0xff]
  %v514 = vld [vmem:[%s3 + $0x598] sm:$0xff]
  %v515 = vld [vmem:[%s3 + $0x5a0] sm:$0xff]
  %v516 = vld [vmem:[%s3 + $0x5a8] sm:$0xff]
  %v517 = vld [vmem:[%s3 + $0x5b0] sm:$0xff]
  %v518 = vld [vmem:[%s3 + $0x5b8] sm:$0xff]
  %v519 = vld [vmem:[%s3 + $0x5c0] sm:$0xff]
  %v520 = vld [vmem:[%s3 + $0x5c8] sm:$0xff]
  %v521 = vld [vmem:[%s3 + $0x5d0] sm:$0xff]
  %v522 = vld [vmem:[%s3 + $0x5d8] sm:$0xff]
  %v523 = vld [vmem:[%s3 + $0x5e0] sm:$0xff]
  %v524 = vld [vmem:[%s3 + $0x5e8] sm:$0xff]
  %v525 = vld [vmem:[%s3 + $0x5f0] sm:$0xff]
  %v526 = vld [vmem:[%s3 + $0x5f8] sm:$0xff]
  %v527 = vld [vmem:[%s3 + $0x600] sm:$0xff]
  %v528 = vld [vmem:[%s3 + $0x608] sm:$0xff]
  %v529 = vld [vmem:[%s3 + $0x610] sm:$0xff]
  %v530 = vld [vmem:[%s3 + $0x618] sm:$0xff]
  %v531 = vld [vmem:[%s3 + $0x620] sm:$0xff]
  %v532 = vld [vmem:[%s3 + $0x628] sm:$0xff]
  %v533 = vld [vmem:[%s3 + $0x630] sm:$0xff]
  %v534 = vld [vmem:[%s3 + $0x638] sm:$0xff]
  %v535 = vld [vmem:[%s3 + $0x640] sm:$0xff]
  %v536 = vld [vmem:[%s3 + $0x648] sm:$0xff]
  %v537 = vld [vmem:[%s3 + $0x650] sm:$0xff]
  %v538 = vld [vmem:[%s3 + $0x658] sm:$0xff]
  %v539 = vld [vmem:[%s3 + $0x660] sm:$0xff]
  %v540 = vld [vmem:[%s3 + $0x668] sm:$0xff]
  %v541 = vld [vmem:[%s3 + $0x670] sm:$0xff]
  %v542 = vld [vmem:[%s3 + $0x678] sm:$0xff]
  %v543 = vld [vmem:[%s3 + $0x680] sm:$0xff]
  %v544 = vld [vmem:[%s3 + $0x688] sm:$0xff]
  %v545 = vld [vmem:[%s3 + $0x690] sm:$0xff]
  %v546 = vld [vmem:[%s3 + $0x698] sm:$0xff]
  %v547 = vld [vmem:[%s3 + $0x6a0] sm:$0xff]
  %v548 = vld [vmem:[%s3 + $0x6a8] sm:$0xff]
  %v549 = vld [vmem:[%s3 + $0x6b0] sm:$0xff]
  %v550 = vld [vmem:[%s3 + $0x6b8] sm:$0xff]
  %v551 = vld [vmem:[%s3 + $0x6c0] sm:$0xff]
  %v552 = vld [vmem:[%s3 + $0x6c8] sm:$0xff]
  %v553 = vld [vmem:[%s3 + $0x6d0] sm:$0xff]
  %v554 = vld [vmem:[%s3 + $0x6d8] sm:$0xff]
  %v555 = vld [vmem:[%s3 + $0x6e0] sm:$0xff]
  %v556 = vld [vmem:[%s3 + $0x6e8] sm:$0xff]
  %v557 = vld [vmem:[%s3 + $0x6f0] sm:$0xff]
  %v558 = vld [vmem:[%s3 + $0x6f8] sm:$0xff]
  %v559 = vld [vmem:[%s3 + $0x700] sm:$0xff]
  %v560 = vld [vmem:[%s3 + $0x708] sm:$0xff]
  %v561 = vld [vmem:[%s3 + $0x710] sm:$0xff]
  %v562 = vld [vmem:[%s3 + $0x718] sm:$0xff]
  %v563 = vld [vmem:[%s3 + $0x720] sm:$0xff]
  %v564 = vld [vmem:[%s3 + $0x728] sm:$0xff]
  %v565 = vld [vmem:[%s3 + $0x730] sm:$0xff]
  %v566 = vld [vmem:[%s3 + $0x738] sm:$0xff]
  %v567 = vld [vmem:[%s3 + $0x740] sm:$0xff]
  %v568 = vld [vmem:[%s3 + $0x748] sm:$0xff]
  %v569 = vld [vmem:[%s3 + $0x750] sm:$0xff]
  %v570 = vld [vmem:[%s3 + $0x758] sm:$0xff]
  %v571 = vld [vmem:[%s3 + $0x760] sm:$0xff]
  %v572 = vld [vmem:[%s3 + $0x768] sm:$0xff]
  %v573 = vld [vmem:[%s3 + $0x770] sm:$0xff]
  %v574 = vld [vmem:[%s3 + $0x778] sm:$0xff]
  %v575 = vld [vmem:[%s3 + $0x780] sm:$0xff]
  %v576 = vld [vmem:[%s3 + $0x788] sm:$0xff]
  %v577 = vld [vmem:[%s3 + $0x790] sm:$0xff]
  %v578 = vld [vmem:[%s3 + $0x798] sm:$0xff]
  %v579 = vld [vmem:[%s3 + $0x7a0] sm:$0xff]
  %v580 = vld [vmem:[%s3 + $0x7a8] sm:$0xff]
  %v581 = vld [vmem:[%s3 + $0x7b0] sm:$0xff]
  %v582 = vld [vmem:[%s3 + $0x7b8] sm:$0xff]
  %v583 = vld [vmem:[%s3 + $0x7c0] sm:$0xff]
  %v584 = vld [vmem:[%s3 + $0x7c8] sm:$0xff]
  %v585 = vld [vmem:[%s3 + $0x7d0] sm:$0xff]
  %v586 = vld [vmem:[%s3 + $0x7d8] sm:$0xff]
  %v587 = vld [vmem:[%s3 + $0x7e0] sm:$0xff]
  %v588 = vld [vmem:[%s3 + $0x7e8] sm:$0xff]
  %v589 = vld [vmem:[%s3 + $0x7f0] sm:$0xff]
  %v590 = vld [vmem:[%s3 + $0x7f8] sm:$0xff]
  %v591 = vld [vmem:[%s3 + $0x800] sm:$0xff]
  %v592 = vld [vmem:[%s3 + $0x808] sm:$0xff]
  %v593 = vld [vmem:[%s3 + $0x810] sm:$0xff]
  %v594 = vld [vmem:[%s3 + $0x818] sm:$0xff]
  %v595 = vld [vmem:[%s3 + $0x820] sm:$0xff]
  %v596 = vld [vmem:[%s3 + $0x828] sm:$0xff]
  %v597 = vld [vmem:[%s3 + $0x830] sm:$0xff]
  %v598 = vld [vmem:[%s3 + $0x838] sm:$0xff]
  %v599 = vld [vmem:[%s3 + $0x840] sm:$0xff]
  %v600 = vld [vmem:[%s3 + $0x848] sm:$0xff]
  %v601 = vld [vmem:[%s3 + $0x850] sm:$0xff]
  %v602 = vld [vmem:[%s3 + $0x858] sm:$0xff]
  %v603 = vld [vmem:[%s3 + $0x860] sm:$0xff]
  %v604 = vld [vmem:[%s3 + $0x868] sm:$0xff]
  %v605 = vld [vmem:[%s3 + $0x870] sm:$0xff]
  %v606 = vld [vmem:[%s3 + $0x878] sm:$0xff]
  %v607 = vld [vmem:[%s3 + $0x880] sm:$0xff]
  %v608 = vld [vmem:[%s3 + $0x888] sm:$0xff]
  %v609 = vld [vmem:[%s3 + $0x890] sm:$0xff]
  %v610 = vld [vmem:[%s3 + $0x898] sm:$0xff]
  %v611 = vld [vmem:[%s3 + $0x8a0] sm:$0xff]
  %v612 = vld [vmem:[%s3 + $0x8a8] sm:$0xff]
  %v613 = vld [vmem:[%s3 + $0x8b0] sm:$0xff]
  %v614 = vld [vmem:[%s3 + $0x8b8] sm:$0xff]
  %v615 = vld [vmem:[%s3 + $0x8c0] sm:$0xff]
  %v616 = vld [vmem:[%s3 + $0x8c8] sm:$0xff]
  %v617 = vld [vmem:[%s3 + $0x8d0] sm:$0xff]
  %v618 = vld [vmem:[%s3 + $0x8d8] sm:$0xff]
  %v619 = vld [vmem:[%s3 + $0x8e0] sm:$0xff]
  %v620 = vld [vmem:[%s3 + $0x8e8] sm:$0xff]
  %v621 = vld [vmem:[%s3 + $0x8f0] sm:$0xff]
  %v622 = vld [vmem:[%s3 + $0x8f8] sm:$0xff]
  %v629 = vunpack.c.l.b16 %v329
  %v630 = vunpack.c.h.b16 %v329
  %v631 = vunpack.c.l.b16 %v330
  %v632 = vunpack.c.h.b16 %v330
  %v633 = vunpack.c.l.b16 %v331
  %v634 = vunpack.c.h.b16 %v331
  %v635 = vunpack.c.l.b16 %v332
  %v636 = vunpack.c.h.b16 %v332
  %v637 = vunpack.c.l.b16 %v333
  %v638 = vunpack.c.h.b16 %v333
  %v639 = vunpack.c.l.b16 %v334
  %v640 = vunpack.c.h.b16 %v334
  %v641 = vpack.c.b16 %v635, %v629
  %v642 = vpack.c.b16 %v636, %v630
  %v643 = vpack.c.b16 %v637, %v631
  %v644 = vpack.c.b16 %v638, %v632
  %v645 = vpack.c.b16 %v639, %v633
  %v646 = vpack.c.b16 %v640, %v634
  %v941 = vunpack.c.l.b16 %v335
  %v942 = vunpack.c.h.b16 %v335
  %v943 = vunpack.c.l.b16 %v336
  %v944 = vunpack.c.h.b16 %v336
  %v945 = vunpack.c.l.b16 %v337
  %v946 = vunpack.c.h.b16 %v337
  %v947 = vunpack.c.l.b16 %v338
  %v948 = vunpack.c.h.b16 %v338
  %v949 = vunpack.c.l.b16 %v339
  %v950 = vunpack.c.h.b16 %v339
  %v951 = vunpack.c.l.b16 %v340
  %v952 = vunpack.c.h.b16 %v340
  %v953 = vunpack.c.l.b16 %v341
  %v954 = vunpack.c.h.b16 %v341
  %v955 = vunpack.c.l.b16 %v342
  %v956 = vunpack.c.h.b16 %v342
  %v957 = vunpack.c.l.b16 %v343
  %v958 = vunpack.c.h.b16 %v343
  %v959 = vunpack.c.l.b16 %v344
  %v960 = vunpack.c.h.b16 %v344
  %v961 = vunpack.c.l.b16 %v345
  %v962 = vunpack.c.h.b16 %v345
  %v963 = vunpack.c.l.b16 %v346
  %v964 = vunpack.c.h.b16 %v346
  %v965 = vunpack.c.l.b16 %v347
  %v966 = vunpack.c.h.b16 %v347
  %v967 = vunpack.c.l.b16 %v348
  %v968 = vunpack.c.h.b16 %v348
  %v969 = vunpack.c.l.b16 %v349
  %v970 = vunpack.c.h.b16 %v349
  %v971 = vunpack.c.l.b16 %v350
  %v972 = vunpack.c.h.b16 %v350
  %v973 = vunpack.c.l.b16 %v351
  %v974 = vunpack.c.h.b16 %v351
  %v975 = vunpack.c.l.b16 %v352
  %v976 = vunpack.c.h.b16 %v352
  %v977 = vunpack.c.l.b16 %v353
  %v978 = vunpack.c.h.b16 %v353
  %v979 = vunpack.c.l.b16 %v354
  %v980 = vunpack.c.h.b16 %v354
  %v981 = vunpack.c.l.b16 %v355
  %v982 = vunpack.c.h.b16 %v355
  %v983 = vunpack.c.l.b16 %v356
  %v984 = vunpack.c.h.b16 %v356
  %v985 = vunpack.c.l.b16 %v357
  %v986 = vunpack.c.h.b16 %v357
  %v987 = vunpack.c.l.b16 %v358
  %v988 = vunpack.c.h.b16 %v358
  %v989 = vunpack.c.l.b16 %v359
  %v990 = vunpack.c.h.b16 %v359
  %v991 = vunpack.c.l.b16 %v360
  %v992 = vunpack.c.h.b16 %v360
  %v993 = vunpack.c.l.b16 %v361
  %v994 = vunpack.c.h.b16 %v361
  %v995 = vunpack.c.l.b16 %v362
  %v996 = vunpack.c.h.b16 %v362
  %v997 = vunpack.c.l.b16 %v363
  %v998 = vunpack.c.h.b16 %v363
  %v999 = vunpack.c.l.b16 %v364
  %v1000 = vunpack.c.h.b16 %v364
  %v1001 = vunpack.c.l.b16 %v365
  %v1002 = vunpack.c.h.b16 %v365
  %v1003 = vunpack.c.l.b16 %v366
  %v1004 = vunpack.c.h.b16 %v366
  %v1005 = vunpack.c.l.b16 %v367
  %v1006 = vunpack.c.h.b16 %v367
  %v1007 = vunpack.c.l.b16 %v368
  %v1008 = vunpack.c.h.b16 %v368
  %v1009 = vunpack.c.l.b16 %v369
  %v1010 = vunpack.c.h.b16 %v369
  %v1011 = vunpack.c.l.b16 %v370
  %v1012 = vunpack.c.h.b16 %v370
  %v1013 = vunpack.c.l.b16 %v371
  %v1014 = vunpack.c.h.b16 %v371
  %v1015 = vunpack.c.l.b16 %v372
  %v1016 = vunpack.c.h.b16 %v372
  %v1017 = vunpack.c.l.b16 %v373
  %v1018 = vunpack.c.h.b16 %v373
  %v1019 = vunpack.c.l.b16 %v374
  %v1020 = vunpack.c.h.b16 %v374
  %v1021 = vunpack.c.l.b16 %v375
  %v1022 = vunpack.c.h.b16 %v375
  %v1023 = vunpack.c.l.b16 %v376
  %v1024 = vunpack.c.h.b16 %v376
  %v1025 = vunpack.c.l.b16 %v377
  %v1026 = vunpack.c.h.b16 %v377
  %v1027 = vunpack.c.l.b16 %v378
  %v1028 = vunpack.c.h.b16 %v378
  %v1029 = vunpack.c.l.b16 %v379
  %v1030 = vunpack.c.h.b16 %v379
  %v1031 = vunpack.c.l.b16 %v380
  %v1032 = vunpack.c.h.b16 %v380
  %v1033 = vunpack.c.l.b16 %v381
  %v1034 = vunpack.c.h.b16 %v381
  %v1035 = vunpack.c.l.b16 %v382
  %v1036 = vunpack.c.h.b16 %v382
  %v1037 = vunpack.c.l.b16 %v383
  %v1038 = vunpack.c.h.b16 %v383
  %v1039 = vunpack.c.l.b16 %v384
  %v1040 = vunpack.c.h.b16 %v384
  %v1041 = vunpack.c.l.b16 %v385
  %v1042 = vunpack.c.h.b16 %v385
  %v1043 = vunpack.c.l.b16 %v386
  %v1044 = vunpack.c.h.b16 %v386
  %v1045 = vunpack.c.l.b16 %v387
  %v1046 = vunpack.c.h.b16 %v387
  %v1047 = vunpack.c.l.b16 %v388
  %v1048 = vunpack.c.h.b16 %v388
  %v1049 = vunpack.c.l.b16 %v389
  %v1050 = vunpack.c.h.b16 %v389
  %v1051 = vunpack.c.l.b16 %v390
  %v1052 = vunpack.c.h.b16 %v390
  %v1053 = vunpack.c.l.b16 %v391
  %v1054 = vunpack.c.h.b16 %v391
  %v1055 = vunpack.c.l.b16 %v392
  %v1056 = vunpack.c.h.b16 %v392
  %v1057 = vunpack.c.l.b16 %v393
  %v1058 = vunpack.c.h.b16 %v393
  %v1059 = vunpack.c.l.b16 %v394
  %v1060 = vunpack.c.h.b16 %v394
  %v1061 = vunpack.c.l.b16 %v395
  %v1062 = vunpack.c.h.b16 %v395
  %v1063 = vunpack.c.l.b16 %v396
  %v1064 = vunpack.c.h.b16 %v396
  %v1065 = vunpack.c.l.b16 %v397
  %v1066 = vunpack.c.h.b16 %v397
  %v1067 = vunpack.c.l.b16 %v398
  %v1068 = vunpack.c.h.b16 %v398
  %v1069 = vunpack.c.l.b16 %v399
  %v1070 = vunpack.c.h.b16 %v399
  %v1071 = vunpack.c.l.b16 %v400
  %v1072 = vunpack.c.h.b16 %v400
  %v1073 = vunpack.c.l.b16 %v401
  %v1074 = vunpack.c.h.b16 %v401
  %v1075 = vunpack.c.l.b16 %v402
  %v1076 = vunpack.c.h.b16 %v402
  %v1077 = vunpack.c.l.b16 %v403
  %v1078 = vunpack.c.h.b16 %v403
  %v1079 = vunpack.c.l.b16 %v404
  %v1080 = vunpack.c.h.b16 %v404
  %v1081 = vunpack.c.l.b16 %v405
  %v1082 = vunpack.c.h.b16 %v405
  %v1083 = vunpack.c.l.b16 %v406
  %v1084 = vunpack.c.h.b16 %v406
  %v1085 = vunpack.c.l.b16 %v407
  %v1086 = vunpack.c.h.b16 %v407
  %v1087 = vunpack.c.l.b16 %v408
  %v1088 = vunpack.c.h.b16 %v408
  %v1089 = vunpack.c.l.b16 %v409
  %v1090 = vunpack.c.h.b16 %v409
  %v1091 = vunpack.c.l.b16 %v410
  %v1092 = vunpack.c.h.b16 %v410
  %v1093 = vunpack.c.l.b16 %v411
  %v1094 = vunpack.c.h.b16 %v411
  %v1095 = vunpack.c.l.b16 %v412
  %v1096 = vunpack.c.h.b16 %v412
  %v1097 = vunpack.c.l.b16 %v413
  %v1098 = vunpack.c.h.b16 %v413
  %v1099 = vunpack.c.l.b16 %v414
  %v1100 = vunpack.c.h.b16 %v414
  %v1101 = vunpack.c.l.b16 %v415
  %v1102 = vunpack.c.h.b16 %v415
  %v1103 = vunpack.c.l.b16 %v416
  %v1104 = vunpack.c.h.b16 %v416
  %v1105 = vunpack.c.l.b16 %v417
  %v1106 = vunpack.c.h.b16 %v417
  %v1107 = vunpack.c.l.b16 %v418
  %v1108 = vunpack.c.h.b16 %v418
  %v1109 = vunpack.c.l.b16 %v419
  %v1110 = vunpack.c.h.b16 %v419
  %v1111 = vunpack.c.l.b16 %v420
  %v1112 = vunpack.c.h.b16 %v420
  %v1113 = vunpack.c.l.b16 %v421
  %v1114 = vunpack.c.h.b16 %v421
  %v1115 = vunpack.c.l.b16 %v422
  %v1116 = vunpack.c.h.b16 %v422
  %v1117 = vunpack.c.l.b16 %v423
  %v1118 = vunpack.c.h.b16 %v423
  %v1119 = vunpack.c.l.b16 %v424
  %v1120 = vunpack.c.h.b16 %v424
  %v1121 = vunpack.c.l.b16 %v425
  %v1122 = vunpack.c.h.b16 %v425
  %v1123 = vunpack.c.l.b16 %v426
  %v1124 = vunpack.c.h.b16 %v426
  %v1125 = vunpack.c.l.b16 %v427
  %v1126 = vunpack.c.h.b16 %v427
  %v1127 = vunpack.c.l.b16 %v428
  %v1128 = vunpack.c.h.b16 %v428
  %v1129 = vunpack.c.l.b16 %v429
  %v1130 = vunpack.c.h.b16 %v429
  %v1131 = vunpack.c.l.b16 %v430
  %v1132 = vunpack.c.h.b16 %v430
  %v1133 = vunpack.c.l.b16 %v431
  %v1134 = vunpack.c.h.b16 %v431
  %v1135 = vunpack.c.l.b16 %v432
  %v1136 = vunpack.c.h.b16 %v432
  %v1137 = vunpack.c.l.b16 %v433
  %v1138 = vunpack.c.h.b16 %v433
  %v1139 = vunpack.c.l.b16 %v434
  %v1140 = vunpack.c.h.b16 %v434
  %v1141 = vunpack.c.l.b16 %v435
  %v1142 = vunpack.c.h.b16 %v435
  %v1143 = vunpack.c.l.b16 %v436
  %v1144 = vunpack.c.h.b16 %v436
  %v1145 = vunpack.c.l.b16 %v437
  %v1146 = vunpack.c.h.b16 %v437
  %v1147 = vunpack.c.l.b16 %v438
  %v1148 = vunpack.c.h.b16 %v438
  %v1149 = vunpack.c.l.b16 %v439
  %v1150 = vunpack.c.h.b16 %v439
  %v1151 = vunpack.c.l.b16 %v440
  %v1152 = vunpack.c.h.b16 %v440
  %v1153 = vunpack.c.l.b16 %v441
  %v1154 = vunpack.c.h.b16 %v441
  %v1155 = vunpack.c.l.b16 %v442
  %v1156 = vunpack.c.h.b16 %v442
  %v1157 = vunpack.c.l.b16 %v443
  %v1158 = vunpack.c.h.b16 %v443
  %v1159 = vunpack.c.l.b16 %v444
  %v1160 = vunpack.c.h.b16 %v444
  %v1161 = vunpack.c.l.b16 %v445
  %v1162 = vunpack.c.h.b16 %v445
  %v1163 = vunpack.c.l.b16 %v446
  %v1164 = vunpack.c.h.b16 %v446
  %v1165 = vunpack.c.l.b16 %v447
  %v1166 = vunpack.c.h.b16 %v447
  %v1167 = vunpack.c.l.b16 %v448
  %v1168 = vunpack.c.h.b16 %v448
  %v1169 = vunpack.c.l.b16 %v449
  %v1170 = vunpack.c.h.b16 %v449
  %v1171 = vunpack.c.l.b16 %v450
  %v1172 = vunpack.c.h.b16 %v450
  %v1173 = vunpack.c.l.b16 %v451
  %v1174 = vunpack.c.h.b16 %v451
  %v1175 = vunpack.c.l.b16 %v452
  %v1176 = vunpack.c.h.b16 %v452
  %v1177 = vunpack.c.l.b16 %v453
  %v1178 = vunpack.c.h.b16 %v453
  %v1179 = vunpack.c.l.b16 %v454
  %v1180 = vunpack.c.h.b16 %v454
  %v1181 = vunpack.c.l.b16 %v455
  %v1182 = vunpack.c.h.b16 %v455
  %v1183 = vunpack.c.l.b16 %v456
  %v1184 = vunpack.c.h.b16 %v456
  %v1185 = vunpack.c.l.b16 %v457
  %v1186 = vunpack.c.h.b16 %v457
  %v1187 = vunpack.c.l.b16 %v458
  %v1188 = vunpack.c.h.b16 %v458
  %v1189 = vunpack.c.l.b16 %v459
  %v1190 = vunpack.c.h.b16 %v459
  %v1191 = vunpack.c.l.b16 %v460
  %v1192 = vunpack.c.h.b16 %v460
  %v1193 = vunpack.c.l.b16 %v461
  %v1194 = vunpack.c.h.b16 %v461
  %v1195 = vunpack.c.l.b16 %v462
  %v1196 = vunpack.c.h.b16 %v462
  %v1197 = vunpack.c.l.b16 %v463
  %v1198 = vunpack.c.h.b16 %v463
  %v1199 = vunpack.c.l.b16 %v464
  %v1200 = vunpack.c.h.b16 %v464
  %v1201 = vunpack.c.l.b16 %v465
  %v1202 = vunpack.c.h.b16 %v465
  %v1203 = vunpack.c.l.b16 %v466
  %v1204 = vunpack.c.h.b16 %v466
  %v1205 = vunpack.c.l.b16 %v467
  %v1206 = vunpack.c.h.b16 %v467
  %v1207 = vunpack.c.l.b16 %v468
  %v1208 = vunpack.c.h.b16 %v468
  %v1209 = vunpack.c.l.b16 %v469
  %v1210 = vunpack.c.h.b16 %v469
  %v1211 = vunpack.c.l.b16 %v470
  %v1212 = vunpack.c.h.b16 %v470
  %v1213 = vunpack.c.l.b16 %v471
  %v1214 = vunpack.c.h.b16 %v471
  %v1215 = vunpack.c.l.b16 %v472
  %v1216 = vunpack.c.h.b16 %v472
  %v1217 = vunpack.c.l.b16 %v473
  %v1218 = vunpack.c.h.b16 %v473
  %v1219 = vunpack.c.l.b16 %v474
  %v1220 = vunpack.c.h.b16 %v474
  %v1221 = vunpack.c.l.b16 %v475
  %v1222 = vunpack.c.h.b16 %v475
  %v1223 = vunpack.c.l.b16 %v476
  %v1224 = vunpack.c.h.b16 %v476
  %v1225 = vunpack.c.l.b16 %v477
  %v1226 = vunpack.c.h.b16 %v477
  %v1227 = vunpack.c.l.b16 %v478
  %v1228 = vunpack.c.h.b16 %v478
  %v1229 = vunpack.c.l.b16 %v479
  %v1230 = vunpack.c.h.b16 %v479
  %v1231 = vunpack.c.l.b16 %v480
  %v1232 = vunpack.c.h.b16 %v480
  %v1233 = vunpack.c.l.b16 %v481
  %v1234 = vunpack.c.h.b16 %v481
  %v1235 = vunpack.c.l.b16 %v482
  %v1236 = vunpack.c.h.b16 %v482
  %v1237 = vunpack.c.l.b16 %v483
  %v1238 = vunpack.c.h.b16 %v483
  %v1239 = vunpack.c.l.b16 %v484
  %v1240 = vunpack.c.h.b16 %v484
  %v1241 = vunpack.c.l.b16 %v485
  %v1242 = vunpack.c.h.b16 %v485
  %v1243 = vunpack.c.l.b16 %v486
  %v1244 = vunpack.c.h.b16 %v486
  %v1245 = vunpack.c.l.b16 %v487
  %v1246 = vunpack.c.h.b16 %v487
  %v1247 = vunpack.c.l.b16 %v488
  %v1248 = vunpack.c.h.b16 %v488
  %v1249 = vunpack.c.l.b16 %v489
  %v1250 = vunpack.c.h.b16 %v489
  %v1251 = vunpack.c.l.b16 %v490
  %v1252 = vunpack.c.h.b16 %v490
  %v1253 = vunpack.c.l.b16 %v491
  %v1254 = vunpack.c.h.b16 %v491
  %v1255 = vunpack.c.l.b16 %v492
  %v1256 = vunpack.c.h.b16 %v492
  %v1257 = vunpack.c.l.b16 %v493
  %v1258 = vunpack.c.h.b16 %v493
  %v1259 = vunpack.c.l.b16 %v494
  %v1260 = vunpack.c.h.b16 %v494
  %v1261 = vunpack.c.l.b16 %v495
  %v1262 = vunpack.c.h.b16 %v495
  %v1263 = vunpack.c.l.b16 %v496
  %v1264 = vunpack.c.h.b16 %v496
  %v1265 = vunpack.c.l.b16 %v497
  %v1266 = vunpack.c.h.b16 %v497
  %v1267 = vunpack.c.l.b16 %v498
  %v1268 = vunpack.c.h.b16 %v498
  %v1269 = vunpack.c.l.b16 %v499
  %v1270 = vunpack.c.h.b16 %v499
  %v1271 = vunpack.c.l.b16 %v500
  %v1272 = vunpack.c.h.b16 %v500
  %v1273 = vunpack.c.l.b16 %v501
  %v1274 = vunpack.c.h.b16 %v501
  %v1275 = vunpack.c.l.b16 %v502
  %v1276 = vunpack.c.h.b16 %v502
  %v1277 = vunpack.c.l.b16 %v503
  %v1278 = vunpack.c.h.b16 %v503
  %v1279 = vunpack.c.l.b16 %v504
  %v1280 = vunpack.c.h.b16 %v504
  %v1281 = vunpack.c.l.b16 %v505
  %v1282 = vunpack.c.h.b16 %v505
  %v1283 = vunpack.c.l.b16 %v506
  %v1284 = vunpack.c.h.b16 %v506
  %v1285 = vunpack.c.l.b16 %v507
  %v1286 = vunpack.c.h.b16 %v507
  %v1287 = vunpack.c.l.b16 %v508
  %v1288 = vunpack.c.h.b16 %v508
  %v1289 = vunpack.c.l.b16 %v509
  %v1290 = vunpack.c.h.b16 %v509
  %v1291 = vunpack.c.l.b16 %v510
  %v1292 = vunpack.c.h.b16 %v510
  %v1293 = vunpack.c.l.b16 %v511
  %v1294 = vunpack.c.h.b16 %v511
  %v1295 = vunpack.c.l.b16 %v512
  %v1296 = vunpack.c.h.b16 %v512
  %v1297 = vunpack.c.l.b16 %v513
  %v1298 = vunpack.c.h.b16 %v513
  %v1299 = vunpack.c.l.b16 %v514
  %v1300 = vunpack.c.h.b16 %v514
  %v1301 = vunpack.c.l.b16 %v515
  %v1302 = vunpack.c.h.b16 %v515
  %v1303 = vunpack.c.l.b16 %v516
  %v1304 = vunpack.c.h.b16 %v516
  %v1305 = vunpack.c.l.b16 %v517
  %v1306 = vunpack.c.h.b16 %v517
  %v1307 = vunpack.c.l.b16 %v518
  %v1308 = vunpack.c.h.b16 %v518
  %v1309 = vunpack.c.l.b16 %v519
  %v1310 = vunpack.c.h.b16 %v519
  %v1311 = vunpack.c.l.b16 %v520
  %v1312 = vunpack.c.h.b16 %v520
  %v1313 = vunpack.c.l.b16 %v521
  %v1314 = vunpack.c.h.b16 %v521
  %v1315 = vunpack.c.l.b16 %v522
  %v1316 = vunpack.c.h.b16 %v522
  %v1317 = vunpack.c.l.b16 %v523
  %v1318 = vunpack.c.h.b16 %v523
  %v1319 = vunpack.c.l.b16 %v524
  %v1320 = vunpack.c.h.b16 %v524
  %v1321 = vunpack.c.l.b16 %v525
  %v1322 = vunpack.c.h.b16 %v525
  %v1323 = vunpack.c.l.b16 %v526
  %v1324 = vunpack.c.h.b16 %v526
  %v1325 = vunpack.c.l.b16 %v527
  %v1326 = vunpack.c.h.b16 %v527
  %v1327 = vunpack.c.l.b16 %v528
  %v1328 = vunpack.c.h.b16 %v528
  %v1329 = vunpack.c.l.b16 %v529
  %v1330 = vunpack.c.h.b16 %v529
  %v1331 = vunpack.c.l.b16 %v530
  %v1332 = vunpack.c.h.b16 %v530
  %v1333 = vunpack.c.l.b16 %v531
  %v1334 = vunpack.c.h.b16 %v531
  %v1335 = vunpack.c.l.b16 %v532
  %v1336 = vunpack.c.h.b16 %v532
  %v1337 = vunpack.c.l.b16 %v533
  %v1338 = vunpack.c.h.b16 %v533
  %v1339 = vunpack.c.l.b16 %v534
  %v1340 = vunpack.c.h.b16 %v534
  %v1341 = vunpack.c.l.b16 %v535
  %v1342 = vunpack.c.h.b16 %v535
  %v1343 = vunpack.c.l.b16 %v536
  %v1344 = vunpack.c.h.b16 %v536
  %v1345 = vunpack.c.l.b16 %v537
  %v1346 = vunpack.c.h.b16 %v537
  %v1347 = vunpack.c.l.b16 %v538
  %v1348 = vunpack.c.h.b16 %v538
  %v1349 = vunpack.c.l.b16 %v539
  %v1350 = vunpack.c.h.b16 %v539
  %v1351 = vunpack.c.l.b16 %v540
  %v1352 = vunpack.c.h.b16 %v540
  %v1353 = vunpack.c.l.b16 %v541
  %v1354 = vunpack.c.h.b16 %v541
  %v1355 = vunpack.c.l.b16 %v542
  %v1356 = vunpack.c.h.b16 %v542
  %v1357 = vunpack.c.l.b16 %v543
  %v1358 = vunpack.c.h.b16 %v543
  %v1359 = vunpack.c.l.b16 %v544
  %v1360 = vunpack.c.h.b16 %v544
  %v1361 = vunpack.c.l.b16 %v545
  %v1362 = vunpack.c.h.b16 %v545
  %v1363 = vunpack.c.l.b16 %v546
  %v1364 = vunpack.c.h.b16 %v546
  %v1365 = vunpack.c.l.b16 %v547
  %v1366 = vunpack.c.h.b16 %v547
  %v1367 = vunpack.c.l.b16 %v548
  %v1368 = vunpack.c.h.b16 %v548
  %v1369 = vunpack.c.l.b16 %v549
  %v1370 = vunpack.c.h.b16 %v549
  %v1371 = vunpack.c.l.b16 %v550
  %v1372 = vunpack.c.h.b16 %v550
  %v1373 = vunpack.c.l.b16 %v551
  %v1374 = vunpack.c.h.b16 %v551
  %v1375 = vunpack.c.l.b16 %v552
  %v1376 = vunpack.c.h.b16 %v552
  %v1377 = vunpack.c.l.b16 %v553
  %v1378 = vunpack.c.h.b16 %v553
  %v1379 = vunpack.c.l.b16 %v554
  %v1380 = vunpack.c.h.b16 %v554
  %v1381 = vunpack.c.l.b16 %v555
  %v1382 = vunpack.c.h.b16 %v555
  %v1383 = vunpack.c.l.b16 %v556
  %v1384 = vunpack.c.h.b16 %v556
  %v1385 = vunpack.c.l.b16 %v557
  %v1386 = vunpack.c.h.b16 %v557
  %v1387 = vunpack.c.l.b16 %v558
  %v1388 = vunpack.c.h.b16 %v558
  %v1389 = vunpack.c.l.b16 %v559
  %v1390 = vunpack.c.h.b16 %v559
  %v1391 = vunpack.c.l.b16 %v560
  %v1392 = vunpack.c.h.b16 %v560
  %v1393 = vunpack.c.l.b16 %v561
  %v1394 = vunpack.c.h.b16 %v561
  %v1395 = vunpack.c.l.b16 %v562
  %v1396 = vunpack.c.h.b16 %v562
  %v1397 = vunpack.c.l.b16 %v563
  %v1398 = vunpack.c.h.b16 %v563
  %v1399 = vunpack.c.l.b16 %v564
  %v1400 = vunpack.c.h.b16 %v564
  %v1401 = vunpack.c.l.b16 %v565
  %v1402 = vunpack.c.h.b16 %v565
  %v1403 = vunpack.c.l.b16 %v566
  %v1404 = vunpack.c.h.b16 %v566
  %v1405 = vunpack.c.l.b16 %v567
  %v1406 = vunpack.c.h.b16 %v567
  %v1407 = vunpack.c.l.b16 %v568
  %v1408 = vunpack.c.h.b16 %v568
  %v1409 = vunpack.c.l.b16 %v569
  %v1410 = vunpack.c.h.b16 %v569
  %v1411 = vunpack.c.l.b16 %v570
  %v1412 = vunpack.c.h.b16 %v570
  %v1413 = vunpack.c.l.b16 %v571
  %v1414 = vunpack.c.h.b16 %v571
  %v1415 = vunpack.c.l.b16 %v572
  %v1416 = vunpack.c.h.b16 %v572
  %v1417 = vunpack.c.l.b16 %v573
  %v1418 = vunpack.c.h.b16 %v573
  %v1419 = vunpack.c.l.b16 %v574
  %v1420 = vunpack.c.h.b16 %v574
  %v1421 = vunpack.c.l.b16 %v575
  %v1422 = vunpack.c.h.b16 %v575
  %v1423 = vunpack.c.l.b16 %v576
  %v1424 = vunpack.c.h.b16 %v576
  %v1425 = vunpack.c.l.b16 %v577
  %v1426 = vunpack.c.h.b16 %v577
  %v1427 = vunpack.c.l.b16 %v578
  %v1428 = vunpack.c.h.b16 %v578
  %v1429 = vunpack.c.l.b16 %v579
  %v1430 = vunpack.c.h.b16 %v579
  %v1431 = vunpack.c.l.b16 %v580
  %v1432 = vunpack.c.h.b16 %v580
  %v1433 = vunpack.c.l.b16 %v581
  %v1434 = vunpack.c.h.b16 %v581
  %v1435 = vunpack.c.l.b16 %v582
  %v1436 = vunpack.c.h.b16 %v582
  %v1437 = vunpack.c.l.b16 %v583
  %v1438 = vunpack.c.h.b16 %v583
  %v1439 = vunpack.c.l.b16 %v584
  %v1440 = vunpack.c.h.b16 %v584
  %v1441 = vunpack.c.l.b16 %v585
  %v1442 = vunpack.c.h.b16 %v585
  %v1443 = vunpack.c.l.b16 %v586
  %v1444 = vunpack.c.h.b16 %v586
  %v1445 = vunpack.c.l.b16 %v587
  %v1446 = vunpack.c.h.b16 %v587
  %v1447 = vunpack.c.l.b16 %v588
  %v1448 = vunpack.c.h.b16 %v588
  %v1449 = vunpack.c.l.b16 %v589
  %v1450 = vunpack.c.h.b16 %v589
  %v1451 = vunpack.c.l.b16 %v590
  %v1452 = vunpack.c.h.b16 %v590
  %v1453 = vunpack.c.l.b16 %v591
  %v1454 = vunpack.c.h.b16 %v591
  %v1455 = vunpack.c.l.b16 %v592
  %v1456 = vunpack.c.h.b16 %v592
  %v1457 = vunpack.c.l.b16 %v593
  %v1458 = vunpack.c.h.b16 %v593
  %v1459 = vunpack.c.l.b16 %v594
  %v1460 = vunpack.c.h.b16 %v594
  %v1461 = vunpack.c.l.b16 %v595
  %v1462 = vunpack.c.h.b16 %v595
  %v1463 = vunpack.c.l.b16 %v596
  %v1464 = vunpack.c.h.b16 %v596
  %v1465 = vunpack.c.l.b16 %v597
  %v1466 = vunpack.c.h.b16 %v597
  %v1467 = vunpack.c.l.b16 %v598
  %v1468 = vunpack.c.h.b16 %v598
  %v1469 = vunpack.c.l.b16 %v599
  %v1470 = vunpack.c.h.b16 %v599
  %v1471 = vunpack.c.l.b16 %v600
  %v1472 = vunpack.c.h.b16 %v600
  %v1473 = vunpack.c.l.b16 %v601
  %v1474 = vunpack.c.h.b16 %v601
  %v1475 = vunpack.c.l.b16 %v602
  %v1476 = vunpack.c.h.b16 %v602
  %v1477 = vunpack.c.l.b16 %v603
  %v1478 = vunpack.c.h.b16 %v603
  %v1479 = vunpack.c.l.b16 %v604
  %v1480 = vunpack.c.h.b16 %v604
  %v1481 = vunpack.c.l.b16 %v605
  %v1482 = vunpack.c.h.b16 %v605
  %v1483 = vunpack.c.l.b16 %v606
  %v1484 = vunpack.c.h.b16 %v606
  %v1485 = vunpack.c.l.b16 %v607
  %v1486 = vunpack.c.h.b16 %v607
  %v1487 = vunpack.c.l.b16 %v608
  %v1488 = vunpack.c.h.b16 %v608
  %v1489 = vunpack.c.l.b16 %v609
  %v1490 = vunpack.c.h.b16 %v609
  %v1491 = vunpack.c.l.b16 %v610
  %v1492 = vunpack.c.h.b16 %v610
  %v1493 = vunpack.c.l.b16 %v611
  %v1494 = vunpack.c.h.b16 %v611
  %v1495 = vunpack.c.l.b16 %v612
  %v1496 = vunpack.c.h.b16 %v612
  %v1497 = vunpack.c.l.b16 %v613
  %v1498 = vunpack.c.h.b16 %v613
  %v1499 = vunpack.c.l.b16 %v614
  %v1500 = vunpack.c.h.b16 %v614
  %v1501 = vunpack.c.l.b16 %v615
  %v1502 = vunpack.c.h.b16 %v615
  %v1503 = vunpack.c.l.b16 %v616
  %v1504 = vunpack.c.h.b16 %v616
  %v1505 = vunpack.c.l.b16 %v617
  %v1506 = vunpack.c.h.b16 %v617
  %v1507 = vunpack.c.l.b16 %v618
  %v1508 = vunpack.c.h.b16 %v618
  %v1509 = vunpack.c.l.b16 %v619
  %v1510 = vunpack.c.h.b16 %v619
  %v1511 = vunpack.c.l.b16 %v620
  %v1512 = vunpack.c.h.b16 %v620
  %v1513 = vunpack.c.l.b16 %v621
  %v1514 = vunpack.c.h.b16 %v621
  %v1515 = vunpack.c.l.b16 %v622
  %v1516 = vunpack.c.h.b16 %v622
  %v1517 = vpack.c.b16 %v947, %v941
  %v1518 = vpack.c.b16 %v948, %v942
  %v1519 = vpack.c.b16 %v949, %v943
  %v1520 = vpack.c.b16 %v950, %v944
  %v1521 = vpack.c.b16 %v951, %v945
  %v1522 = vpack.c.b16 %v952, %v946
  %v1523 = vpack.c.b16 %v959, %v953
  %v1524 = vpack.c.b16 %v960, %v954
  %v1525 = vpack.c.b16 %v961, %v955
  %v1526 = vpack.c.b16 %v962, %v956
  %v1527 = vpack.c.b16 %v963, %v957
  %v1528 = vpack.c.b16 %v964, %v958
  %v1529 = vpack.c.b16 %v971, %v965
  %v1530 = vpack.c.b16 %v972, %v966
  %v1531 = vpack.c.b16 %v973, %v967
  %v1532 = vpack.c.b16 %v974, %v968
  %v1533 = vpack.c.b16 %v975, %v969
  %v1534 = vpack.c.b16 %v976, %v970
  %v1535 = vpack.c.b16 %v983, %v977
  %v1536 = vpack.c.b16 %v984, %v978
  %v1537 = vpack.c.b16 %v985, %v979
  %v1538 = vpack.c.b16 %v986, %v980
  %v1539 = vpack.c.b16 %v987, %v981
  %v1540 = vpack.c.b16 %v988, %v982
  %v1541 = vpack.c.b16 %v995, %v989
  %v1542 = vpack.c.b16 %v996, %v990
  %v1543 = vpack.c.b16 %v997, %v991
  %v1544 = vpack.c.b16 %v998, %v992
  %v1545 = vpack.c.b16 %v999, %v993
  %v1546 = vpack.c.b16 %v1000, %v994
  %v1547 = vpack.c.b16 %v1007, %v1001
  %v1548 = vpack.c.b16 %v1008, %v1002
  %v1549 = vpack.c.b16 %v1009, %v1003
  %v1550 = vpack.c.b16 %v1010, %v1004
  %v1551 = vpack.c.b16 %v1011, %v1005
  %v1552 = vpack.c.b16 %v1012, %v1006
  %v1553 = vpack.c.b16 %v1019, %v1013
  %v1554 = vpack.c.b16 %v1020, %v1014
  %v1555 = vpack.c.b16 %v1021, %v1015
  %v1556 = vpack.c.b16 %v1022, %v1016
  %v1557 = vpack.c.b16 %v1023, %v1017
  %v1558 = vpack.c.b16 %v1024, %v1018
  %v1559 = vpack.c.b16 %v1031, %v1025
  %v1560 = vpack.c.b16 %v1032, %v1026
  %v1561 = vpack.c.b16 %v1033, %v1027
  %v1562 = vpack.c.b16 %v1034, %v1028
  %v1563 = vpack.c.b16 %v1035, %v1029
  %v1564 = vpack.c.b16 %v1036, %v1030
  %v1565 = vpack.c.b16 %v1043, %v1037
  %v1566 = vpack.c.b16 %v1044, %v1038
  %v1567 = vpack.c.b16 %v1045, %v1039
  %v1568 = vpack.c.b16 %v1046, %v1040
  %v1569 = vpack.c.b16 %v1047, %v1041
  %v1570 = vpack.c.b16 %v1048, %v1042
  %v1571 = vpack.c.b16 %v1055, %v1049
  %v1572 = vpack.c.b16 %v1056, %v1050
  %v1573 = vpack.c.b16 %v1057, %v1051
  %v1574 = vpack.c.b16 %v1058, %v1052
  %v1575 = vpack.c.b16 %v1059, %v1053
  %v1576 = vpack.c.b16 %v1060, %v1054
  %v1577 = vpack.c.b16 %v1067, %v1061
  %v1578 = vpack.c.b16 %v1068, %v1062
  %v1579 = vpack.c.b16 %v1069, %v1063
  %v1580 = vpack.c.b16 %v1070, %v1064
  %v1581 = vpack.c.b16 %v1071, %v1065
  %v1582 = vpack.c.b16 %v1072, %v1066
  %v1583 = vpack.c.b16 %v1079, %v1073
  %v1584 = vpack.c.b16 %v1080, %v1074
  %v1585 = vpack.c.b16 %v1081, %v1075
  %v1586 = vpack.c.b16 %v1082, %v1076
  %v1587 = vpack.c.b16 %v1083, %v1077
  %v1588 = vpack.c.b16 %v1084, %v1078
  %v1589 = vpack.c.b16 %v1091, %v1085
  %v1590 = vpack.c.b16 %v1092, %v1086
  %v1591 = vpack.c.b16 %v1093, %v1087
  %v1592 = vpack.c.b16 %v1094, %v1088
  %v1593 = vpack.c.b16 %v1095, %v1089
  %v1594 = vpack.c.b16 %v1096, %v1090
  %v1595 = vpack.c.b16 %v1103, %v1097
  %v1596 = vpack.c.b16 %v1104, %v1098
  %v1597 = vpack.c.b16 %v1105, %v1099
  %v1598 = vpack.c.b16 %v1106, %v1100
  %v1599 = vpack.c.b16 %v1107, %v1101
  %v1600 = vpack.c.b16 %v1108, %v1102
  %v1601 = vpack.c.b16 %v1115, %v1109
  %v1602 = vpack.c.b16 %v1116, %v1110
  %v1603 = vpack.c.b16 %v1117, %v1111
  %v1604 = vpack.c.b16 %v1118, %v1112
  %v1605 = vpack.c.b16 %v1119, %v1113
  %v1606 = vpack.c.b16 %v1120, %v1114
  %v1607 = vpack.c.b16 %v1127, %v1121
  %v1608 = vpack.c.b16 %v1128, %v1122
  %v1609 = vpack.c.b16 %v1129, %v1123
  %v1610 = vpack.c.b16 %v1130, %v1124
  %v1611 = vpack.c.b16 %v1131, %v1125
  %v1612 = vpack.c.b16 %v1132, %v1126
  %v1613 = vpack.c.b16 %v1139, %v1133
  %v1614 = vpack.c.b16 %v1140, %v1134
  %v1615 = vpack.c.b16 %v1141, %v1135
  %v1616 = vpack.c.b16 %v1142, %v1136
  %v1617 = vpack.c.b16 %v1143, %v1137
  %v1618 = vpack.c.b16 %v1144, %v1138
  %v1619 = vpack.c.b16 %v1151, %v1145
  %v1620 = vpack.c.b16 %v1152, %v1146
  %v1621 = vpack.c.b16 %v1153, %v1147
  %v1622 = vpack.c.b16 %v1154, %v1148
  %v1623 = vpack.c.b16 %v1155, %v1149
  %v1624 = vpack.c.b16 %v1156, %v1150
  %v1625 = vpack.c.b16 %v1163, %v1157
  %v1626 = vpack.c.b16 %v1164, %v1158
  %v1627 = vpack.c.b16 %v1165, %v1159
  %v1628 = vpack.c.b16 %v1166, %v1160
  %v1629 = vpack.c.b16 %v1167, %v1161
  %v1630 = vpack.c.b16 %v1168, %v1162
  %v1631 = vpack.c.b16 %v1175, %v1169
  %v1632 = vpack.c.b16 %v1176, %v1170
  %v1633 = vpack.c.b16 %v1177, %v1171
  %v1634 = vpack.c.b16 %v1178, %v1172
  %v1635 = vpack.c.b16 %v1179, %v1173
  %v1636 = vpack.c.b16 %v1180, %v1174
  %v1637 = vpack.c.b16 %v1187, %v1181
  %v1638 = vpack.c.b16 %v1188, %v1182
  %v1639 = vpack.c.b16 %v1189, %v1183
  %v1640 = vpack.c.b16 %v1190, %v1184
  %v1641 = vpack.c.b16 %v1191, %v1185
  %v1642 = vpack.c.b16 %v1192, %v1186
  %v1643 = vpack.c.b16 %v1199, %v1193
  %v1644 = vpack.c.b16 %v1200, %v1194
  %v1645 = vpack.c.b16 %v1201, %v1195
  %v1646 = vpack.c.b16 %v1202, %v1196
  %v1647 = vpack.c.b16 %v1203, %v1197
  %v1648 = vpack.c.b16 %v1204, %v1198
  %v1649 = vpack.c.b16 %v1211, %v1205
  %v1650 = vpack.c.b16 %v1212, %v1206
  %v1651 = vpack.c.b16 %v1213, %v1207
  %v1652 = vpack.c.b16 %v1214, %v1208
  %v1653 = vpack.c.b16 %v1215, %v1209
  %v1654 = vpack.c.b16 %v1216, %v1210
  %v1655 = vpack.c.b16 %v1223, %v1217
  %v1656 = vpack.c.b16 %v1224, %v1218
  %v1657 = vpack.c.b16 %v1225, %v1219
  %v1658 = vpack.c.b16 %v1226, %v1220
  %v1659 = vpack.c.b16 %v1227, %v1221
  %v1660 = vpack.c.b16 %v1228, %v1222
  %v1661 = vpack.c.b16 %v1235, %v1229
  %v1662 = vpack.c.b16 %v1236, %v1230
  %v1663 = vpack.c.b16 %v1237, %v1231
  %v1664 = vpack.c.b16 %v1238, %v1232
  %v1665 = vpack.c.b16 %v1239, %v1233
  %v1666 = vpack.c.b16 %v1240, %v1234
  %v1667 = vpack.c.b16 %v1247, %v1241
  %v1668 = vpack.c.b16 %v1248, %v1242
  %v1669 = vpack.c.b16 %v1249, %v1243
  %v1670 = vpack.c.b16 %v1250, %v1244
  %v1671 = vpack.c.b16 %v1251, %v1245
  %v1672 = vpack.c.b16 %v1252, %v1246
  %v1673 = vpack.c.b16 %v1259, %v1253
  %v1674 = vpack.c.b16 %v1260, %v1254
  %v1675 = vpack.c.b16 %v1261, %v1255
  %v1676 = vpack.c.b16 %v1262, %v1256
  %v1677 = vpack.c.b16 %v1263, %v1257
  %v1678 = vpack.c.b16 %v1264, %v1258
  %v1679 = vpack.c.b16 %v1271, %v1265
  %v1680 = vpack.c.b16 %v1272, %v1266
  %v1681 = vpack.c.b16 %v1273, %v1267
  %v1682 = vpack.c.b16 %v1274, %v1268
  %v1683 = vpack.c.b16 %v1275, %v1269
  %v1684 = vpack.c.b16 %v1276, %v1270
  %v1685 = vpack.c.b16 %v1283, %v1277
  %v1686 = vpack.c.b16 %v1284, %v1278
  %v1687 = vpack.c.b16 %v1285, %v1279
  %v1688 = vpack.c.b16 %v1286, %v1280
  %v1689 = vpack.c.b16 %v1287, %v1281
  %v1690 = vpack.c.b16 %v1288, %v1282
  %v1691 = vpack.c.b16 %v1295, %v1289
  %v1692 = vpack.c.b16 %v1296, %v1290
  %v1693 = vpack.c.b16 %v1297, %v1291
  %v1694 = vpack.c.b16 %v1298, %v1292
  %v1695 = vpack.c.b16 %v1299, %v1293
  %v1696 = vpack.c.b16 %v1300, %v1294
  %v1697 = vpack.c.b16 %v1307, %v1301
  %v1698 = vpack.c.b16 %v1308, %v1302
  %v1699 = vpack.c.b16 %v1309, %v1303
  %v1700 = vpack.c.b16 %v1310, %v1304
  %v1701 = vpack.c.b16 %v1311, %v1305
  %v1702 = vpack.c.b16 %v1312, %v1306
  %v1703 = vpack.c.b16 %v1319, %v1313
  %v1704 = vpack.c.b16 %v1320, %v1314
  %v1705 = vpack.c.b16 %v1321, %v1315
  %v1706 = vpack.c.b16 %v1322, %v1316
  %v1707 = vpack.c.b16 %v1323, %v1317
  %v1708 = vpack.c.b16 %v1324, %v1318
  %v1709 = vpack.c.b16 %v1331, %v1325
  %v1710 = vpack.c.b16 %v1332, %v1326
  %v1711 = vpack.c.b16 %v1333, %v1327
  %v1712 = vpack.c.b16 %v1334, %v1328
  %v1713 = vpack.c.b16 %v1335, %v1329
  %v1714 = vpack.c.b16 %v1336, %v1330
  %v1715 = vpack.c.b16 %v1343, %v1337
  %v1716 = vpack.c.b16 %v1344, %v1338
  %v1717 = vpack.c.b16 %v1345, %v1339
  %v1718 = vpack.c.b16 %v1346, %v1340
  %v1719 = vpack.c.b16 %v1347, %v1341
  %v1720 = vpack.c.b16 %v1348, %v1342
  %v1721 = vpack.c.b16 %v1355, %v1349
  %v1722 = vpack.c.b16 %v1356, %v1350
  %v1723 = vpack.c.b16 %v1357, %v1351
  %v1724 = vpack.c.b16 %v1358, %v1352
  %v1725 = vpack.c.b16 %v1359, %v1353
  %v1726 = vpack.c.b16 %v1360, %v1354
  %v1727 = vpack.c.b16 %v1367, %v1361
  %v1728 = vpack.c.b16 %v1368, %v1362
  %v1729 = vpack.c.b16 %v1369, %v1363
  %v1730 = vpack.c.b16 %v1370, %v1364
  %v1731 = vpack.c.b16 %v1371, %v1365
  %v1732 = vpack.c.b16 %v1372, %v1366
  %v1733 = vpack.c.b16 %v1379, %v1373
  %v1734 = vpack.c.b16 %v1380, %v1374
  %v1735 = vpack.c.b16 %v1381, %v1375
  %v1736 = vpack.c.b16 %v1382, %v1376
  %v1737 = vpack.c.b16 %v1383, %v1377
  %v1738 = vpack.c.b16 %v1384, %v1378
  %v1739 = vpack.c.b16 %v1391, %v1385
  %v1740 = vpack.c.b16 %v1392, %v1386
  %v1741 = vpack.c.b16 %v1393, %v1387
  %v1742 = vpack.c.b16 %v1394, %v1388
  %v1743 = vpack.c.b16 %v1395, %v1389
  %v1744 = vpack.c.b16 %v1396, %v1390
  %v1745 = vpack.c.b16 %v1403, %v1397
  %v1746 = vpack.c.b16 %v1404, %v1398
  %v1747 = vpack.c.b16 %v1405, %v1399
  %v1748 = vpack.c.b16 %v1406, %v1400
  %v1749 = vpack.c.b16 %v1407, %v1401
  %v1750 = vpack.c.b16 %v1408, %v1402
  %v1751 = vpack.c.b16 %v1415, %v1409
  %v1752 = vpack.c.b16 %v1416, %v1410
  %v1753 = vpack.c.b16 %v1417, %v1411
  %v1754 = vpack.c.b16 %v1418, %v1412
  %v1755 = vpack.c.b16 %v1419, %v1413
  %v1756 = vpack.c.b16 %v1420, %v1414
  %v1757 = vpack.c.b16 %v1427, %v1421
  %v1758 = vpack.c.b16 %v1428, %v1422
  %v1759 = vpack.c.b16 %v1429, %v1423
  %v1760 = vpack.c.b16 %v1430, %v1424
  %v1761 = vpack.c.b16 %v1431, %v1425
  %v1762 = vpack.c.b16 %v1432, %v1426
  %v1763 = vpack.c.b16 %v1439, %v1433
  %v1764 = vpack.c.b16 %v1440, %v1434
  %v1765 = vpack.c.b16 %v1441, %v1435
  %v1766 = vpack.c.b16 %v1442, %v1436
  %v1767 = vpack.c.b16 %v1443, %v1437
  %v1768 = vpack.c.b16 %v1444, %v1438
  %v1769 = vpack.c.b16 %v1451, %v1445
  %v1770 = vpack.c.b16 %v1452, %v1446
  %v1771 = vpack.c.b16 %v1453, %v1447
  %v1772 = vpack.c.b16 %v1454, %v1448
  %v1773 = vpack.c.b16 %v1455, %v1449
  %v1774 = vpack.c.b16 %v1456, %v1450
  %v1775 = vpack.c.b16 %v1463, %v1457
  %v1776 = vpack.c.b16 %v1464, %v1458
  %v1777 = vpack.c.b16 %v1465, %v1459
  %v1778 = vpack.c.b16 %v1466, %v1460
  %v1779 = vpack.c.b16 %v1467, %v1461
  %v1780 = vpack.c.b16 %v1468, %v1462
  %v1781 = vpack.c.b16 %v1475, %v1469
  %v1782 = vpack.c.b16 %v1476, %v1470
  %v1783 = vpack.c.b16 %v1477, %v1471
  %v1784 = vpack.c.b16 %v1478, %v1472
  %v1785 = vpack.c.b16 %v1479, %v1473
  %v1786 = vpack.c.b16 %v1480, %v1474
  %v1787 = vpack.c.b16 %v1487, %v1481
  %v1788 = vpack.c.b16 %v1488, %v1482
  %v1789 = vpack.c.b16 %v1489, %v1483
  %v1790 = vpack.c.b16 %v1490, %v1484
  %v1791 = vpack.c.b16 %v1491, %v1485
  %v1792 = vpack.c.b16 %v1492, %v1486
  %v1793 = vpack.c.b16 %v1499, %v1493
  %v1794 = vpack.c.b16 %v1500, %v1494
  %v1795 = vpack.c.b16 %v1501, %v1495
  %v1796 = vpack.c.b16 %v1502, %v1496
  %v1797 = vpack.c.b16 %v1503, %v1497
  %v1798 = vpack.c.b16 %v1504, %v1498
  %v1799 = vpack.c.b16 %v1511, %v1505
  %v1800 = vpack.c.b16 %v1512, %v1506
  %v1801 = vpack.c.b16 %v1513, %v1507
  %v1802 = vpack.c.b16 %v1514, %v1508
  %v1803 = vpack.c.b16 %v1515, %v1509
  %v1804 = vpack.c.b16 %v1516, %v1510
  %2093 = vmatpush.bf16.msra.mxu0 %v1559
  %2094 = vmatpush.bf16.msra.mxu0 %v1553
  %2095 = vmatpush.bf16.msra.mxu0 %v1547
  %2096 = vmatpush.bf16.msra.mxu0 %v1541
  %2097 = vmatpush.bf16.msra.mxu0 %v1535
  %2098 = vmatpush.bf16.msra.mxu0 %v1529
  %2099 = vmatpush.bf16.msra.mxu0 %v1523
  %2100 = vmatpush.bf16.msra.mxu0 %v1517
  %2101 = vmatmul.bf16.gmra.mxu0 %v641
  %v2102 = vpop.f32.mrf.mxu0
  %v2103 = vadd.f32 0.0, %v2102
  %v2104 = vpop.f32.mrf.mxu0
  %v2105 = vadd.f32 0.0, %v2104
  %2106 = vdwg.mxu0
  %2107 = vmatpush.bf16.msra.mxu0 %v1607
  %2108 = vmatpush.bf16.msra.mxu0 %v1601
  %2109 = vmatpush.bf16.msra.mxu0 %v1595
  %2110 = vmatpush.bf16.msra.mxu0 %v1589
  %2111 = vmatpush.bf16.msra.mxu0 %v1583
  %2112 = vmatpush.bf16.msra.mxu0 %v1577
  %2113 = vmatpush.bf16.msra.mxu0 %v1571
  %2114 = vmatpush.bf16.msra.mxu0 %v1565
  %2115 = vmatmul.bf16.gmra.mxu0 %v642
  %v2116 = vpop.f32.mrf.mxu0
  %v2117 = vadd.f32 %v2103, %v2116
  %v2118 = vpop.f32.mrf.mxu0
  %v2119 = vadd.f32 %v2105, %v2118
  %2120 = vdwg.mxu0
  %2121 = vmatpush.bf16.msra.mxu0 %v1655
  %2122 = vmatpush.bf16.msra.mxu0 %v1649
  %2123 = vmatpush.bf16.msra.mxu0 %v1643
  %2124 = vmatpush.bf16.msra.mxu0 %v1637
  %2125 = vmatpush.bf16.msra.mxu0 %v1631
  %2126 = vmatpush.bf16.msra.mxu0 %v1625
  %2127 = vmatpush.bf16.msra.mxu0 %v1619
  %2128 = vmatpush.bf16.msra.mxu0 %v1613
  %2129 = vmatmul.bf16.gmra.mxu0 %v643
  %v2130 = vpop.f32.mrf.mxu0
  %v2131 = vadd.f32 %v2117, %v2130
  %v2132 = vpop.f32.mrf.mxu0
  %v2133 = vadd.f32 %v2119, %v2132
  %2134 = vdwg.mxu0
  %2135 = vmatpush.bf16.msra.mxu0 %v1703
  %2136 = vmatpush.bf16.msra.mxu0 %v1697
  %2137 = vmatpush.bf16.msra.mxu0 %v1691
  %2138 = vmatpush.bf16.msra.mxu0 %v1685
  %2139 = vmatpush.bf16.msra.mxu0 %v1679
  %2140 = vmatpush.bf16.msra.mxu0 %v1673
  %2141 = vmatpush.bf16.msra.mxu0 %v1667
  %2142 = vmatpush.bf16.msra.mxu0 %v1661
  %2143 = vmatmul.bf16.gmra.mxu0 %v644
  %v2144 = vpop.f32.mrf.mxu0
  %v2145 = vadd.f32 %v2131, %v2144
  %v2146 = vpop.f32.mrf.mxu0
  %v2147 = vadd.f32 %v2133, %v2146
  %2148 = vdwg.mxu0
  %2149 = vmatpush.bf16.msra.mxu0 %v1751
  %2150 = vmatpush.bf16.msra.mxu0 %v1745
  %2151 = vmatpush.bf16.msra.mxu0 %v1739
  %2152 = vmatpush.bf16.msra.mxu0 %v1733
  %2153 = vmatpush.bf16.msra.mxu0 %v1727
  %2154 = vmatpush.bf16.msra.mxu0 %v1721
  %2155 = vmatpush.bf16.msra.mxu0 %v1715
  %2156 = vmatpush.bf16.msra.mxu0 %v1709
  %2157 = vmatmul.bf16.gmra.mxu0 %v645
  %v2158 = vpop.f32.mrf.mxu0
  %v2159 = vadd.f32 %v2145, %v2158
  %v2160 = vpop.f32.mrf.mxu0
  %v2161 = vadd.f32 %v2147, %v2160
  %2162 = vdwg.mxu0
  %2163 = vmatpush.bf16.msra.mxu0 %v1799
  %2164 = vmatpush.bf16.msra.mxu0 %v1793
  %2165 = vmatpush.bf16.msra.mxu0 %v1787
  %2166 = vmatpush.bf16.msra.mxu0 %v1781
  %2167 = vmatpush.bf16.msra.mxu0 %v1775
  %2168 = vmatpush.bf16.msra.mxu0 %v1769
  %2169 = vmatpush.bf16.msra.mxu0 %v1763
  %2170 = vmatpush.bf16.msra.mxu0 %v1757
  %2171 = vmatmul.bf16.gmra.mxu0 %v646
  %v2172 = vpop.f32.mrf.mxu0
  %v2173 = vadd.f32 %v2159, %v2172
  %v2174 = vpop.f32.mrf.mxu0
  %v2175 = vadd.f32 %v2161, %v2174
  %2176 = vdwg.mxu0
  %2177 = vmatpush.bf16.msra.mxu0 %v1560
  %2178 = vmatpush.bf16.msra.mxu0 %v1554
  %2179 = vmatpush.bf16.msra.mxu0 %v1548
  %2180 = vmatpush.bf16.msra.mxu0 %v1542
  %2181 = vmatpush.bf16.msra.mxu0 %v1536
  %2182 = vmatpush.bf16.msra.mxu0 %v1530
  %2183 = vmatpush.bf16.msra.mxu0 %v1524
  %2184 = vmatpush.bf16.msra.mxu0 %v1518
  %2185 = vmatmul.bf16.gmra.mxu0 %v641
  %v2186 = vpop.f32.mrf.mxu0
  %v2187 = vadd.f32 0.0, %v2186
  %v2188 = vpop.f32.mrf.mxu0
  %v2189 = vadd.f32 0.0, %v2188
  %2190 = vdwg.mxu0
  %2191 = vmatpush.bf16.msra.mxu0 %v1608
  %2192 = vmatpush.bf16.msra.mxu0 %v1602
  %2193 = vmatpush.bf16.msra.mxu0 %v1596
  %2194 = vmatpush.bf16.msra.mxu0 %v1590
  %2195 = vmatpush.bf16.msra.mxu0 %v1584
  %2196 = vmatpush.bf16.msra.mxu0 %v1578
  %2197 = vmatpush.bf16.msra.mxu0 %v1572
  %2198 = vmatpush.bf16.msra.mxu0 %v1566
  %2199 = vmatmul.bf16.gmra.mxu0 %v642
  %v2200 = vpop.f32.mrf.mxu0
  %v2201 = vadd.f32 %v2187, %v2200
  %v2202 = vpop.f32.mrf.mxu0
  %v2203 = vadd.f32 %v2189, %v2202
  %2204 = vdwg.mxu0
  %2205 = vmatpush.bf16.msra.mxu0 %v1656
  %2206 = vmatpush.bf16.msra.mxu0 %v1650
  %2207 = vmatpush.bf16.msra.mxu0 %v1644
  %2208 = vmatpush.bf16.msra.mxu0 %v1638
  %2209 = vmatpush.bf16.msra.mxu0 %v1632
  %2210 = vmatpush.bf16.msra.mxu0 %v1626
  %2211 = vmatpush.bf16.msra.mxu0 %v1620
  %2212 = vmatpush.bf16.msra.mxu0 %v1614
  %2213 = vmatmul.bf16.gmra.mxu0 %v643
  %v2214 = vpop.f32.mrf.mxu0
  %v2215 = vadd.f32 %v2201, %v2214
  %v2216 = vpop.f32.mrf.mxu0
  %v2217 = vadd.f32 %v2203, %v2216
  %2218 = vdwg.mxu0
  %2219 = vmatpush.bf16.msra.mxu0 %v1704
  %2220 = vmatpush.bf16.msra.mxu0 %v1698
  %2221 = vmatpush.bf16.msra.mxu0 %v1692
  %2222 = vmatpush.bf16.msra.mxu0 %v1686
  %2223 = vmatpush.bf16.msra.mxu0 %v1680
  %2224 = vmatpush.bf16.msra.mxu0 %v1674
  %2225 = vmatpush.bf16.msra.mxu0 %v1668
  %2226 = vmatpush.bf16.msra.mxu0 %v1662
  %2227 = vmatmul.bf16.gmra.mxu0 %v644
  %v2228 = vpop.f32.mrf.mxu0
  %v2229 = vadd.f32 %v2215, %v2228
  %v2230 = vpop.f32.mrf.mxu0
  %v2231 = vadd.f32 %v2217, %v2230
  %2232 = vdwg.mxu0
  %2233 = vmatpush.bf16.msra.mxu0 %v1752
  %2234 = vmatpush.bf16.msra.mxu0 %v1746
  %2235 = vmatpush.bf16.msra.mxu0 %v1740
  %2236 = vmatpush.bf16.msra.mxu0 %v1734
  %2237 = vmatpush.bf16.msra.mxu0 %v1728
  %2238 = vmatpush.bf16.msra.mxu0 %v1722
  %2239 = vmatpush.bf16.msra.mxu0 %v1716
  %2240 = vmatpush.bf16.msra.mxu0 %v1710
  %2241 = vmatmul.bf16.gmra.mxu0 %v645
  %v2242 = vpop.f32.mrf.mxu0
  %v2243 = vadd.f32 %v2229, %v2242
  %v2244 = vpop.f32.mrf.mxu0
  %v2245 = vadd.f32 %v2231, %v2244
  %2246 = vdwg.mxu0
  %2247 = vmatpush.bf16.msra.mxu0 %v1800
  %2248 = vmatpush.bf16.msra.mxu0 %v1794
  %2249 = vmatpush.bf16.msra.mxu0 %v1788
  %2250 = vmatpush.bf16.msra.mxu0 %v1782
  %2251 = vmatpush.bf16.msra.mxu0 %v1776
  %2252 = vmatpush.bf16.msra.mxu0 %v1770
  %2253 = vmatpush.bf16.msra.mxu0 %v1764
  %2254 = vmatpush.bf16.msra.mxu0 %v1758
  %2255 = vmatmul.bf16.gmra.mxu0 %v646
  %v2256 = vpop.f32.mrf.mxu0
  %v2257 = vadd.f32 %v2243, %v2256
  %v2258 = vpop.f32.mrf.mxu0
  %v2259 = vadd.f32 %v2245, %v2258
  %2260 = vdwg.mxu0
  %2261 = vmatpush.bf16.msra.mxu0 %v1561
  %2262 = vmatpush.bf16.msra.mxu0 %v1555
  %2263 = vmatpush.bf16.msra.mxu0 %v1549
  %2264 = vmatpush.bf16.msra.mxu0 %v1543
  %2265 = vmatpush.bf16.msra.mxu0 %v1537
  %2266 = vmatpush.bf16.msra.mxu0 %v1531
  %2267 = vmatpush.bf16.msra.mxu0 %v1525
  %2268 = vmatpush.bf16.msra.mxu0 %v1519
  %2269 = vmatmul.bf16.gmra.mxu0 %v641
  %v2270 = vpop.f32.mrf.mxu0
  %v2271 = vadd.f32 0.0, %v2270
  %v2272 = vpop.f32.mrf.mxu0
  %v2273 = vadd.f32 0.0, %v2272
  %2274 = vdwg.mxu0
  %2275 = vmatpush.bf16.msra.mxu0 %v1609
  %2276 = vmatpush.bf16.msra.mxu0 %v1603
  %2277 = vmatpush.bf16.msra.mxu0 %v1597
  %2278 = vmatpush.bf16.msra.mxu0 %v1591
  %2279 = vmatpush.bf16.msra.mxu0 %v1585
  %2280 = vmatpush.bf16.msra.mxu0 %v1579
  %2281 = vmatpush.bf16.msra.mxu0 %v1573
  %2282 = vmatpush.bf16.msra.mxu0 %v1567
  %2283 = vmatmul.bf16.gmra.mxu0 %v642
  %v2284 = vpop.f32.mrf.mxu0
  %v2285 = vadd.f32 %v2271, %v2284
  %v2286 = vpop.f32.mrf.mxu0
  %v2287 = vadd.f32 %v2273, %v2286
  %2288 = vdwg.mxu0
  %2289 = vmatpush.bf16.msra.mxu0 %v1657
  %2290 = vmatpush.bf16.msra.mxu0 %v1651
  %2291 = vmatpush.bf16.msra.mxu0 %v1645
  %2292 = vmatpush.bf16.msra.mxu0 %v1639
  %2293 = vmatpush.bf16.msra.mxu0 %v1633
  %2294 = vmatpush.bf16.msra.mxu0 %v1627
  %2295 = vmatpush.bf16.msra.mxu0 %v1621
  %2296 = vmatpush.bf16.msra.mxu0 %v1615
  %2297 = vmatmul.bf16.gmra.mxu0 %v643
  %v2298 = vpop.f32.mrf.mxu0
  %v2299 = vadd.f32 %v2285, %v2298
  %v2300 = vpop.f32.mrf.mxu0
  %v2301 = vadd.f32 %v2287, %v2300
  %2302 = vdwg.mxu0
  %2303 = vmatpush.bf16.msra.mxu0 %v1705
  %2304 = vmatpush.bf16.msra.mxu0 %v1699
  %2305 = vmatpush.bf16.msra.mxu0 %v1693
  %2306 = vmatpush.bf16.msra.mxu0 %v1687
  %2307 = vmatpush.bf16.msra.mxu0 %v1681
  %2308 = vmatpush.bf16.msra.mxu0 %v1675
  %2309 = vmatpush.bf16.msra.mxu0 %v1669
  %2310 = vmatpush.bf16.msra.mxu0 %v1663
  %2311 = vmatmul.bf16.gmra.mxu0 %v644
  %v2312 = vpop.f32.mrf.mxu0
  %v2313 = vadd.f32 %v2299, %v2312
  %v2314 = vpop.f32.mrf.mxu0
  %v2315 = vadd.f32 %v2301, %v2314
  %2316 = vdwg.mxu0
  %2317 = vmatpush.bf16.msra.mxu0 %v1753
  %2318 = vmatpush.bf16.msra.mxu0 %v1747
  %2319 = vmatpush.bf16.msra.mxu0 %v1741
  %2320 = vmatpush.bf16.msra.mxu0 %v1735
  %2321 = vmatpush.bf16.msra.mxu0 %v1729
  %2322 = vmatpush.bf16.msra.mxu0 %v1723
  %2323 = vmatpush.bf16.msra.mxu0 %v1717
  %2324 = vmatpush.bf16.msra.mxu0 %v1711
  %2325 = vmatmul.bf16.gmra.mxu0 %v645
  %v2326 = vpop.f32.mrf.mxu0
  %v2327 = vadd.f32 %v2313, %v2326
  %v2328 = vpop.f32.mrf.mxu0
  %v2329 = vadd.f32 %v2315, %v2328
  %2330 = vdwg.mxu0
  %2331 = vmatpush.bf16.msra.mxu0 %v1801
  %2332 = vmatpush.bf16.msra.mxu0 %v1795
  %2333 = vmatpush.bf16.msra.mxu0 %v1789
  %2334 = vmatpush.bf16.msra.mxu0 %v1783
  %2335 = vmatpush.bf16.msra.mxu0 %v1777
  %2336 = vmatpush.bf16.msra.mxu0 %v1771
  %2337 = vmatpush.bf16.msra.mxu0 %v1765
  %2338 = vmatpush.bf16.msra.mxu0 %v1759
  %2339 = vmatmul.bf16.gmra.mxu0 %v646
  %v2340 = vpop.f32.mrf.mxu0
  %v2341 = vadd.f32 %v2327, %v2340
  %v2342 = vpop.f32.mrf.mxu0
  %v2343 = vadd.f32 %v2329, %v2342
  %2344 = vdwg.mxu0
  %2345 = vmatpush.bf16.msra.mxu0 %v1562
  %2346 = vmatpush.bf16.msra.mxu0 %v1556
  %2347 = vmatpush.bf16.msra.mxu0 %v1550
  %2348 = vmatpush.bf16.msra.mxu0 %v1544
  %2349 = vmatpush.bf16.msra.mxu0 %v1538
  %2350 = vmatpush.bf16.msra.mxu0 %v1532
  %2351 = vmatpush.bf16.msra.mxu0 %v1526
  %2352 = vmatpush.bf16.msra.mxu0 %v1520
  %2353 = vmatmul.bf16.gmra.mxu0 %v641
  %v2354 = vpop.f32.mrf.mxu0
  %v2355 = vadd.f32 0.0, %v2354
  %v2356 = vpop.f32.mrf.mxu0
  %v2357 = vadd.f32 0.0, %v2356
  %2358 = vdwg.mxu0
  %2359 = vmatpush.bf16.msra.mxu0 %v1610
  %2360 = vmatpush.bf16.msra.mxu0 %v1604
  %2361 = vmatpush.bf16.msra.mxu0 %v1598
  %2362 = vmatpush.bf16.msra.mxu0 %v1592
  %2363 = vmatpush.bf16.msra.mxu0 %v1586
  %2364 = vmatpush.bf16.msra.mxu0 %v1580
  %2365 = vmatpush.bf16.msra.mxu0 %v1574
  %2366 = vmatpush.bf16.msra.mxu0 %v1568
  %2367 = vmatmul.bf16.gmra.mxu0 %v642
  %v2368 = vpop.f32.mrf.mxu0
  %v2369 = vadd.f32 %v2355, %v2368
  %v2370 = vpop.f32.mrf.mxu0
  %v2371 = vadd.f32 %v2357, %v2370
  %2372 = vdwg.mxu0
  %2373 = vmatpush.bf16.msra.mxu0 %v1658
  %2374 = vmatpush.bf16.msra.mxu0 %v1652
  %2375 = vmatpush.bf16.msra.mxu0 %v1646
  %2376 = vmatpush.bf16.msra.mxu0 %v1640
  %2377 = vmatpush.bf16.msra.mxu0 %v1634
  %2378 = vmatpush.bf16.msra.mxu0 %v1628
  %2379 = vmatpush.bf16.msra.mxu0 %v1622
  %2380 = vmatpush.bf16.msra.mxu0 %v1616
  %2381 = vmatmul.bf16.gmra.mxu0 %v643
  %v2382 = vpop.f32.mrf.mxu0
  %v2383 = vadd.f32 %v2369, %v2382
  %v2384 = vpop.f32.mrf.mxu0
  %v2385 = vadd.f32 %v2371, %v2384
  %2386 = vdwg.mxu0
  %2387 = vmatpush.bf16.msra.mxu0 %v1706
  %2388 = vmatpush.bf16.msra.mxu0 %v1700
  %2389 = vmatpush.bf16.msra.mxu0 %v1694
  %2390 = vmatpush.bf16.msra.mxu0 %v1688
  %2391 = vmatpush.bf16.msra.mxu0 %v1682
  %2392 = vmatpush.bf16.msra.mxu0 %v1676
  %2393 = vmatpush.bf16.msra.mxu0 %v1670
  %2394 = vmatpush.bf16.msra.mxu0 %v1664
  %2395 = vmatmul.bf16.gmra.mxu0 %v644
  %v2396 = vpop.f32.mrf.mxu0
  %v2397 = vadd.f32 %v2383, %v2396
  %v2398 = vpop.f32.mrf.mxu0
  %v2399 = vadd.f32 %v2385, %v2398
  %2400 = vdwg.mxu0
  %2401 = vmatpush.bf16.msra.mxu0 %v1754
  %2402 = vmatpush.bf16.msra.mxu0 %v1748
  %2403 = vmatpush.bf16.msra.mxu0 %v1742
  %2404 = vmatpush.bf16.msra.mxu0 %v1736
  %2405 = vmatpush.bf16.msra.mxu0 %v1730
  %2406 = vmatpush.bf16.msra.mxu0 %v1724
  %2407 = vmatpush.bf16.msra.mxu0 %v1718
  %2408 = vmatpush.bf16.msra.mxu0 %v1712
  %2409 = vmatmul.bf16.gmra.mxu0 %v645
  %v2410 = vpop.f32.mrf.mxu0
  %v2411 = vadd.f32 %v2397, %v2410
  %v2412 = vpop.f32.mrf.mxu0
  %v2413 = vadd.f32 %v2399, %v2412
  %2414 = vdwg.mxu0
  %2415 = vmatpush.bf16.msra.mxu0 %v1802
  %2416 = vmatpush.bf16.msra.mxu0 %v1796
  %2417 = vmatpush.bf16.msra.mxu0 %v1790
  %2418 = vmatpush.bf16.msra.mxu0 %v1784
  %2419 = vmatpush.bf16.msra.mxu0 %v1778
  %2420 = vmatpush.bf16.msra.mxu0 %v1772
  %2421 = vmatpush.bf16.msra.mxu0 %v1766
  %2422 = vmatpush.bf16.msra.mxu0 %v1760
  %2423 = vmatmul.bf16.gmra.mxu0 %v646
  %v2424 = vpop.f32.mrf.mxu0
  %v2425 = vadd.f32 %v2411, %v2424
  %v2426 = vpop.f32.mrf.mxu0
  %v2427 = vadd.f32 %v2413, %v2426
  %2428 = vdwg.mxu0
  %2429 = vmatpush.bf16.msra.mxu0 %v1563
  %2430 = vmatpush.bf16.msra.mxu0 %v1557
  %2431 = vmatpush.bf16.msra.mxu0 %v1551
  %2432 = vmatpush.bf16.msra.mxu0 %v1545
  %2433 = vmatpush.bf16.msra.mxu0 %v1539
  %2434 = vmatpush.bf16.msra.mxu0 %v1533
  %2435 = vmatpush.bf16.msra.mxu0 %v1527
  %2436 = vmatpush.bf16.msra.mxu0 %v1521
  %2437 = vmatmul.bf16.gmra.mxu0 %v641
  %v2438 = vpop.f32.mrf.mxu0
  %v2439 = vadd.f32 0.0, %v2438
  %v2440 = vpop.f32.mrf.mxu0
  %v2441 = vadd.f32 0.0, %v2440
  %2442 = vdwg.mxu0
  %2443 = vmatpush.bf16.msra.mxu0 %v1611
  %2444 = vmatpush.bf16.msra.mxu0 %v1605
  %2445 = vmatpush.bf16.msra.mxu0 %v1599
  %2446 = vmatpush.bf16.msra.mxu0 %v1593
  %2447 = vmatpush.bf16.msra.mxu0 %v1587
  %2448 = vmatpush.bf16.msra.mxu0 %v1581
  %2449 = vmatpush.bf16.msra.mxu0 %v1575
  %2450 = vmatpush.bf16.msra.mxu0 %v1569
  %2451 = vmatmul.bf16.gmra.mxu0 %v642
  %v2452 = vpop.f32.mrf.mxu0
  %v2453 = vadd.f32 %v2439, %v2452
  %v2454 = vpop.f32.mrf.mxu0
  %v2455 = vadd.f32 %v2441, %v2454
  %2456 = vdwg.mxu0
  %2457 = vmatpush.bf16.msra.mxu0 %v1659
  %2458 = vmatpush.bf16.msra.mxu0 %v1653
  %2459 = vmatpush.bf16.msra.mxu0 %v1647
  %2460 = vmatpush.bf16.msra.mxu0 %v1641
  %2461 = vmatpush.bf16.msra.mxu0 %v1635
  %2462 = vmatpush.bf16.msra.mxu0 %v1629
  %2463 = vmatpush.bf16.msra.mxu0 %v1623
  %2464 = vmatpush.bf16.msra.mxu0 %v1617
  %2465 = vmatmul.bf16.gmra.mxu0 %v643
  %v2466 = vpop.f32.mrf.mxu0
  %v2467 = vadd.f32 %v2453, %v2466
  %v2468 = vpop.f32.mrf.mxu0
  %v2469 = vadd.f32 %v2455, %v2468
  %2470 = vdwg.mxu0
  %2471 = vmatpush.bf16.msra.mxu0 %v1707
  %2472 = vmatpush.bf16.msra.mxu0 %v1701
  %2473 = vmatpush.bf16.msra.mxu0 %v1695
  %2474 = vmatpush.bf16.msra.mxu0 %v1689
  %2475 = vmatpush.bf16.msra.mxu0 %v1683
  %2476 = vmatpush.bf16.msra.mxu0 %v1677
  %2477 = vmatpush.bf16.msra.mxu0 %v1671
  %2478 = vmatpush.bf16.msra.mxu0 %v1665
  %2479 = vmatmul.bf16.gmra.mxu0 %v644
  %v2480 = vpop.f32.mrf.mxu0
  %v2481 = vadd.f32 %v2467, %v2480
  %v2482 = vpop.f32.mrf.mxu0
  %v2483 = vadd.f32 %v2469, %v2482
  %2484 = vdwg.mxu0
  %2485 = vmatpush.bf16.msra.mxu0 %v1755
  %2486 = vmatpush.bf16.msra.mxu0 %v1749
  %2487 = vmatpush.bf16.msra.mxu0 %v1743
  %2488 = vmatpush.bf16.msra.mxu0 %v1737
  %2489 = vmatpush.bf16.msra.mxu0 %v1731
  %2490 = vmatpush.bf16.msra.mxu0 %v1725
  %2491 = vmatpush.bf16.msra.mxu0 %v1719
  %2492 = vmatpush.bf16.msra.mxu0 %v1713
  %2493 = vmatmul.bf16.gmra.mxu0 %v645
  %v2494 = vpop.f32.mrf.mxu0
  %v2495 = vadd.f32 %v2481, %v2494
  %v2496 = vpop.f32.mrf.mxu0
  %v2497 = vadd.f32 %v2483, %v2496
  %2498 = vdwg.mxu0
  %2499 = vmatpush.bf16.msra.mxu0 %v1803
  %2500 = vmatpush.bf16.msra.mxu0 %v1797
  %2501 = vmatpush.bf16.msra.mxu0 %v1791
  %2502 = vmatpush.bf16.msra.mxu0 %v1785
  %2503 = vmatpush.bf16.msra.mxu0 %v1779
  %2504 = vmatpush.bf16.msra.mxu0 %v1773
  %2505 = vmatpush.bf16.msra.mxu0 %v1767
  %2506 = vmatpush.bf16.msra.mxu0 %v1761
  %2507 = vmatmul.bf16.gmra.mxu0 %v646
  %v2508 = vpop.f32.mrf.mxu0
  %v2509 = vadd.f32 %v2495, %v2508
  %v2510 = vpop.f32.mrf.mxu0
  %v2511 = vadd.f32 %v2497, %v2510
  %2512 = vdwg.mxu0
  %2513 = vmatpush.bf16.msra.mxu0 %v1564
  %2514 = vmatpush.bf16.msra.mxu0 %v1558
  %2515 = vmatpush.bf16.msra.mxu0 %v1552
  %2516 = vmatpush.bf16.msra.mxu0 %v1546
  %2517 = vmatpush.bf16.msra.mxu0 %v1540
  %2518 = vmatpush.bf16.msra.mxu0 %v1534
  %2519 = vmatpush.bf16.msra.mxu0 %v1528
  %2520 = vmatpush.bf16.msra.mxu0 %v1522
  %2521 = vmatmul.bf16.gmra.mxu0 %v641
  %v2522 = vpop.f32.mrf.mxu0
  %v2523 = vadd.f32 0.0, %v2522
  %v2524 = vpop.f32.mrf.mxu0
  %v2525 = vadd.f32 0.0, %v2524
  %2526 = vdwg.mxu0
  %2527 = vmatpush.bf16.msra.mxu0 %v1612
  %2528 = vmatpush.bf16.msra.mxu0 %v1606
  %2529 = vmatpush.bf16.msra.mxu0 %v1600
  %2530 = vmatpush.bf16.msra.mxu0 %v1594
  %2531 = vmatpush.bf16.msra.mxu0 %v1588
  %2532 = vmatpush.bf16.msra.mxu0 %v1582
  %2533 = vmatpush.bf16.msra.mxu0 %v1576
  %2534 = vmatpush.bf16.msra.mxu0 %v1570
  %2535 = vmatmul.bf16.gmra.mxu0 %v642
  %v2536 = vpop.f32.mrf.mxu0
  %v2537 = vadd.f32 %v2523, %v2536
  %v2538 = vpop.f32.mrf.mxu0
  %v2539 = vadd.f32 %v2525, %v2538
  %2540 = vdwg.mxu0
  %2541 = vmatpush.bf16.msra.mxu0 %v1660
  %2542 = vmatpush.bf16.msra.mxu0 %v1654
  %2543 = vmatpush.bf16.msra.mxu0 %v1648
  %2544 = vmatpush.bf16.msra.mxu0 %v1642
  %2545 = vmatpush.bf16.msra.mxu0 %v1636
  %2546 = vmatpush.bf16.msra.mxu0 %v1630
  %2547 = vmatpush.bf16.msra.mxu0 %v1624
  %2548 = vmatpush.bf16.msra.mxu0 %v1618
  %2549 = vmatmul.bf16.gmra.mxu0 %v643
  %v2550 = vpop.f32.mrf.mxu0
  %v2551 = vadd.f32 %v2537, %v2550
  %v2552 = vpop.f32.mrf.mxu0
  %v2553 = vadd.f32 %v2539, %v2552
  %2554 = vdwg.mxu0
  %2555 = vmatpush.bf16.msra.mxu0 %v1708
  %2556 = vmatpush.bf16.msra.mxu0 %v1702
  %2557 = vmatpush.bf16.msra.mxu0 %v1696
  %2558 = vmatpush.bf16.msra.mxu0 %v1690
  %2559 = vmatpush.bf16.msra.mxu0 %v1684
  %2560 = vmatpush.bf16.msra.mxu0 %v1678
  %2561 = vmatpush.bf16.msra.mxu0 %v1672
  %2562 = vmatpush.bf16.msra.mxu0 %v1666
  %2563 = vmatmul.bf16.gmra.mxu0 %v644
  %v2564 = vpop.f32.mrf.mxu0
  %v2565 = vadd.f32 %v2551, %v2564
  %v2566 = vpop.f32.mrf.mxu0
  %v2567 = vadd.f32 %v2553, %v2566
  %2568 = vdwg.mxu0
  %2569 = vmatpush.bf16.msra.mxu0 %v1756
  %2570 = vmatpush.bf16.msra.mxu0 %v1750
  %2571 = vmatpush.bf16.msra.mxu0 %v1744
  %2572 = vmatpush.bf16.msra.mxu0 %v1738
  %2573 = vmatpush.bf16.msra.mxu0 %v1732
  %2574 = vmatpush.bf16.msra.mxu0 %v1726
  %2575 = vmatpush.bf16.msra.mxu0 %v1720
  %2576 = vmatpush.bf16.msra.mxu0 %v1714
  %2577 = vmatmul.bf16.gmra.mxu0 %v645
  %v2578 = vpop.f32.mrf.mxu0
  %v2579 = vadd.f32 %v2565, %v2578
  %v2580 = vpop.f32.mrf.mxu0
  %v2581 = vadd.f32 %v2567, %v2580
  %2582 = vdwg.mxu0
  %2583 = vmatpush.bf16.msra.mxu0 %v1804
  %2584 = vmatpush.bf16.msra.mxu0 %v1798
  %2585 = vmatpush.bf16.msra.mxu0 %v1792
  %2586 = vmatpush.bf16.msra.mxu0 %v1786
  %2587 = vmatpush.bf16.msra.mxu0 %v1780
  %2588 = vmatpush.bf16.msra.mxu0 %v1774
  %2589 = vmatpush.bf16.msra.mxu0 %v1768
  %2590 = vmatpush.bf16.msra.mxu0 %v1762
  %2591 = vmatmul.bf16.gmra.mxu0 %v646
  %v2592 = vpop.f32.mrf.mxu0
  %v2593 = vadd.f32 %v2579, %v2592
  %v2594 = vpop.f32.mrf.mxu0
  %v2595 = vadd.f32 %v2581, %v2594
  %2596 = vdwg.mxu0
  %v2603 = vunpack.c.l.b16 %v35
  %v2604 = vunpack.c.h.b16 %v35
  %v2605 = vunpack.c.l.b16 %v36
  %v2606 = vunpack.c.h.b16 %v36
  %v2607 = vunpack.c.l.b16 %v37
  %v2608 = vunpack.c.h.b16 %v37
  %v2609 = vunpack.c.l.b16 %v38
  %v2610 = vunpack.c.h.b16 %v38
  %v2611 = vunpack.c.l.b16 %v39
  %v2612 = vunpack.c.h.b16 %v39
  %v2613 = vunpack.c.l.b16 %v40
  %v2614 = vunpack.c.h.b16 %v40
  %v2615 = vpack.c.b16 %v2609, %v2603
  %v2616 = vpack.c.b16 %v2610, %v2604
  %v2617 = vpack.c.b16 %v2611, %v2605
  %v2618 = vpack.c.b16 %v2612, %v2606
  %v2619 = vpack.c.b16 %v2613, %v2607
  %v2620 = vpack.c.b16 %v2614, %v2608
  %v2915 = vunpack.c.l.b16 %v41
  %v2916 = vunpack.c.h.b16 %v41
  %v2917 = vunpack.c.l.b16 %v42
  %v2918 = vunpack.c.h.b16 %v42
  %v2919 = vunpack.c.l.b16 %v43
  %v2920 = vunpack.c.h.b16 %v43
  %v2921 = vunpack.c.l.b16 %v44
  %v2922 = vunpack.c.h.b16 %v44
  %v2923 = vunpack.c.l.b16 %v45
  %v2924 = vunpack.c.h.b16 %v45
  %v2925 = vunpack.c.l.b16 %v46
  %v2926 = vunpack.c.h.b16 %v46
  %v2927 = vunpack.c.l.b16 %v47
  %v2928 = vunpack.c.h.b16 %v47
  %v2929 = vunpack.c.l.b16 %v48
  %v2930 = vunpack.c.h.b16 %v48
  %v2931 = vunpack.c.l.b16 %v49
  %v2932 = vunpack.c.h.b16 %v49
  %v2933 = vunpack.c.l.b16 %v50
  %v2934 = vunpack.c.h.b16 %v50
  %v2935 = vunpack.c.l.b16 %v51
  %v2936 = vunpack.c.h.b16 %v51
  %v2937 = vunpack.c.l.b16 %v52
  %v2938 = vunpack.c.h.b16 %v52
  %v2939 = vunpack.c.l.b16 %v53
  %v2940 = vunpack.c.h.b16 %v53
  %v2941 = vunpack.c.l.b16 %v54
  %v2942 = vunpack.c.h.b16 %v54
  %v2943 = vunpack.c.l.b16 %v55
  %v2944 = vunpack.c.h.b16 %v55
  %v2945 = vunpack.c.l.b16 %v56
  %v2946 = vunpack.c.h.b16 %v56
  %v2947 = vunpack.c.l.b16 %v57
  %v2948 = vunpack.c.h.b16 %v57
  %v2949 = vunpack.c.l.b16 %v58
  %v2950 = vunpack.c.h.b16 %v58
  %v2951 = vunpack.c.l.b16 %v59
  %v2952 = vunpack.c.h.b16 %v59
  %v2953 = vunpack.c.l.b16 %v60
  %v2954 = vunpack.c.h.b16 %v60
  %v2955 = vunpack.c.l.b16 %v61
  %v2956 = vunpack.c.h.b16 %v61
  %v2957 = vunpack.c.l.b16 %v62
  %v2958 = vunpack.c.h.b16 %v62
  %v2959 = vunpack.c.l.b16 %v63
  %v2960 = vunpack.c.h.b16 %v63
  %v2961 = vunpack.c.l.b16 %v64
  %v2962 = vunpack.c.h.b16 %v64
  %v2963 = vunpack.c.l.b16 %v65
  %v2964 = vunpack.c.h.b16 %v65
  %v2965 = vunpack.c.l.b16 %v66
  %v2966 = vunpack.c.h.b16 %v66
  %v2967 = vunpack.c.l.b16 %v67
  %v2968 = vunpack.c.h.b16 %v67
  %v2969 = vunpack.c.l.b16 %v68
  %v2970 = vunpack.c.h.b16 %v68
  %v2971 = vunpack.c.l.b16 %v69
  %v2972 = vunpack.c.h.b16 %v69
  %v2973 = vunpack.c.l.b16 %v70
  %v2974 = vunpack.c.h.b16 %v70
  %v2975 = vunpack.c.l.b16 %v71
  %v2976 = vunpack.c.h.b16 %v71
  %v2977 = vunpack.c.l.b16 %v72
  %v2978 = vunpack.c.h.b16 %v72
  %v2979 = vunpack.c.l.b16 %v73
  %v2980 = vunpack.c.h.b16 %v73
  %v2981 = vunpack.c.l.b16 %v74
  %v2982 = vunpack.c.h.b16 %v74
  %v2983 = vunpack.c.l.b16 %v75
  %v2984 = vunpack.c.h.b16 %v75
  %v2985 = vunpack.c.l.b16 %v76
  %v2986 = vunpack.c.h.b16 %v76
  %v2987 = vunpack.c.l.b16 %v77
  %v2988 = vunpack.c.h.b16 %v77
  %v2989 = vunpack.c.l.b16 %v78
  %v2990 = vunpack.c.h.b16 %v78
  %v2991 = vunpack.c.l.b16 %v79
  %v2992 = vunpack.c.h.b16 %v79
  %v2993 = vunpack.c.l.b16 %v80
  %v2994 = vunpack.c.h.b16 %v80
  %v2995 = vunpack.c.l.b16 %v81
  %v2996 = vunpack.c.h.b16 %v81
  %v2997 = vunpack.c.l.b16 %v82
  %v2998 = vunpack.c.h.b16 %v82
  %v2999 = vunpack.c.l.b16 %v83
  %v3000 = vunpack.c.h.b16 %v83
  %v3001 = vunpack.c.l.b16 %v84
  %v3002 = vunpack.c.h.b16 %v84
  %v3003 = vunpack.c.l.b16 %v85
  %v3004 = vunpack.c.h.b16 %v85
  %v3005 = vunpack.c.l.b16 %v86
  %v3006 = vunpack.c.h.b16 %v86
  %v3007 = vunpack.c.l.b16 %v87
  %v3008 = vunpack.c.h.b16 %v87
  %v3009 = vunpack.c.l.b16 %v88
  %v3010 = vunpack.c.h.b16 %v88
  %v3011 = vunpack.c.l.b16 %v89
  %v3012 = vunpack.c.h.b16 %v89
  %v3013 = vunpack.c.l.b16 %v90
  %v3014 = vunpack.c.h.b16 %v90
  %v3015 = vunpack.c.l.b16 %v91
  %v3016 = vunpack.c.h.b16 %v91
  %v3017 = vunpack.c.l.b16 %v92
  %v3018 = vunpack.c.h.b16 %v92
  %v3019 = vunpack.c.l.b16 %v93
  %v3020 = vunpack.c.h.b16 %v93
  %v3021 = vunpack.c.l.b16 %v94
  %v3022 = vunpack.c.h.b16 %v94
  %v3023 = vunpack.c.l.b16 %v95
  %v3024 = vunpack.c.h.b16 %v95
  %v3025 = vunpack.c.l.b16 %v96
  %v3026 = vunpack.c.h.b16 %v96
  %v3027 = vunpack.c.l.b16 %v97
  %v3028 = vunpack.c.h.b16 %v97
  %v3029 = vunpack.c.l.b16 %v98
  %v3030 = vunpack.c.h.b16 %v98
  %v3031 = vunpack.c.l.b16 %v99
  %v3032 = vunpack.c.h.b16 %v99
  %v3033 = vunpack.c.l.b16 %v100
  %v3034 = vunpack.c.h.b16 %v100
  %v3035 = vunpack.c.l.b16 %v101
  %v3036 = vunpack.c.h.b16 %v101
  %v3037 = vunpack.c.l.b16 %v102
  %v3038 = vunpack.c.h.b16 %v102
  %v3039 = vunpack.c.l.b16 %v103
  %v3040 = vunpack.c.h.b16 %v103
  %v3041 = vunpack.c.l.b16 %v104
  %v3042 = vunpack.c.h.b16 %v104
  %v3043 = vunpack.c.l.b16 %v105
  %v3044 = vunpack.c.h.b16 %v105
  %v3045 = vunpack.c.l.b16 %v106
  %v3046 = vunpack.c.h.b16 %v106
  %v3047 = vunpack.c.l.b16 %v107
  %v3048 = vunpack.c.h.b16 %v107
  %v3049 = vunpack.c.l.b16 %v108
  %v3050 = vunpack.c.h.b16 %v108
  %v3051 = vunpack.c.l.b16 %v109
  %v3052 = vunpack.c.h.b16 %v109
  %v3053 = vunpack.c.l.b16 %v110
  %v3054 = vunpack.c.h.b16 %v110
  %v3055 = vunpack.c.l.b16 %v111
  %v3056 = vunpack.c.h.b16 %v111
  %v3057 = vunpack.c.l.b16 %v112
  %v3058 = vunpack.c.h.b16 %v112
  %v3059 = vunpack.c.l.b16 %v113
  %v3060 = vunpack.c.h.b16 %v113
  %v3061 = vunpack.c.l.b16 %v114
  %v3062 = vunpack.c.h.b16 %v114
  %v3063 = vunpack.c.l.b16 %v115
  %v3064 = vunpack.c.h.b16 %v115
  %v3065 = vunpack.c.l.b16 %v116
  %v3066 = vunpack.c.h.b16 %v116
  %v3067 = vunpack.c.l.b16 %v117
  %v3068 = vunpack.c.h.b16 %v117
  %v3069 = vunpack.c.l.b16 %v118
  %v3070 = vunpack.c.h.b16 %v118
  %v3071 = vunpack.c.l.b16 %v119
  %v3072 = vunpack.c.h.b16 %v119
  %v3073 = vunpack.c.l.b16 %v120
  %v3074 = vunpack.c.h.b16 %v120
  %v3075 = vunpack.c.l.b16 %v121
  %v3076 = vunpack.c.h.b16 %v121
  %v3077 = vunpack.c.l.b16 %v122
  %v3078 = vunpack.c.h.b16 %v122
  %v3079 = vunpack.c.l.b16 %v123
  %v3080 = vunpack.c.h.b16 %v123
  %v3081 = vunpack.c.l.b16 %v124
  %v3082 = vunpack.c.h.b16 %v124
  %v3083 = vunpack.c.l.b16 %v125
  %v3084 = vunpack.c.h.b16 %v125
  %v3085 = vunpack.c.l.b16 %v126
  %v3086 = vunpack.c.h.b16 %v126
  %v3087 = vunpack.c.l.b16 %v127
  %v3088 = vunpack.c.h.b16 %v127
  %v3089 = vunpack.c.l.b16 %v128
  %v3090 = vunpack.c.h.b16 %v128
  %v3091 = vunpack.c.l.b16 %v129
  %v3092 = vunpack.c.h.b16 %v129
  %v3093 = vunpack.c.l.b16 %v130
  %v3094 = vunpack.c.h.b16 %v130
  %v3095 = vunpack.c.l.b16 %v131
  %v3096 = vunpack.c.h.b16 %v131
  %v3097 = vunpack.c.l.b16 %v132
  %v3098 = vunpack.c.h.b16 %v132
  %v3099 = vunpack.c.l.b16 %v133
  %v3100 = vunpack.c.h.b16 %v133
  %v3101 = vunpack.c.l.b16 %v134
  %v3102 = vunpack.c.h.b16 %v134
  %v3103 = vunpack.c.l.b16 %v135
  %v3104 = vunpack.c.h.b16 %v135
  %v3105 = vunpack.c.l.b16 %v136
  %v3106 = vunpack.c.h.b16 %v136
  %v3107 = vunpack.c.l.b16 %v137
  %v3108 = vunpack.c.h.b16 %v137
  %v3109 = vunpack.c.l.b16 %v138
  %v3110 = vunpack.c.h.b16 %v138
  %v3111 = vunpack.c.l.b16 %v139
  %v3112 = vunpack.c.h.b16 %v139
  %v3113 = vunpack.c.l.b16 %v140
  %v3114 = vunpack.c.h.b16 %v140
  %v3115 = vunpack.c.l.b16 %v141
  %v3116 = vunpack.c.h.b16 %v141
  %v3117 = vunpack.c.l.b16 %v142
  %v3118 = vunpack.c.h.b16 %v142
  %v3119 = vunpack.c.l.b16 %v143
  %v3120 = vunpack.c.h.b16 %v143
  %v3121 = vunpack.c.l.b16 %v144
  %v3122 = vunpack.c.h.b16 %v144
  %v3123 = vunpack.c.l.b16 %v145
  %v3124 = vunpack.c.h.b16 %v145
  %v3125 = vunpack.c.l.b16 %v146
  %v3126 = vunpack.c.h.b16 %v146
  %v3127 = vunpack.c.l.b16 %v147
  %v3128 = vunpack.c.h.b16 %v147
  %v3129 = vunpack.c.l.b16 %v148
  %v3130 = vunpack.c.h.b16 %v148
  %v3131 = vunpack.c.l.b16 %v149
  %v3132 = vunpack.c.h.b16 %v149
  %v3133 = vunpack.c.l.b16 %v150
  %v3134 = vunpack.c.h.b16 %v150
  %v3135 = vunpack.c.l.b16 %v151
  %v3136 = vunpack.c.h.b16 %v151
  %v3137 = vunpack.c.l.b16 %v152
  %v3138 = vunpack.c.h.b16 %v152
  %v3139 = vunpack.c.l.b16 %v153
  %v3140 = vunpack.c.h.b16 %v153
  %v3141 = vunpack.c.l.b16 %v154
  %v3142 = vunpack.c.h.b16 %v154
  %v3143 = vunpack.c.l.b16 %v155
  %v3144 = vunpack.c.h.b16 %v155
  %v3145 = vunpack.c.l.b16 %v156
  %v3146 = vunpack.c.h.b16 %v156
  %v3147 = vunpack.c.l.b16 %v157
  %v3148 = vunpack.c.h.b16 %v157
  %v3149 = vunpack.c.l.b16 %v158
  %v3150 = vunpack.c.h.b16 %v158
  %v3151 = vunpack.c.l.b16 %v159
  %v3152 = vunpack.c.h.b16 %v159
  %v3153 = vunpack.c.l.b16 %v160
  %v3154 = vunpack.c.h.b16 %v160
  %v3155 = vunpack.c.l.b16 %v161
  %v3156 = vunpack.c.h.b16 %v161
  %v3157 = vunpack.c.l.b16 %v162
  %v3158 = vunpack.c.h.b16 %v162
  %v3159 = vunpack.c.l.b16 %v163
  %v3160 = vunpack.c.h.b16 %v163
  %v3161 = vunpack.c.l.b16 %v164
  %v3162 = vunpack.c.h.b16 %v164
  %v3163 = vunpack.c.l.b16 %v165
  %v3164 = vunpack.c.h.b16 %v165
  %v3165 = vunpack.c.l.b16 %v166
  %v3166 = vunpack.c.h.b16 %v166
  %v3167 = vunpack.c.l.b16 %v167
  %v3168 = vunpack.c.h.b16 %v167
  %v3169 = vunpack.c.l.b16 %v168
  %v3170 = vunpack.c.h.b16 %v168
  %v3171 = vunpack.c.l.b16 %v169
  %v3172 = vunpack.c.h.b16 %v169
  %v3173 = vunpack.c.l.b16 %v170
  %v3174 = vunpack.c.h.b16 %v170
  %v3175 = vunpack.c.l.b16 %v171
  %v3176 = vunpack.c.h.b16 %v171
  %v3177 = vunpack.c.l.b16 %v172
  %v3178 = vunpack.c.h.b16 %v172
  %v3179 = vunpack.c.l.b16 %v173
  %v3180 = vunpack.c.h.b16 %v173
  %v3181 = vunpack.c.l.b16 %v174
  %v3182 = vunpack.c.h.b16 %v174
  %v3183 = vunpack.c.l.b16 %v175
  %v3184 = vunpack.c.h.b16 %v175
  %v3185 = vunpack.c.l.b16 %v176
  %v3186 = vunpack.c.h.b16 %v176
  %v3187 = vunpack.c.l.b16 %v177
  %v3188 = vunpack.c.h.b16 %v177
  %v3189 = vunpack.c.l.b16 %v178
  %v3190 = vunpack.c.h.b16 %v178
  %v3191 = vunpack.c.l.b16 %v179
  %v3192 = vunpack.c.h.b16 %v179
  %v3193 = vunpack.c.l.b16 %v180
  %v3194 = vunpack.c.h.b16 %v180
  %v3195 = vunpack.c.l.b16 %v181
  %v3196 = vunpack.c.h.b16 %v181
  %v3197 = vunpack.c.l.b16 %v182
  %v3198 = vunpack.c.h.b16 %v182
  %v3199 = vunpack.c.l.b16 %v183
  %v3200 = vunpack.c.h.b16 %v183
  %v3201 = vunpack.c.l.b16 %v184
  %v3202 = vunpack.c.h.b16 %v184
  %v3203 = vunpack.c.l.b16 %v185
  %v3204 = vunpack.c.h.b16 %v185
  %v3205 = vunpack.c.l.b16 %v186
  %v3206 = vunpack.c.h.b16 %v186
  %v3207 = vunpack.c.l.b16 %v187
  %v3208 = vunpack.c.h.b16 %v187
  %v3209 = vunpack.c.l.b16 %v188
  %v3210 = vunpack.c.h.b16 %v188
  %v3211 = vunpack.c.l.b16 %v189
  %v3212 = vunpack.c.h.b16 %v189
  %v3213 = vunpack.c.l.b16 %v190
  %v3214 = vunpack.c.h.b16 %v190
  %v3215 = vunpack.c.l.b16 %v191
  %v3216 = vunpack.c.h.b16 %v191
  %v3217 = vunpack.c.l.b16 %v192
  %v3218 = vunpack.c.h.b16 %v192
  %v3219 = vunpack.c.l.b16 %v193
  %v3220 = vunpack.c.h.b16 %v193
  %v3221 = vunpack.c.l.b16 %v194
  %v3222 = vunpack.c.h.b16 %v194
  %v3223 = vunpack.c.l.b16 %v195
  %v3224 = vunpack.c.h.b16 %v195
  %v3225 = vunpack.c.l.b16 %v196
  %v3226 = vunpack.c.h.b16 %v196
  %v3227 = vunpack.c.l.b16 %v197
  %v3228 = vunpack.c.h.b16 %v197
  %v3229 = vunpack.c.l.b16 %v198
  %v3230 = vunpack.c.h.b16 %v198
  %v3231 = vunpack.c.l.b16 %v199
  %v3232 = vunpack.c.h.b16 %v199
  %v3233 = vunpack.c.l.b16 %v200
  %v3234 = vunpack.c.h.b16 %v200
  %v3235 = vunpack.c.l.b16 %v201
  %v3236 = vunpack.c.h.b16 %v201
  %v3237 = vunpack.c.l.b16 %v202
  %v3238 = vunpack.c.h.b16 %v202
  %v3239 = vunpack.c.l.b16 %v203
  %v3240 = vunpack.c.h.b16 %v203
  %v3241 = vunpack.c.l.b16 %v204
  %v3242 = vunpack.c.h.b16 %v204
  %v3243 = vunpack.c.l.b16 %v205
  %v3244 = vunpack.c.h.b16 %v205
  %v3245 = vunpack.c.l.b16 %v206
  %v3246 = vunpack.c.h.b16 %v206
  %v3247 = vunpack.c.l.b16 %v207
  %v3248 = vunpack.c.h.b16 %v207
  %v3249 = vunpack.c.l.b16 %v208
  %v3250 = vunpack.c.h.b16 %v208
  %v3251 = vunpack.c.l.b16 %v209
  %v3252 = vunpack.c.h.b16 %v209
  %v3253 = vunpack.c.l.b16 %v210
  %v3254 = vunpack.c.h.b16 %v210
  %v3255 = vunpack.c.l.b16 %v211
  %v3256 = vunpack.c.h.b16 %v211
  %v3257 = vunpack.c.l.b16 %v212
  %v3258 = vunpack.c.h.b16 %v212
  %v3259 = vunpack.c.l.b16 %v213
  %v3260 = vunpack.c.h.b16 %v213
  %v3261 = vunpack.c.l.b16 %v214
  %v3262 = vunpack.c.h.b16 %v214
  %v3263 = vunpack.c.l.b16 %v215
  %v3264 = vunpack.c.h.b16 %v215
  %v3265 = vunpack.c.l.b16 %v216
  %v3266 = vunpack.c.h.b16 %v216
  %v3267 = vunpack.c.l.b16 %v217
  %v3268 = vunpack.c.h.b16 %v217
  %v3269 = vunpack.c.l.b16 %v218
  %v3270 = vunpack.c.h.b16 %v218
  %v3271 = vunpack.c.l.b16 %v219
  %v3272 = vunpack.c.h.b16 %v219
  %v3273 = vunpack.c.l.b16 %v220
  %v3274 = vunpack.c.h.b16 %v220
  %v3275 = vunpack.c.l.b16 %v221
  %v3276 = vunpack.c.h.b16 %v221
  %v3277 = vunpack.c.l.b16 %v222
  %v3278 = vunpack.c.h.b16 %v222
  %v3279 = vunpack.c.l.b16 %v223
  %v3280 = vunpack.c.h.b16 %v223
  %v3281 = vunpack.c.l.b16 %v224
  %v3282 = vunpack.c.h.b16 %v224
  %v3283 = vunpack.c.l.b16 %v225
  %v3284 = vunpack.c.h.b16 %v225
  %v3285 = vunpack.c.l.b16 %v226
  %v3286 = vunpack.c.h.b16 %v226
  %v3287 = vunpack.c.l.b16 %v227
  %v3288 = vunpack.c.h.b16 %v227
  %v3289 = vunpack.c.l.b16 %v228
  %v3290 = vunpack.c.h.b16 %v228
  %v3291 = vunpack.c.l.b16 %v229
  %v3292 = vunpack.c.h.b16 %v229
  %v3293 = vunpack.c.l.b16 %v230
  %v3294 = vunpack.c.h.b16 %v230
  %v3295 = vunpack.c.l.b16 %v231
  %v3296 = vunpack.c.h.b16 %v231
  %v3297 = vunpack.c.l.b16 %v232
  %v3298 = vunpack.c.h.b16 %v232
  %v3299 = vunpack.c.l.b16 %v233
  %v3300 = vunpack.c.h.b16 %v233
  %v3301 = vunpack.c.l.b16 %v234
  %v3302 = vunpack.c.h.b16 %v234
  %v3303 = vunpack.c.l.b16 %v235
  %v3304 = vunpack.c.h.b16 %v235
  %v3305 = vunpack.c.l.b16 %v236
  %v3306 = vunpack.c.h.b16 %v236
  %v3307 = vunpack.c.l.b16 %v237
  %v3308 = vunpack.c.h.b16 %v237
  %v3309 = vunpack.c.l.b16 %v238
  %v3310 = vunpack.c.h.b16 %v238
  %v3311 = vunpack.c.l.b16 %v239
  %v3312 = vunpack.c.h.b16 %v239
  %v3313 = vunpack.c.l.b16 %v240
  %v3314 = vunpack.c.h.b16 %v240
  %v3315 = vunpack.c.l.b16 %v241
  %v3316 = vunpack.c.h.b16 %v241
  %v3317 = vunpack.c.l.b16 %v242
  %v3318 = vunpack.c.h.b16 %v242
  %v3319 = vunpack.c.l.b16 %v243
  %v3320 = vunpack.c.h.b16 %v243
  %v3321 = vunpack.c.l.b16 %v244
  %v3322 = vunpack.c.h.b16 %v244
  %v3323 = vunpack.c.l.b16 %v245
  %v3324 = vunpack.c.h.b16 %v245
  %v3325 = vunpack.c.l.b16 %v246
  %v3326 = vunpack.c.h.b16 %v246
  %v3327 = vunpack.c.l.b16 %v247
  %v3328 = vunpack.c.h.b16 %v247
  %v3329 = vunpack.c.l.b16 %v248
  %v3330 = vunpack.c.h.b16 %v248
  %v3331 = vunpack.c.l.b16 %v249
  %v3332 = vunpack.c.h.b16 %v249
  %v3333 = vunpack.c.l.b16 %v250
  %v3334 = vunpack.c.h.b16 %v250
  %v3335 = vunpack.c.l.b16 %v251
  %v3336 = vunpack.c.h.b16 %v251
  %v3337 = vunpack.c.l.b16 %v252
  %v3338 = vunpack.c.h.b16 %v252
  %v3339 = vunpack.c.l.b16 %v253
  %v3340 = vunpack.c.h.b16 %v253
  %v3341 = vunpack.c.l.b16 %v254
  %v3342 = vunpack.c.h.b16 %v254
  %v3343 = vunpack.c.l.b16 %v255
  %v3344 = vunpack.c.h.b16 %v255
  %v3345 = vunpack.c.l.b16 %v256
  %v3346 = vunpack.c.h.b16 %v256
  %v3347 = vunpack.c.l.b16 %v257
  %v3348 = vunpack.c.h.b16 %v257
  %v3349 = vunpack.c.l.b16 %v258
  %v3350 = vunpack.c.h.b16 %v258
  %v3351 = vunpack.c.l.b16 %v259
  %v3352 = vunpack.c.h.b16 %v259
  %v3353 = vunpack.c.l.b16 %v260
  %v3354 = vunpack.c.h.b16 %v260
  %v3355 = vunpack.c.l.b16 %v261
  %v3356 = vunpack.c.h.b16 %v261
  %v3357 = vunpack.c.l.b16 %v262
  %v3358 = vunpack.c.h.b16 %v262
  %v3359 = vunpack.c.l.b16 %v263
  %v3360 = vunpack.c.h.b16 %v263
  %v3361 = vunpack.c.l.b16 %v264
  %v3362 = vunpack.c.h.b16 %v264
  %v3363 = vunpack.c.l.b16 %v265
  %v3364 = vunpack.c.h.b16 %v265
  %v3365 = vunpack.c.l.b16 %v266
  %v3366 = vunpack.c.h.b16 %v266
  %v3367 = vunpack.c.l.b16 %v267
  %v3368 = vunpack.c.h.b16 %v267
  %v3369 = vunpack.c.l.b16 %v268
  %v3370 = vunpack.c.h.b16 %v268
  %v3371 = vunpack.c.l.b16 %v269
  %v3372 = vunpack.c.h.b16 %v269
  %v3373 = vunpack.c.l.b16 %v270
  %v3374 = vunpack.c.h.b16 %v270
  %v3375 = vunpack.c.l.b16 %v271
  %v3376 = vunpack.c.h.b16 %v271
  %v3377 = vunpack.c.l.b16 %v272
  %v3378 = vunpack.c.h.b16 %v272
  %v3379 = vunpack.c.l.b16 %v273
  %v3380 = vunpack.c.h.b16 %v273
  %v3381 = vunpack.c.l.b16 %v274
  %v3382 = vunpack.c.h.b16 %v274
  %v3383 = vunpack.c.l.b16 %v275
  %v3384 = vunpack.c.h.b16 %v275
  %v3385 = vunpack.c.l.b16 %v276
  %v3386 = vunpack.c.h.b16 %v276
  %v3387 = vunpack.c.l.b16 %v277
  %v3388 = vunpack.c.h.b16 %v277
  %v3389 = vunpack.c.l.b16 %v278
  %v3390 = vunpack.c.h.b16 %v278
  %v3391 = vunpack.c.l.b16 %v279
  %v3392 = vunpack.c.h.b16 %v279
  %v3393 = vunpack.c.l.b16 %v280
  %v3394 = vunpack.c.h.b16 %v280
  %v3395 = vunpack.c.l.b16 %v281
  %v3396 = vunpack.c.h.b16 %v281
  %v3397 = vunpack.c.l.b16 %v282
  %v3398 = vunpack.c.h.b16 %v282
  %v3399 = vunpack.c.l.b16 %v283
  %v3400 = vunpack.c.h.b16 %v283
  %v3401 = vunpack.c.l.b16 %v284
  %v3402 = vunpack.c.h.b16 %v284
  %v3403 = vunpack.c.l.b16 %v285
  %v3404 = vunpack.c.h.b16 %v285
  %v3405 = vunpack.c.l.b16 %v286
  %v3406 = vunpack.c.h.b16 %v286
  %v3407 = vunpack.c.l.b16 %v287
  %v3408 = vunpack.c.h.b16 %v287
  %v3409 = vunpack.c.l.b16 %v288
  %v3410 = vunpack.c.h.b16 %v288
  %v3411 = vunpack.c.l.b16 %v289
  %v3412 = vunpack.c.h.b16 %v289
  %v3413 = vunpack.c.l.b16 %v290
  %v3414 = vunpack.c.h.b16 %v290
  %v3415 = vunpack.c.l.b16 %v291
  %v3416 = vunpack.c.h.b16 %v291
  %v3417 = vunpack.c.l.b16 %v292
  %v3418 = vunpack.c.h.b16 %v292
  %v3419 = vunpack.c.l.b16 %v293
  %v3420 = vunpack.c.h.b16 %v293
  %v3421 = vunpack.c.l.b16 %v294
  %v3422 = vunpack.c.h.b16 %v294
  %v3423 = vunpack.c.l.b16 %v295
  %v3424 = vunpack.c.h.b16 %v295
  %v3425 = vunpack.c.l.b16 %v296
  %v3426 = vunpack.c.h.b16 %v296
  %v3427 = vunpack.c.l.b16 %v297
  %v3428 = vunpack.c.h.b16 %v297
  %v3429 = vunpack.c.l.b16 %v298
  %v3430 = vunpack.c.h.b16 %v298
  %v3431 = vunpack.c.l.b16 %v299
  %v3432 = vunpack.c.h.b16 %v299
  %v3433 = vunpack.c.l.b16 %v300
  %v3434 = vunpack.c.h.b16 %v300
  %v3435 = vunpack.c.l.b16 %v301
  %v3436 = vunpack.c.h.b16 %v301
  %v3437 = vunpack.c.l.b16 %v302
  %v3438 = vunpack.c.h.b16 %v302
  %v3439 = vunpack.c.l.b16 %v303
  %v3440 = vunpack.c.h.b16 %v303
  %v3441 = vunpack.c.l.b16 %v304
  %v3442 = vunpack.c.h.b16 %v304
  %v3443 = vunpack.c.l.b16 %v305
  %v3444 = vunpack.c.h.b16 %v305
  %v3445 = vunpack.c.l.b16 %v306
  %v3446 = vunpack.c.h.b16 %v306
  %v3447 = vunpack.c.l.b16 %v307
  %v3448 = vunpack.c.h.b16 %v307
  %v3449 = vunpack.c.l.b16 %v308
  %v3450 = vunpack.c.h.b16 %v308
  %v3451 = vunpack.c.l.b16 %v309
  %v3452 = vunpack.c.h.b16 %v309
  %v3453 = vunpack.c.l.b16 %v310
  %v3454 = vunpack.c.h.b16 %v310
  %v3455 = vunpack.c.l.b16 %v311
  %v3456 = vunpack.c.h.b16 %v311
  %v3457 = vunpack.c.l.b16 %v312
  %v3458 = vunpack.c.h.b16 %v312
  %v3459 = vunpack.c.l.b16 %v313
  %v3460 = vunpack.c.h.b16 %v313
  %v3461 = vunpack.c.l.b16 %v314
  %v3462 = vunpack.c.h.b16 %v314
  %v3463 = vunpack.c.l.b16 %v315
  %v3464 = vunpack.c.h.b16 %v315
  %v3465 = vunpack.c.l.b16 %v316
  %v3466 = vunpack.c.h.b16 %v316
  %v3467 = vunpack.c.l.b16 %v317
  %v3468 = vunpack.c.h.b16 %v317
  %v3469 = vunpack.c.l.b16 %v318
  %v3470 = vunpack.c.h.b16 %v318
  %v3471 = vunpack.c.l.b16 %v319
  %v3472 = vunpack.c.h.b16 %v319
  %v3473 = vunpack.c.l.b16 %v320
  %v3474 = vunpack.c.h.b16 %v320
  %v3475 = vunpack.c.l.b16 %v321
  %v3476 = vunpack.c.h.b16 %v321
  %v3477 = vunpack.c.l.b16 %v322
  %v3478 = vunpack.c.h.b16 %v322
  %v3479 = vunpack.c.l.b16 %v323
  %v3480 = vunpack.c.h.b16 %v323
  %v3481 = vunpack.c.l.b16 %v324
  %v3482 = vunpack.c.h.b16 %v324
  %v3483 = vunpack.c.l.b16 %v325
  %v3484 = vunpack.c.h.b16 %v325
  %v3485 = vunpack.c.l.b16 %v326
  %v3486 = vunpack.c.h.b16 %v326
  %v3487 = vunpack.c.l.b16 %v327
  %v3488 = vunpack.c.h.b16 %v327
  %v3489 = vunpack.c.l.b16 %v328
  %v3490 = vunpack.c.h.b16 %v328
  %v3491 = vpack.c.b16 %v2921, %v2915
  %v3492 = vpack.c.b16 %v2922, %v2916
  %v3493 = vpack.c.b16 %v2923, %v2917
  %v3494 = vpack.c.b16 %v2924, %v2918
  %v3495 = vpack.c.b16 %v2925, %v2919
  %v3496 = vpack.c.b16 %v2926, %v2920
  %v3497 = vpack.c.b16 %v2933, %v2927
  %v3498 = vpack.c.b16 %v2934, %v2928
  %v3499 = vpack.c.b16 %v2935, %v2929
  %v3500 = vpack.c.b16 %v2936, %v2930
  %v3501 = vpack.c.b16 %v2937, %v2931
  %v3502 = vpack.c.b16 %v2938, %v2932
  %v3503 = vpack.c.b16 %v2945, %v2939
  %v3504 = vpack.c.b16 %v2946, %v2940
  %v3505 = vpack.c.b16 %v2947, %v2941
  %v3506 = vpack.c.b16 %v2948, %v2942
  %v3507 = vpack.c.b16 %v2949, %v2943
  %v3508 = vpack.c.b16 %v2950, %v2944
  %v3509 = vpack.c.b16 %v2957, %v2951
  %v3510 = vpack.c.b16 %v2958, %v2952
  %v3511 = vpack.c.b16 %v2959, %v2953
  %v3512 = vpack.c.b16 %v2960, %v2954
  %v3513 = vpack.c.b16 %v2961, %v2955
  %v3514 = vpack.c.b16 %v2962, %v2956
  %v3515 = vpack.c.b16 %v2969, %v2963
  %v3516 = vpack.c.b16 %v2970, %v2964
  %v3517 = vpack.c.b16 %v2971, %v2965
  %v3518 = vpack.c.b16 %v2972, %v2966
  %v3519 = vpack.c.b16 %v2973, %v2967
  %v3520 = vpack.c.b16 %v2974, %v2968
  %v3521 = vpack.c.b16 %v2981, %v2975
  %v3522 = vpack.c.b16 %v2982, %v2976
  %v3523 = vpack.c.b16 %v2983, %v2977
  %v3524 = vpack.c.b16 %v2984, %v2978
  %v3525 = vpack.c.b16 %v2985, %v2979
  %v3526 = vpack.c.b16 %v2986, %v2980
  %v3527 = vpack.c.b16 %v2993, %v2987
  %v3528 = vpack.c.b16 %v2994, %v2988
  %v3529 = vpack.c.b16 %v2995, %v2989
  %v3530 = vpack.c.b16 %v2996, %v2990
  %v3531 = vpack.c.b16 %v2997, %v2991
  %v3532 = vpack.c.b16 %v2998, %v2992
  %v3533 = vpack.c.b16 %v3005, %v2999
  %v3534 = vpack.c.b16 %v3006, %v3000
  %v3535 = vpack.c.b16 %v3007, %v3001
  %v3536 = vpack.c.b16 %v3008, %v3002
  %v3537 = vpack.c.b16 %v3009, %v3003
  %v3538 = vpack.c.b16 %v3010, %v3004
  %v3539 = vpack.c.b16 %v3017, %v3011
  %v3540 = vpack.c.b16 %v3018, %v3012
  %v3541 = vpack.c.b16 %v3019, %v3013
  %v3542 = vpack.c.b16 %v3020, %v3014
  %v3543 = vpack.c.b16 %v3021, %v3015
  %v3544 = vpack.c.b16 %v3022, %v3016
  %v3545 = vpack.c.b16 %v3029, %v3023
  %v3546 = vpack.c.b16 %v3030, %v3024
  %v3547 = vpack.c.b16 %v3031, %v3025
  %v3548 = vpack.c.b16 %v3032, %v3026
  %v3549 = vpack.c.b16 %v3033, %v3027
  %v3550 = vpack.c.b16 %v3034, %v3028
  %v3551 = vpack.c.b16 %v3041, %v3035
  %v3552 = vpack.c.b16 %v3042, %v3036
  %v3553 = vpack.c.b16 %v3043, %v3037
  %v3554 = vpack.c.b16 %v3044, %v3038
  %v3555 = vpack.c.b16 %v3045, %v3039
  %v3556 = vpack.c.b16 %v3046, %v3040
  %v3557 = vpack.c.b16 %v3053, %v3047
  %v3558 = vpack.c.b16 %v3054, %v3048
  %v3559 = vpack.c.b16 %v3055, %v3049
  %v3560 = vpack.c.b16 %v3056, %v3050
  %v3561 = vpack.c.b16 %v3057, %v3051
  %v3562 = vpack.c.b16 %v3058, %v3052
  %v3563 = vpack.c.b16 %v3065, %v3059
  %v3564 = vpack.c.b16 %v3066, %v3060
  %v3565 = vpack.c.b16 %v3067, %v3061
  %v3566 = vpack.c.b16 %v3068, %v3062
  %v3567 = vpack.c.b16 %v3069, %v3063
  %v3568 = vpack.c.b16 %v3070, %v3064
  %v3569 = vpack.c.b16 %v3077, %v3071
  %v3570 = vpack.c.b16 %v3078, %v3072
  %v3571 = vpack.c.b16 %v3079, %v3073
  %v3572 = vpack.c.b16 %v3080, %v3074
  %v3573 = vpack.c.b16 %v3081, %v3075
  %v3574 = vpack.c.b16 %v3082, %v3076
  %v3575 = vpack.c.b16 %v3089, %v3083
  %v3576 = vpack.c.b16 %v3090, %v3084
  %v3577 = vpack.c.b16 %v3091, %v3085
  %v3578 = vpack.c.b16 %v3092, %v3086
  %v3579 = vpack.c.b16 %v3093, %v3087
  %v3580 = vpack.c.b16 %v3094, %v3088
  %v3581 = vpack.c.b16 %v3101, %v3095
  %v3582 = vpack.c.b16 %v3102, %v3096
  %v3583 = vpack.c.b16 %v3103, %v3097
  %v3584 = vpack.c.b16 %v3104, %v3098
  %v3585 = vpack.c.b16 %v3105, %v3099
  %v3586 = vpack.c.b16 %v3106, %v3100
  %v3587 = vpack.c.b16 %v3113, %v3107
  %v3588 = vpack.c.b16 %v3114, %v3108
  %v3589 = vpack.c.b16 %v3115, %v3109
  %v3590 = vpack.c.b16 %v3116, %v3110
  %v3591 = vpack.c.b16 %v3117, %v3111
  %v3592 = vpack.c.b16 %v3118, %v3112
  %v3593 = vpack.c.b16 %v3125, %v3119
  %v3594 = vpack.c.b16 %v3126, %v3120
  %v3595 = vpack.c.b16 %v3127, %v3121
  %v3596 = vpack.c.b16 %v3128, %v3122
  %v3597 = vpack.c.b16 %v3129, %v3123
  %v3598 = vpack.c.b16 %v3130, %v3124
  %v3599 = vpack.c.b16 %v3137, %v3131
  %v3600 = vpack.c.b16 %v3138, %v3132
  %v3601 = vpack.c.b16 %v3139, %v3133
  %v3602 = vpack.c.b16 %v3140, %v3134
  %v3603 = vpack.c.b16 %v3141, %v3135
  %v3604 = vpack.c.b16 %v3142, %v3136
  %v3605 = vpack.c.b16 %v3149, %v3143
  %v3606 = vpack.c.b16 %v3150, %v3144
  %v3607 = vpack.c.b16 %v3151, %v3145
  %v3608 = vpack.c.b16 %v3152, %v3146
  %v3609 = vpack.c.b16 %v3153, %v3147
  %v3610 = vpack.c.b16 %v3154, %v3148
  %v3611 = vpack.c.b16 %v3161, %v3155
  %v3612 = vpack.c.b16 %v3162, %v3156
  %v3613 = vpack.c.b16 %v3163, %v3157
  %v3614 = vpack.c.b16 %v3164, %v3158
  %v3615 = vpack.c.b16 %v3165, %v3159
  %v3616 = vpack.c.b16 %v3166, %v3160
  %v3617 = vpack.c.b16 %v3173, %v3167
  %v3618 = vpack.c.b16 %v3174, %v3168
  %v3619 = vpack.c.b16 %v3175, %v3169
  %v3620 = vpack.c.b16 %v3176, %v3170
  %v3621 = vpack.c.b16 %v3177, %v3171
  %v3622 = vpack.c.b16 %v3178, %v3172
  %v3623 = vpack.c.b16 %v3185, %v3179
  %v3624 = vpack.c.b16 %v3186, %v3180
  %v3625 = vpack.c.b16 %v3187, %v3181
  %v3626 = vpack.c.b16 %v3188, %v3182
  %v3627 = vpack.c.b16 %v3189, %v3183
  %v3628 = vpack.c.b16 %v3190, %v3184
  %v3629 = vpack.c.b16 %v3197, %v3191
  %v3630 = vpack.c.b16 %v3198, %v3192
  %v3631 = vpack.c.b16 %v3199, %v3193
  %v3632 = vpack.c.b16 %v3200, %v3194
  %v3633 = vpack.c.b16 %v3201, %v3195
  %v3634 = vpack.c.b16 %v3202, %v3196
  %v3635 = vpack.c.b16 %v3209, %v3203
  %v3636 = vpack.c.b16 %v3210, %v3204
  %v3637 = vpack.c.b16 %v3211, %v3205
  %v3638 = vpack.c.b16 %v3212, %v3206
  %v3639 = vpack.c.b16 %v3213, %v3207
  %v3640 = vpack.c.b16 %v3214, %v3208
  %v3641 = vpack.c.b16 %v3221, %v3215
  %v3642 = vpack.c.b16 %v3222, %v3216
  %v3643 = vpack.c.b16 %v3223, %v3217
  %v3644 = vpack.c.b16 %v3224, %v3218
  %v3645 = vpack.c.b16 %v3225, %v3219
  %v3646 = vpack.c.b16 %v3226, %v3220
  %v3647 = vpack.c.b16 %v3233, %v3227
  %v3648 = vpack.c.b16 %v3234, %v3228
  %v3649 = vpack.c.b16 %v3235, %v3229
  %v3650 = vpack.c.b16 %v3236, %v3230
  %v3651 = vpack.c.b16 %v3237, %v3231
  %v3652 = vpack.c.b16 %v3238, %v3232
  %v3653 = vpack.c.b16 %v3245, %v3239
  %v3654 = vpack.c.b16 %v3246, %v3240
  %v3655 = vpack.c.b16 %v3247, %v3241
  %v3656 = vpack.c.b16 %v3248, %v3242
  %v3657 = vpack.c.b16 %v3249, %v3243
  %v3658 = vpack.c.b16 %v3250, %v3244
  %v3659 = vpack.c.b16 %v3257, %v3251
  %v3660 = vpack.c.b16 %v3258, %v3252
  %v3661 = vpack.c.b16 %v3259, %v3253
  %v3662 = vpack.c.b16 %v3260, %v3254
  %v3663 = vpack.c.b16 %v3261, %v3255
  %v3664 = vpack.c.b16 %v3262, %v3256
  %v3665 = vpack.c.b16 %v3269, %v3263
  %v3666 = vpack.c.b16 %v3270, %v3264
  %v3667 = vpack.c.b16 %v3271, %v3265
  %v3668 = vpack.c.b16 %v3272, %v3266
  %v3669 = vpack.c.b16 %v3273, %v3267
  %v3670 = vpack.c.b16 %v3274, %v3268
  %v3671 = vpack.c.b16 %v3281, %v3275
  %v3672 = vpack.c.b16 %v3282, %v3276
  %v3673 = vpack.c.b16 %v3283, %v3277
  %v3674 = vpack.c.b16 %v3284, %v3278
  %v3675 = vpack.c.b16 %v3285, %v3279
  %v3676 = vpack.c.b16 %v3286, %v3280
  %v3677 = vpack.c.b16 %v3293, %v3287
  %v3678 = vpack.c.b16 %v3294, %v3288
  %v3679 = vpack.c.b16 %v3295, %v3289
  %v3680 = vpack.c.b16 %v3296, %v3290
  %v3681 = vpack.c.b16 %v3297, %v3291
  %v3682 = vpack.c.b16 %v3298, %v3292
  %v3683 = vpack.c.b16 %v3305, %v3299
  %v3684 = vpack.c.b16 %v3306, %v3300
  %v3685 = vpack.c.b16 %v3307, %v3301
  %v3686 = vpack.c.b16 %v3308, %v3302
  %v3687 = vpack.c.b16 %v3309, %v3303
  %v3688 = vpack.c.b16 %v3310, %v3304
  %v3689 = vpack.c.b16 %v3317, %v3311
  %v3690 = vpack.c.b16 %v3318, %v3312
  %v3691 = vpack.c.b16 %v3319, %v3313
  %v3692 = vpack.c.b16 %v3320, %v3314
  %v3693 = vpack.c.b16 %v3321, %v3315
  %v3694 = vpack.c.b16 %v3322, %v3316
  %v3695 = vpack.c.b16 %v3329, %v3323
  %v3696 = vpack.c.b16 %v3330, %v3324
  %v3697 = vpack.c.b16 %v3331, %v3325
  %v3698 = vpack.c.b16 %v3332, %v3326
  %v3699 = vpack.c.b16 %v3333, %v3327
  %v3700 = vpack.c.b16 %v3334, %v3328
  %v3701 = vpack.c.b16 %v3341, %v3335
  %v3702 = vpack.c.b16 %v3342, %v3336
  %v3703 = vpack.c.b16 %v3343, %v3337
  %v3704 = vpack.c.b16 %v3344, %v3338
  %v3705 = vpack.c.b16 %v3345, %v3339
  %v3706 = vpack.c.b16 %v3346, %v3340
  %v3707 = vpack.c.b16 %v3353, %v3347
  %v3708 = vpack.c.b16 %v3354, %v3348
  %v3709 = vpack.c.b16 %v3355, %v3349
  %v3710 = vpack.c.b16 %v3356, %v3350
  %v3711 = vpack.c.b16 %v3357, %v3351
  %v3712 = vpack.c.b16 %v3358, %v3352
  %v3713 = vpack.c.b16 %v3365, %v3359
  %v3714 = vpack.c.b16 %v3366, %v3360
  %v3715 = vpack.c.b16 %v3367, %v3361
  %v3716 = vpack.c.b16 %v3368, %v3362
  %v3717 = vpack.c.b16 %v3369, %v3363
  %v3718 = vpack.c.b16 %v3370, %v3364
  %v3719 = vpack.c.b16 %v3377, %v3371
  %v3720 = vpack.c.b16 %v3378, %v3372
  %v3721 = vpack.c.b16 %v3379, %v3373
  %v3722 = vpack.c.b16 %v3380, %v3374
  %v3723 = vpack.c.b16 %v3381, %v3375
  %v3724 = vpack.c.b16 %v3382, %v3376
  %v3725 = vpack.c.b16 %v3389, %v3383
  %v3726 = vpack.c.b16 %v3390, %v3384
  %v3727 = vpack.c.b16 %v3391, %v3385
  %v3728 = vpack.c.b16 %v3392, %v3386
  %v3729 = vpack.c.b16 %v3393, %v3387
  %v3730 = vpack.c.b16 %v3394, %v3388
  %v3731 = vpack.c.b16 %v3401, %v3395
  %v3732 = vpack.c.b16 %v3402, %v3396
  %v3733 = vpack.c.b16 %v3403, %v3397
  %v3734 = vpack.c.b16 %v3404, %v3398
  %v3735 = vpack.c.b16 %v3405, %v3399
  %v3736 = vpack.c.b16 %v3406, %v3400
  %v3737 = vpack.c.b16 %v3413, %v3407
  %v3738 = vpack.c.b16 %v3414, %v3408
  %v3739 = vpack.c.b16 %v3415, %v3409
  %v3740 = vpack.c.b16 %v3416, %v3410
  %v3741 = vpack.c.b16 %v3417, %v3411
  %v3742 = vpack.c.b16 %v3418, %v3412
  %v3743 = vpack.c.b16 %v3425, %v3419
  %v3744 = vpack.c.b16 %v3426, %v3420
  %v3745 = vpack.c.b16 %v3427, %v3421
  %v3746 = vpack.c.b16 %v3428, %v3422
  %v3747 = vpack.c.b16 %v3429, %v3423
  %v3748 = vpack.c.b16 %v3430, %v3424
  %v3749 = vpack.c.b16 %v3437, %v3431
  %v3750 = vpack.c.b16 %v3438, %v3432
  %v3751 = vpack.c.b16 %v3439, %v3433
  %v3752 = vpack.c.b16 %v3440, %v3434
  %v3753 = vpack.c.b16 %v3441, %v3435
  %v3754 = vpack.c.b16 %v3442, %v3436
  %v3755 = vpack.c.b16 %v3449, %v3443
  %v3756 = vpack.c.b16 %v3450, %v3444
  %v3757 = vpack.c.b16 %v3451, %v3445
  %v3758 = vpack.c.b16 %v3452, %v3446
  %v3759 = vpack.c.b16 %v3453, %v3447
  %v3760 = vpack.c.b16 %v3454, %v3448
  %v3761 = vpack.c.b16 %v3461, %v3455
  %v3762 = vpack.c.b16 %v3462, %v3456
  %v3763 = vpack.c.b16 %v3463, %v3457
  %v3764 = vpack.c.b16 %v3464, %v3458
  %v3765 = vpack.c.b16 %v3465, %v3459
  %v3766 = vpack.c.b16 %v3466, %v3460
  %v3767 = vpack.c.b16 %v3473, %v3467
  %v3768 = vpack.c.b16 %v3474, %v3468
  %v3769 = vpack.c.b16 %v3475, %v3469
  %v3770 = vpack.c.b16 %v3476, %v3470
  %v3771 = vpack.c.b16 %v3477, %v3471
  %v3772 = vpack.c.b16 %v3478, %v3472
  %v3773 = vpack.c.b16 %v3485, %v3479
  %v3774 = vpack.c.b16 %v3486, %v3480
  %v3775 = vpack.c.b16 %v3487, %v3481
  %v3776 = vpack.c.b16 %v3488, %v3482
  %v3777 = vpack.c.b16 %v3489, %v3483
  %v3778 = vpack.c.b16 %v3490, %v3484
  %4067 = vmatpush.bf16.msra.mxu0 %v3533
  %4068 = vmatpush.bf16.msra.mxu0 %v3527
  %4069 = vmatpush.bf16.msra.mxu0 %v3521
  %4070 = vmatpush.bf16.msra.mxu0 %v3515
  %4071 = vmatpush.bf16.msra.mxu0 %v3509
  %4072 = vmatpush.bf16.msra.mxu0 %v3503
  %4073 = vmatpush.bf16.msra.mxu0 %v3497
  %4074 = vmatpush.bf16.msra.mxu0 %v3491
  %4075 = vmatmul.bf16.gmra.mxu0 %v2615
  %v4076 = vpop.f32.mrf.mxu0
  %v4077 = vadd.f32 %v2173, %v4076
  %v4078 = vpop.f32.mrf.mxu0
  %v4079 = vadd.f32 %v2175, %v4078
  %4080 = vdwg.mxu0
  %4081 = vmatpush.bf16.msra.mxu0 %v3581
  %4082 = vmatpush.bf16.msra.mxu0 %v3575
  %4083 = vmatpush.bf16.msra.mxu0 %v3569
  %4084 = vmatpush.bf16.msra.mxu0 %v3563
  %4085 = vmatpush.bf16.msra.mxu0 %v3557
  %4086 = vmatpush.bf16.msra.mxu0 %v3551
  %4087 = vmatpush.bf16.msra.mxu0 %v3545
  %4088 = vmatpush.bf16.msra.mxu0 %v3539
  %4089 = vmatmul.bf16.gmra.mxu0 %v2616
  %v4090 = vpop.f32.mrf.mxu0
  %v4091 = vadd.f32 %v4077, %v4090
  %v4092 = vpop.f32.mrf.mxu0
  %v4093 = vadd.f32 %v4079, %v4092
  %4094 = vdwg.mxu0
  %4095 = vmatpush.bf16.msra.mxu0 %v3629
  %4096 = vmatpush.bf16.msra.mxu0 %v3623
  %4097 = vmatpush.bf16.msra.mxu0 %v3617
  %4098 = vmatpush.bf16.msra.mxu0 %v3611
  %4099 = vmatpush.bf16.msra.mxu0 %v3605
  %4100 = vmatpush.bf16.msra.mxu0 %v3599
  %4101 = vmatpush.bf16.msra.mxu0 %v3593
  %4102 = vmatpush.bf16.msra.mxu0 %v3587
  %4103 = vmatmul.bf16.gmra.mxu0 %v2617
  %v4104 = vpop.f32.mrf.mxu0
  %v4105 = vadd.f32 %v4091, %v4104
  %v4106 = vpop.f32.mrf.mxu0
  %v4107 = vadd.f32 %v4093, %v4106
  %4108 = vdwg.mxu0
  %4109 = vmatpush.bf16.msra.mxu0 %v3677
  %4110 = vmatpush.bf16.msra.mxu0 %v3671
  %4111 = vmatpush.bf16.msra.mxu0 %v3665
  %4112 = vmatpush.bf16.msra.mxu0 %v3659
  %4113 = vmatpush.bf16.msra.mxu0 %v3653
  %4114 = vmatpush.bf16.msra.mxu0 %v3647
  %4115 = vmatpush.bf16.msra.mxu0 %v3641
  %4116 = vmatpush.bf16.msra.mxu0 %v3635
  %4117 = vmatmul.bf16.gmra.mxu0 %v2618
  %v4118 = vpop.f32.mrf.mxu0
  %v4119 = vadd.f32 %v4105, %v4118
  %v4120 = vpop.f32.mrf.mxu0
  %v4121 = vadd.f32 %v4107, %v4120
  %4122 = vdwg.mxu0
  %4123 = vmatpush.bf16.msra.mxu0 %v3725
  %4124 = vmatpush.bf16.msra.mxu0 %v3719
  %4125 = vmatpush.bf16.msra.mxu0 %v3713
  %4126 = vmatpush.bf16.msra.mxu0 %v3707
  %4127 = vmatpush.bf16.msra.mxu0 %v3701
  %4128 = vmatpush.bf16.msra.mxu0 %v3695
  %4129 = vmatpush.bf16.msra.mxu0 %v3689
  %4130 = vmatpush.bf16.msra.mxu0 %v3683
  %4131 = vmatmul.bf16.gmra.mxu0 %v2619
  %v4132 = vpop.f32.mrf.mxu0
  %v4133 = vadd.f32 %v4119, %v4132
  %v4134 = vpop.f32.mrf.mxu0
  %v4135 = vadd.f32 %v4121, %v4134
  %4136 = vdwg.mxu0
  %4137 = vmatpush.bf16.msra.mxu0 %v3773
  %4138 = vmatpush.bf16.msra.mxu0 %v3767
  %4139 = vmatpush.bf16.msra.mxu0 %v3761
  %4140 = vmatpush.bf16.msra.mxu0 %v3755
  %4141 = vmatpush.bf16.msra.mxu0 %v3749
  %4142 = vmatpush.bf16.msra.mxu0 %v3743
  %4143 = vmatpush.bf16.msra.mxu0 %v3737
  %4144 = vmatpush.bf16.msra.mxu0 %v3731
  %4145 = vmatmul.bf16.gmra.mxu0 %v2620
  %v4146 = vpop.f32.mrf.mxu0
  %v4147 = vadd.f32 %v4133, %v4146
  %v4148 = vpop.f32.mrf.mxu0
  %v4149 = vadd.f32 %v4135, %v4148
  %4150 = vdwg.mxu0
  %4151 = vmatpush.bf16.msra.mxu0 %v3534
  %4152 = vmatpush.bf16.msra.mxu0 %v3528
  %4153 = vmatpush.bf16.msra.mxu0 %v3522
  %4154 = vmatpush.bf16.msra.mxu0 %v3516
  %4155 = vmatpush.bf16.msra.mxu0 %v3510
  %4156 = vmatpush.bf16.msra.mxu0 %v3504
  %4157 = vmatpush.bf16.msra.mxu0 %v3498
  %4158 = vmatpush.bf16.msra.mxu0 %v3492
  %4159 = vmatmul.bf16.gmra.mxu0 %v2615
  %v4160 = vpop.f32.mrf.mxu0
  %v4161 = vadd.f32 %v2257, %v4160
  %v4162 = vpop.f32.mrf.mxu0
  %v4163 = vadd.f32 %v2259, %v4162
  %4164 = vdwg.mxu0
  %4165 = vmatpush.bf16.msra.mxu0 %v3582
  %4166 = vmatpush.bf16.msra.mxu0 %v3576
  %4167 = vmatpush.bf16.msra.mxu0 %v3570
  %4168 = vmatpush.bf16.msra.mxu0 %v3564
  %4169 = vmatpush.bf16.msra.mxu0 %v3558
  %4170 = vmatpush.bf16.msra.mxu0 %v3552
  %4171 = vmatpush.bf16.msra.mxu0 %v3546
  %4172 = vmatpush.bf16.msra.mxu0 %v3540
  %4173 = vmatmul.bf16.gmra.mxu0 %v2616
  %v4174 = vpop.f32.mrf.mxu0
  %v4175 = vadd.f32 %v4161, %v4174
  %v4176 = vpop.f32.mrf.mxu0
  %v4177 = vadd.f32 %v4163, %v4176
  %4178 = vdwg.mxu0
  %4179 = vmatpush.bf16.msra.mxu0 %v3630
  %4180 = vmatpush.bf16.msra.mxu0 %v3624
  %4181 = vmatpush.bf16.msra.mxu0 %v3618
  %4182 = vmatpush.bf16.msra.mxu0 %v3612
  %4183 = vmatpush.bf16.msra.mxu0 %v3606
  %4184 = vmatpush.bf16.msra.mxu0 %v3600
  %4185 = vmatpush.bf16.msra.mxu0 %v3594
  %4186 = vmatpush.bf16.msra.mxu0 %v3588
  %4187 = vmatmul.bf16.gmra.mxu0 %v2617
  %v4188 = vpop.f32.mrf.mxu0
  %v4189 = vadd.f32 %v4175, %v4188
  %v4190 = vpop.f32.mrf.mxu0
  %v4191 = vadd.f32 %v4177, %v4190
  %4192 = vdwg.mxu0
  %4193 = vmatpush.bf16.msra.mxu0 %v3678
  %4194 = vmatpush.bf16.msra.mxu0 %v3672
  %4195 = vmatpush.bf16.msra.mxu0 %v3666
  %4196 = vmatpush.bf16.msra.mxu0 %v3660
  %4197 = vmatpush.bf16.msra.mxu0 %v3654
  %4198 = vmatpush.bf16.msra.mxu0 %v3648
  %4199 = vmatpush.bf16.msra.mxu0 %v3642
  %4200 = vmatpush.bf16.msra.mxu0 %v3636
  %4201 = vmatmul.bf16.gmra.mxu0 %v2618
  %v4202 = vpop.f32.mrf.mxu0
  %v4203 = vadd.f32 %v4189, %v4202
  %v4204 = vpop.f32.mrf.mxu0
  %v4205 = vadd.f32 %v4191, %v4204
  %4206 = vdwg.mxu0
  %4207 = vmatpush.bf16.msra.mxu0 %v3726
  %4208 = vmatpush.bf16.msra.mxu0 %v3720
  %4209 = vmatpush.bf16.msra.mxu0 %v3714
  %4210 = vmatpush.bf16.msra.mxu0 %v3708
  %4211 = vmatpush.bf16.msra.mxu0 %v3702
  %4212 = vmatpush.bf16.msra.mxu0 %v3696
  %4213 = vmatpush.bf16.msra.mxu0 %v3690
  %4214 = vmatpush.bf16.msra.mxu0 %v3684
  %4215 = vmatmul.bf16.gmra.mxu0 %v2619
  %v4216 = vpop.f32.mrf.mxu0
  %v4217 = vadd.f32 %v4203, %v4216
  %v4218 = vpop.f32.mrf.mxu0
  %v4219 = vadd.f32 %v4205, %v4218
  %4220 = vdwg.mxu0
  %4221 = vmatpush.bf16.msra.mxu0 %v3774
  %4222 = vmatpush.bf16.msra.mxu0 %v3768
  %4223 = vmatpush.bf16.msra.mxu0 %v3762
  %4224 = vmatpush.bf16.msra.mxu0 %v3756
  %4225 = vmatpush.bf16.msra.mxu0 %v3750
  %4226 = vmatpush.bf16.msra.mxu0 %v3744
  %4227 = vmatpush.bf16.msra.mxu0 %v3738
  %4228 = vmatpush.bf16.msra.mxu0 %v3732
  %4229 = vmatmul.bf16.gmra.mxu0 %v2620
  %v4230 = vpop.f32.mrf.mxu0
  %v4231 = vadd.f32 %v4217, %v4230
  %v4232 = vpop.f32.mrf.mxu0
  %v4233 = vadd.f32 %v4219, %v4232
  %4234 = vdwg.mxu0
  %4235 = vmatpush.bf16.msra.mxu0 %v3535
  %4236 = vmatpush.bf16.msra.mxu0 %v3529
  %4237 = vmatpush.bf16.msra.mxu0 %v3523
  %4238 = vmatpush.bf16.msra.mxu0 %v3517
  %4239 = vmatpush.bf16.msra.mxu0 %v3511
  %4240 = vmatpush.bf16.msra.mxu0 %v3505
  %4241 = vmatpush.bf16.msra.mxu0 %v3499
  %4242 = vmatpush.bf16.msra.mxu0 %v3493
  %4243 = vmatmul.bf16.gmra.mxu0 %v2615
  %v4244 = vpop.f32.mrf.mxu0
  %v4245 = vadd.f32 %v2341, %v4244
  %v4246 = vpop.f32.mrf.mxu0
  %v4247 = vadd.f32 %v2343, %v4246
  %4248 = vdwg.mxu0
  %4249 = vmatpush.bf16.msra.mxu0 %v3583
  %4250 = vmatpush.bf16.msra.mxu0 %v3577
  %4251 = vmatpush.bf16.msra.mxu0 %v3571
  %4252 = vmatpush.bf16.msra.mxu0 %v3565
  %4253 = vmatpush.bf16.msra.mxu0 %v3559
  %4254 = vmatpush.bf16.msra.mxu0 %v3553
  %4255 = vmatpush.bf16.msra.mxu0 %v3547
  %4256 = vmatpush.bf16.msra.mxu0 %v3541
  %4257 = vmatmul.bf16.gmra.mxu0 %v2616
  %v4258 = vpop.f32.mrf.mxu0
  %v4259 = vadd.f32 %v4245, %v4258
  %v4260 = vpop.f32.mrf.mxu0
  %v4261 = vadd.f32 %v4247, %v4260
  %4262 = vdwg.mxu0
  %4263 = vmatpush.bf16.msra.mxu0 %v3631
  %4264 = vmatpush.bf16.msra.mxu0 %v3625
  %4265 = vmatpush.bf16.msra.mxu0 %v3619
  %4266 = vmatpush.bf16.msra.mxu0 %v3613
  %4267 = vmatpush.bf16.msra.mxu0 %v3607
  %4268 = vmatpush.bf16.msra.mxu0 %v3601
  %4269 = vmatpush.bf16.msra.mxu0 %v3595
  %4270 = vmatpush.bf16.msra.mxu0 %v3589
  %4271 = vmatmul.bf16.gmra.mxu0 %v2617
  %v4272 = vpop.f32.mrf.mxu0
  %v4273 = vadd.f32 %v4259, %v4272
  %v4274 = vpop.f32.mrf.mxu0
  %v4275 = vadd.f32 %v4261, %v4274
  %4276 = vdwg.mxu0
  %4277 = vmatpush.bf16.msra.mxu0 %v3679
  %4278 = vmatpush.bf16.msra.mxu0 %v3673
  %4279 = vmatpush.bf16.msra.mxu0 %v3667
  %4280 = vmatpush.bf16.msra.mxu0 %v3661
  %4281 = vmatpush.bf16.msra.mxu0 %v3655
  %4282 = vmatpush.bf16.msra.mxu0 %v3649
  %4283 = vmatpush.bf16.msra.mxu0 %v3643
  %4284 = vmatpush.bf16.msra.mxu0 %v3637
  %4285 = vmatmul.bf16.gmra.mxu0 %v2618
  %v4286 = vpop.f32.mrf.mxu0
  %v4287 = vadd.f32 %v4273, %v4286
  %v4288 = vpop.f32.mrf.mxu0
  %v4289 = vadd.f32 %v4275, %v4288
  %4290 = vdwg.mxu0
  %4291 = vmatpush.bf16.msra.mxu0 %v3727
  %4292 = vmatpush.bf16.msra.mxu0 %v3721
  %4293 = vmatpush.bf16.msra.mxu0 %v3715
  %4294 = vmatpush.bf16.msra.mxu0 %v3709
  %4295 = vmatpush.bf16.msra.mxu0 %v3703
  %4296 = vmatpush.bf16.msra.mxu0 %v3697
  %4297 = vmatpush.bf16.msra.mxu0 %v3691
  %4298 = vmatpush.bf16.msra.mxu0 %v3685
  %4299 = vmatmul.bf16.gmra.mxu0 %v2619
  %v4300 = vpop.f32.mrf.mxu0
  %v4301 = vadd.f32 %v4287, %v4300
  %v4302 = vpop.f32.mrf.mxu0
  %v4303 = vadd.f32 %v4289, %v4302
  %4304 = vdwg.mxu0
  %4305 = vmatpush.bf16.msra.mxu0 %v3775
  %4306 = vmatpush.bf16.msra.mxu0 %v3769
  %4307 = vmatpush.bf16.msra.mxu0 %v3763
  %4308 = vmatpush.bf16.msra.mxu0 %v3757
  %4309 = vmatpush.bf16.msra.mxu0 %v3751
  %4310 = vmatpush.bf16.msra.mxu0 %v3745
  %4311 = vmatpush.bf16.msra.mxu0 %v3739
  %4312 = vmatpush.bf16.msra.mxu0 %v3733
  %4313 = vmatmul.bf16.gmra.mxu0 %v2620
  %v4314 = vpop.f32.mrf.mxu0
  %v4315 = vadd.f32 %v4301, %v4314
  %v4316 = vpop.f32.mrf.mxu0
  %v4317 = vadd.f32 %v4303, %v4316
  %4318 = vdwg.mxu0
  %4319 = vmatpush.bf16.msra.mxu0 %v3536
  %4320 = vmatpush.bf16.msra.mxu0 %v3530
  %4321 = vmatpush.bf16.msra.mxu0 %v3524
  %4322 = vmatpush.bf16.msra.mxu0 %v3518
  %4323 = vmatpush.bf16.msra.mxu0 %v3512
  %4324 = vmatpush.bf16.msra.mxu0 %v3506
  %4325 = vmatpush.bf16.msra.mxu0 %v3500
  %4326 = vmatpush.bf16.msra.mxu0 %v3494
  %4327 = vmatmul.bf16.gmra.mxu0 %v2615
  %v4328 = vpop.f32.mrf.mxu0
  %v4329 = vadd.f32 %v2425, %v4328
  %v4330 = vpop.f32.mrf.mxu0
  %v4331 = vadd.f32 %v2427, %v4330
  %4332 = vdwg.mxu0
  %4333 = vmatpush.bf16.msra.mxu0 %v3584
  %4334 = vmatpush.bf16.msra.mxu0 %v3578
  %4335 = vmatpush.bf16.msra.mxu0 %v3572
  %4336 = vmatpush.bf16.msra.mxu0 %v3566
  %4337 = vmatpush.bf16.msra.mxu0 %v3560
  %4338 = vmatpush.bf16.msra.mxu0 %v3554
  %4339 = vmatpush.bf16.msra.mxu0 %v3548
  %4340 = vmatpush.bf16.msra.mxu0 %v3542
  %4341 = vmatmul.bf16.gmra.mxu0 %v2616
  %v4342 = vpop.f32.mrf.mxu0
  %v4343 = vadd.f32 %v4329, %v4342
  %v4344 = vpop.f32.mrf.mxu0
  %v4345 = vadd.f32 %v4331, %v4344
  %4346 = vdwg.mxu0
  %4347 = vmatpush.bf16.msra.mxu0 %v3632
  %4348 = vmatpush.bf16.msra.mxu0 %v3626
  %4349 = vmatpush.bf16.msra.mxu0 %v3620
  %4350 = vmatpush.bf16.msra.mxu0 %v3614
  %4351 = vmatpush.bf16.msra.mxu0 %v3608
  %4352 = vmatpush.bf16.msra.mxu0 %v3602
  %4353 = vmatpush.bf16.msra.mxu0 %v3596
  %4354 = vmatpush.bf16.msra.mxu0 %v3590
  %4355 = vmatmul.bf16.gmra.mxu0 %v2617
  %v4356 = vpop.f32.mrf.mxu0
  %v4357 = vadd.f32 %v4343, %v4356
  %v4358 = vpop.f32.mrf.mxu0
  %v4359 = vadd.f32 %v4345, %v4358
  %4360 = vdwg.mxu0
  %4361 = vmatpush.bf16.msra.mxu0 %v3680
  %4362 = vmatpush.bf16.msra.mxu0 %v3674
  %4363 = vmatpush.bf16.msra.mxu0 %v3668
  %4364 = vmatpush.bf16.msra.mxu0 %v3662
  %4365 = vmatpush.bf16.msra.mxu0 %v3656
  %4366 = vmatpush.bf16.msra.mxu0 %v3650
  %4367 = vmatpush.bf16.msra.mxu0 %v3644
  %4368 = vmatpush.bf16.msra.mxu0 %v3638
  %4369 = vmatmul.bf16.gmra.mxu0 %v2618
  %v4370 = vpop.f32.mrf.mxu0
  %v4371 = vadd.f32 %v4357, %v4370
  %v4372 = vpop.f32.mrf.mxu0
  %v4373 = vadd.f32 %v4359, %v4372
  %4374 = vdwg.mxu0
  %4375 = vmatpush.bf16.msra.mxu0 %v3728
  %4376 = vmatpush.bf16.msra.mxu0 %v3722
  %4377 = vmatpush.bf16.msra.mxu0 %v3716
  %4378 = vmatpush.bf16.msra.mxu0 %v3710
  %4379 = vmatpush.bf16.msra.mxu0 %v3704
  %4380 = vmatpush.bf16.msra.mxu0 %v3698
  %4381 = vmatpush.bf16.msra.mxu0 %v3692
  %4382 = vmatpush.bf16.msra.mxu0 %v3686
  %4383 = vmatmul.bf16.gmra.mxu0 %v2619
  %v4384 = vpop.f32.mrf.mxu0
  %v4385 = vadd.f32 %v4371, %v4384
  %v4386 = vpop.f32.mrf.mxu0
  %v4387 = vadd.f32 %v4373, %v4386
  %4388 = vdwg.mxu0
  %4389 = vmatpush.bf16.msra.mxu0 %v3776
  %4390 = vmatpush.bf16.msra.mxu0 %v3770
  %4391 = vmatpush.bf16.msra.mxu0 %v3764
  %4392 = vmatpush.bf16.msra.mxu0 %v3758
  %4393 = vmatpush.bf16.msra.mxu0 %v3752
  %4394 = vmatpush.bf16.msra.mxu0 %v3746
  %4395 = vmatpush.bf16.msra.mxu0 %v3740
  %4396 = vmatpush.bf16.msra.mxu0 %v3734
  %4397 = vmatmul.bf16.gmra.mxu0 %v2620
  %v4398 = vpop.f32.mrf.mxu0
  %v4399 = vadd.f32 %v4385, %v4398
  %v4400 = vpop.f32.mrf.mxu0
  %v4401 = vadd.f32 %v4387, %v4400
  %4402 = vdwg.mxu0
  %4403 = vmatpush.bf16.msra.mxu0 %v3537
  %4404 = vmatpush.bf16.msra.mxu0 %v3531
  %4405 = vmatpush.bf16.msra.mxu0 %v3525
  %4406 = vmatpush.bf16.msra.mxu0 %v3519
  %4407 = vmatpush.bf16.msra.mxu0 %v3513
  %4408 = vmatpush.bf16.msra.mxu0 %v3507
  %4409 = vmatpush.bf16.msra.mxu0 %v3501
  %4410 = vmatpush.bf16.msra.mxu0 %v3495
  %4411 = vmatmul.bf16.gmra.mxu0 %v2615
  %v4412 = vpop.f32.mrf.mxu0
  %v4413 = vadd.f32 %v2509, %v4412
  %v4414 = vpop.f32.mrf.mxu0
  %v4415 = vadd.f32 %v2511, %v4414
  %4416 = vdwg.mxu0
  %4417 = vmatpush.bf16.msra.mxu0 %v3585
  %4418 = vmatpush.bf16.msra.mxu0 %v3579
  %4419 = vmatpush.bf16.msra.mxu0 %v3573
  %4420 = vmatpush.bf16.msra.mxu0 %v3567
  %4421 = vmatpush.bf16.msra.mxu0 %v3561
  %4422 = vmatpush.bf16.msra.mxu0 %v3555
  %4423 = vmatpush.bf16.msra.mxu0 %v3549
  %4424 = vmatpush.bf16.msra.mxu0 %v3543
  %4425 = vmatmul.bf16.gmra.mxu0 %v2616
  %v4426 = vpop.f32.mrf.mxu0
  %v4427 = vadd.f32 %v4413, %v4426
  %v4428 = vpop.f32.mrf.mxu0
  %v4429 = vadd.f32 %v4415, %v4428
  %4430 = vdwg.mxu0
  %4431 = vmatpush.bf16.msra.mxu0 %v3633
  %4432 = vmatpush.bf16.msra.mxu0 %v3627
  %4433 = vmatpush.bf16.msra.mxu0 %v3621
  %4434 = vmatpush.bf16.msra.mxu0 %v3615
  %4435 = vmatpush.bf16.msra.mxu0 %v3609
  %4436 = vmatpush.bf16.msra.mxu0 %v3603
  %4437 = vmatpush.bf16.msra.mxu0 %v3597
  %4438 = vmatpush.bf16.msra.mxu0 %v3591
  %4439 = vmatmul.bf16.gmra.mxu0 %v2617
  %v4440 = vpop.f32.mrf.mxu0
  %v4441 = vadd.f32 %v4427, %v4440
  %v4442 = vpop.f32.mrf.mxu0
  %v4443 = vadd.f32 %v4429, %v4442
  %4444 = vdwg.mxu0
  %4445 = vmatpush.bf16.msra.mxu0 %v3681
  %4446 = vmatpush.bf16.msra.mxu0 %v3675
  %4447 = vmatpush.bf16.msra.mxu0 %v3669
  %4448 = vmatpush.bf16.msra.mxu0 %v3663
  %4449 = vmatpush.bf16.msra.mxu0 %v3657
  %4450 = vmatpush.bf16.msra.mxu0 %v3651
  %4451 = vmatpush.bf16.msra.mxu0 %v3645
  %4452 = vmatpush.bf16.msra.mxu0 %v3639
  %4453 = vmatmul.bf16.gmra.mxu0 %v2618
  %v4454 = vpop.f32.mrf.mxu0
  %v4455 = vadd.f32 %v4441, %v4454
  %v4456 = vpop.f32.mrf.mxu0
  %v4457 = vadd.f32 %v4443, %v4456
  %4458 = vdwg.mxu0
  %4459 = vmatpush.bf16.msra.mxu0 %v3729
  %4460 = vmatpush.bf16.msra.mxu0 %v3723
  %4461 = vmatpush.bf16.msra.mxu0 %v3717
  %4462 = vmatpush.bf16.msra.mxu0 %v3711
  %4463 = vmatpush.bf16.msra.mxu0 %v3705
  %4464 = vmatpush.bf16.msra.mxu0 %v3699
  %4465 = vmatpush.bf16.msra.mxu0 %v3693
  %4466 = vmatpush.bf16.msra.mxu0 %v3687
  %4467 = vmatmul.bf16.gmra.mxu0 %v2619
  %v4468 = vpop.f32.mrf.mxu0
  %v4469 = vadd.f32 %v4455, %v4468
  %v4470 = vpop.f32.mrf.mxu0
  %v4471 = vadd.f32 %v4457, %v4470
  %4472 = vdwg.mxu0
  %4473 = vmatpush.bf16.msra.mxu0 %v3777
  %4474 = vmatpush.bf16.msra.mxu0 %v3771
  %4475 = vmatpush.bf16.msra.mxu0 %v3765
  %4476 = vmatpush.bf16.msra.mxu0 %v3759
  %4477 = vmatpush.bf16.msra.mxu0 %v3753
  %4478 = vmatpush.bf16.msra.mxu0 %v3747
  %4479 = vmatpush.bf16.msra.mxu0 %v3741
  %4480 = vmatpush.bf16.msra.mxu0 %v3735
  %4481 = vmatmul.bf16.gmra.mxu0 %v2620
  %v4482 = vpop.f32.mrf.mxu0
  %v4483 = vadd.f32 %v4469, %v4482
  %v4484 = vpop.f32.mrf.mxu0
  %v4485 = vadd.f32 %v4471, %v4484
  %4486 = vdwg.mxu0
  %4487 = vmatpush.bf16.msra.mxu0 %v3538
  %4488 = vmatpush.bf16.msra.mxu0 %v3532
  %4489 = vmatpush.bf16.msra.mxu0 %v3526
  %4490 = vmatpush.bf16.msra.mxu0 %v3520
  %4491 = vmatpush.bf16.msra.mxu0 %v3514
  %4492 = vmatpush.bf16.msra.mxu0 %v3508
  %4493 = vmatpush.bf16.msra.mxu0 %v3502
  %4494 = vmatpush.bf16.msra.mxu0 %v3496
  %4495 = vmatmul.bf16.gmra.mxu0 %v2615
  %v4496 = vpop.f32.mrf.mxu0
  %v4497 = vadd.f32 %v2593, %v4496
  %v4498 = vpop.f32.mrf.mxu0
  %v4499 = vadd.f32 %v2595, %v4498
  %4500 = vdwg.mxu0
  %4501 = vmatpush.bf16.msra.mxu0 %v3586
  %4502 = vmatpush.bf16.msra.mxu0 %v3580
  %4503 = vmatpush.bf16.msra.mxu0 %v3574
  %4504 = vmatpush.bf16.msra.mxu0 %v3568
  %4505 = vmatpush.bf16.msra.mxu0 %v3562
  %4506 = vmatpush.bf16.msra.mxu0 %v3556
  %4507 = vmatpush.bf16.msra.mxu0 %v3550
  %4508 = vmatpush.bf16.msra.mxu0 %v3544
  %4509 = vmatmul.bf16.gmra.mxu0 %v2616
  %v4510 = vpop.f32.mrf.mxu0
  %v4511 = vadd.f32 %v4497, %v4510
  %v4512 = vpop.f32.mrf.mxu0
  %v4513 = vadd.f32 %v4499, %v4512
  %4514 = vdwg.mxu0
  %4515 = vmatpush.bf16.msra.mxu0 %v3634
  %4516 = vmatpush.bf16.msra.mxu0 %v3628
  %4517 = vmatpush.bf16.msra.mxu0 %v3622
  %4518 = vmatpush.bf16.msra.mxu0 %v3616
  %4519 = vmatpush.bf16.msra.mxu0 %v3610
  %4520 = vmatpush.bf16.msra.mxu0 %v3604
  %4521 = vmatpush.bf16.msra.mxu0 %v3598
  %4522 = vmatpush.bf16.msra.mxu0 %v3592
  %4523 = vmatmul.bf16.gmra.mxu0 %v2617
  %v4524 = vpop.f32.mrf.mxu0
  %v4525 = vadd.f32 %v4511, %v4524
  %v4526 = vpop.f32.mrf.mxu0
  %v4527 = vadd.f32 %v4513, %v4526
  %4528 = vdwg.mxu0
  %4529 = vmatpush.bf16.msra.mxu0 %v3682
  %4530 = vmatpush.bf16.msra.mxu0 %v3676
  %4531 = vmatpush.bf16.msra.mxu0 %v3670
  %4532 = vmatpush.bf16.msra.mxu0 %v3664
  %4533 = vmatpush.bf16.msra.mxu0 %v3658
  %4534 = vmatpush.bf16.msra.mxu0 %v3652
  %4535 = vmatpush.bf16.msra.mxu0 %v3646
  %4536 = vmatpush.bf16.msra.mxu0 %v3640
  %4537 = vmatmul.bf16.gmra.mxu0 %v2618
  %v4538 = vpop.f32.mrf.mxu0
  %v4539 = vadd.f32 %v4525, %v4538
  %v4540 = vpop.f32.mrf.mxu0
  %v4541 = vadd.f32 %v4527, %v4540
  %4542 = vdwg.mxu0
  %4543 = vmatpush.bf16.msra.mxu0 %v3730
  %4544 = vmatpush.bf16.msra.mxu0 %v3724
  %4545 = vmatpush.bf16.msra.mxu0 %v3718
  %4546 = vmatpush.bf16.msra.mxu0 %v3712
  %4547 = vmatpush.bf16.msra.mxu0 %v3706
  %4548 = vmatpush.bf16.msra.mxu0 %v3700
  %4549 = vmatpush.bf16.msra.mxu0 %v3694
  %4550 = vmatpush.bf16.msra.mxu0 %v3688
  %4551 = vmatmul.bf16.gmra.mxu0 %v2619
  %v4552 = vpop.f32.mrf.mxu0
  %v4553 = vadd.f32 %v4539, %v4552
  %v4554 = vpop.f32.mrf.mxu0
  %v4555 = vadd.f32 %v4541, %v4554
  %4556 = vdwg.mxu0
  %4557 = vmatpush.bf16.msra.mxu0 %v3778
  %4558 = vmatpush.bf16.msra.mxu0 %v3772
  %4559 = vmatpush.bf16.msra.mxu0 %v3766
  %4560 = vmatpush.bf16.msra.mxu0 %v3760
  %4561 = vmatpush.bf16.msra.mxu0 %v3754
  %4562 = vmatpush.bf16.msra.mxu0 %v3748
  %4563 = vmatpush.bf16.msra.mxu0 %v3742
  %4564 = vmatpush.bf16.msra.mxu0 %v3736
  %4565 = vmatmul.bf16.gmra.mxu0 %v2620
  %v4566 = vpop.f32.mrf.mxu0
  %v4567 = vadd.f32 %v4553, %v4566
  %v4568 = vpop.f32.mrf.mxu0
  %v4569 = vadd.f32 %v4555, %v4568
  %4570 = vdwg.mxu0
  %v4571 = vld [vmem:[%s4] sm:$0x3f]
  %v4573 = vperm.slane %v4571, 0
  %v4574 = vperm.slane %v4571, 1
  %v4575 = vperm.slane %v4571, 2
  %v4576 = vperm.slane %v4571, 3
  %v4577 = vperm.slane %v4571, 4
  %v4578 = vperm.slane %v4571, 5
  %v4585 = vadd.f32 %v4147, %v4573
  %v4586 = vadd.f32 %v4231, %v4574
  %v4587 = vadd.f32 %v4315, %v4575
  %v4588 = vadd.f32 %v4399, %v4576
  %v4589 = vadd.f32 %v4483, %v4577
  %v4590 = vadd.f32 %v4567, %v4578
  %v4591 = vadd.f32 %v4149, %v4573
  %v4592 = vadd.f32 %v4233, %v4574
  %v4593 = vadd.f32 %v4317, %v4575
  %v4594 = vadd.f32 %v4401, %v4576
  %v4595 = vadd.f32 %v4485, %v4577
  %v4596 = vadd.f32 %v4569, %v4578
  %v4597 = vmul.f32 %v4585, %v4585
  %v4598 = vmul.f32 %v4586, %v4586
  %v4599 = vmul.f32 %v4587, %v4587
  %v4600 = vmul.f32 %v4588, %v4588
  %v4601 = vmul.f32 %v4589, %v4589
  %v4602 = vmul.f32 %v4590, %v4590
  %v4603 = vmul.f32 %v4591, %v4591
  %v4604 = vmul.f32 %v4592, %v4592
  %v4605 = vmul.f32 %v4593, %v4593
  %v4606 = vmul.f32 %v4594, %v4594
  %v4607 = vmul.f32 %v4595, %v4595
  %v4608 = vmul.f32 %v4596, %v4596
  %v4609 = vmul.f32 %v4585, %v4597
  %v4610 = vmul.f32 %v4586, %v4598
  %v4611 = vmul.f32 %v4587, %v4599
  %v4612 = vmul.f32 %v4588, %v4600
  %v4613 = vmul.f32 %v4589, %v4601
  %v4614 = vmul.f32 %v4590, %v4602
  %v4615 = vmul.f32 %v4591, %v4603
  %v4616 = vmul.f32 %v4592, %v4604
  %v4617 = vmul.f32 %v4593, %v4605
  %v4618 = vmul.f32 %v4594, %v4606
  %v4619 = vmul.f32 %v4595, %v4607
  %v4620 = vmul.f32 %v4596, %v4608
  %v4621 = vmul.f32 %v4609, 0.044715
  %v4622 = vmul.f32 %v4610, 0.044715
  %v4623 = vmul.f32 %v4611, 0.044715
  %v4624 = vmul.f32 %v4612, 0.044715
  %v4625 = vmul.f32 %v4613, 0.044715
  %v4626 = vmul.f32 %v4614, 0.044715
  %v4627 = vmul.f32 %v4615, 0.044715
  %v4628 = vmul.f32 %v4616, 0.044715
  %v4629 = vmul.f32 %v4617, 0.044715
  %v4630 = vmul.f32 %v4618, 0.044715
  %v4631 = vmul.f32 %v4619, 0.044715
  %v4632 = vmul.f32 %v4620, 0.044715
  %v4633 = vadd.f32 %v4585, %v4621
  %v4634 = vadd.f32 %v4586, %v4622
  %v4635 = vadd.f32 %v4587, %v4623
  %v4636 = vadd.f32 %v4588, %v4624
  %v4637 = vadd.f32 %v4589, %v4625
  %v4638 = vadd.f32 %v4590, %v4626
  %v4639 = vadd.f32 %v4591, %v4627
  %v4640 = vadd.f32 %v4592, %v4628
  %v4641 = vadd.f32 %v4593, %v4629
  %v4642 = vadd.f32 %v4594, %v4630
  %v4643 = vadd.f32 %v4595, %v4631
  %v4644 = vadd.f32 %v4596, %v4632
  %v4645 = vmul.f32 %v4633, 0.7978846
  %v4646 = vmul.f32 %v4634, 0.7978846
  %v4647 = vmul.f32 %v4635, 0.7978846
  %v4648 = vmul.f32 %v4636, 0.7978846
  %v4649 = vmul.f32 %v4637, 0.7978846
  %v4650 = vmul.f32 %v4638, 0.7978846
  %v4651 = vmul.f32 %v4639, 0.7978846
  %v4652 = vmul.f32 %v4640, 0.7978846
  %v4653 = vmul.f32 %v4641, 0.7978846
  %v4654 = vmul.f32 %v4642, 0.7978846
  %v4655 = vmul.f32 %v4643, 0.7978846
  %v4656 = vmul.f32 %v4644, 0.7978846
  %v4657 = vtanh.pop %v4645
  %v4658 = vtanh.pop %v4646
  %v4659 = vtanh.pop %v4647
  %v4660 = vtanh.pop %v4648
  %v4661 = vtanh.pop %v4649
  %v4662 = vtanh.pop %v4650
  %v4663 = vtanh.pop %v4651
  %v4664 = vtanh.pop %v4652
  %v4665 = vtanh.pop %v4653
  %v4666 = vtanh.pop %v4654
  %v4667 = vtanh.pop %v4655
  %v4668 = vtanh.pop %v4656
  %v4669 = vadd.f32 %v4657, 1.0
  %v4670 = vadd.f32 %v4658, 1.0
  %v4671 = vadd.f32 %v4659, 1.0
  %v4672 = vadd.f32 %v4660, 1.0
  %v4673 = vadd.f32 %v4661, 1.0
  %v4674 = vadd.f32 %v4662, 1.0
  %v4675 = vadd.f32 %v4663, 1.0
  %v4676 = vadd.f32 %v4664, 1.0
  %v4677 = vadd.f32 %v4665, 1.0
  %v4678 = vadd.f32 %v4666, 1.0
  %v4679 = vadd.f32 %v4667, 1.0
  %v4680 = vadd.f32 %v4668, 1.0
  %v4681 = vmul.f32 %v4669, 0.5
  %v4682 = vmul.f32 %v4670, 0.5
  %v4683 = vmul.f32 %v4671, 0.5
  %v4684 = vmul.f32 %v4672, 0.5
  %v4685 = vmul.f32 %v4673, 0.5
  %v4686 = vmul.f32 %v4674, 0.5
  %v4687 = vmul.f32 %v4675, 0.5
  %v4688 = vmul.f32 %v4676, 0.5
  %v4689 = vmul.f32 %v4677, 0.5
  %v4690 = vmul.f32 %v4678, 0.5
  %v4691 = vmul.f32 %v4679, 0.5
  %v4692 = vmul.f32 %v4680, 0.5
  %v4693 = vmul.f32 %v4585, %v4681
  %v4694 = vmul.f32 %v4586, %v4682
  %v4695 = vmul.f32 %v4587, %v4683
  %v4696 = vmul.f32 %v4588, %v4684
  %v4697 = vmul.f32 %v4589, %v4685
  %v4698 = vmul.f32 %v4590, %v4686
  %v4699 = vmul.f32 %v4591, %v4687
  %v4700 = vmul.f32 %v4592, %v4688
  %v4701 = vmul.f32 %v4593, %v4689
  %v4702 = vmul.f32 %v4594, %v4690
  %v4703 = vmul.f32 %v4595, %v4691
  %v4704 = vmul.f32 %v4596, %v4692
  %v4705 = vadd.f32 %v4693, %v4694
  %v4706 = vadd.f32 %v4705, %v4695
  %v4707 = vadd.f32 %v4706, %v4696
  %v4708 = vadd.f32 %v4707, %v4697
  %v4709 = vadd.f32 %v4708, %v4698
  %4710 = vadd.xlane.f32.xlu0 %v4709
  %v4711 = vpop.xlane.xlu0 %4710
  %v4712 = vadd.f32 %v4699, %v4700
  %v4713 = vadd.f32 %v4712, %v4701
  %v4714 = vadd.f32 %v4713, %v4702
  %v4715 = vadd.f32 %v4714, %v4703
  %v4716 = vadd.f32 %v4715, %v4704
  %4717 = vadd.xlane.f32.xlu0 %v4716
  %v4718 = vpop.xlane.xlu0 %4717
  %v4719 = vrcp.pop 768.0
  %v4720 = vmul.f32 768.0, %v4719
  %v4721 = vsub.f32 1.0, %v4720
  %v4722 = vmul.f32 %v4719, %v4721
  %v4723 = vadd.f32 %v4719, %v4722
  %vm4724 = vweird.f32 %v4719
  %v4725 = vsel %vm4724, %v4719, %v4723
  %v4726 = vmul.f32 %v4711, %v4725
  %v4727 = vmul.f32 %v4718, %v4725
  %v4728 = vmul.f32 %v4693, %v4693
  %v4729 = vmul.f32 %v4694, %v4694
  %v4730 = vmul.f32 %v4695, %v4695
  %v4731 = vmul.f32 %v4696, %v4696
  %v4732 = vmul.f32 %v4697, %v4697
  %v4733 = vmul.f32 %v4698, %v4698
  %v4734 = vmul.f32 %v4699, %v4699
  %v4735 = vmul.f32 %v4700, %v4700
  %v4736 = vmul.f32 %v4701, %v4701
  %v4737 = vmul.f32 %v4702, %v4702
  %v4738 = vmul.f32 %v4703, %v4703
  %v4739 = vmul.f32 %v4704, %v4704
  %v4740 = vadd.f32 %v4728, %v4729
  %v4741 = vadd.f32 %v4740, %v4730
  %v4742 = vadd.f32 %v4741, %v4731
  %v4743 = vadd.f32 %v4742, %v4732
  %v4744 = vadd.f32 %v4743, %v4733
  %4745 = vadd.xlane.f32.xlu0 %v4744
  %v4746 = vpop.xlane.xlu0 %4745
  %v4747 = vadd.f32 %v4734, %v4735
  %v4748 = vadd.f32 %v4747, %v4736
  %v4749 = vadd.f32 %v4748, %v4737
  %v4750 = vadd.f32 %v4749, %v4738
  %v4751 = vadd.f32 %v4750, %v4739
  %4752 = vadd.xlane.f32.xlu0 %v4751
  %v4753 = vpop.xlane.xlu0 %4752
  %v4754 = vmul.f32 %v4746, %v4725
  %v4755 = vmul.f32 %v4753, %v4725
  %v4756 = vmul.f32 %v4726, %v4726
  %v4757 = vmul.f32 %v4727, %v4727
  %v4758 = vsub.f32 %v4754, %v4756
  %v4759 = vsub.f32 %v4755, %v4757
  %v4760 = vmax.f32 %v4758, 0.0
  %v4761 = vmax.f32 %v4759, 0.0
  %v4762 = vsub.f32 %v4693, %v4726
  %v4763 = vsub.f32 %v4694, %v4726
  %v4764 = vsub.f32 %v4695, %v4726
  %v4765 = vsub.f32 %v4696, %v4726
  %v4766 = vsub.f32 %v4697, %v4726
  %v4767 = vsub.f32 %v4698, %v4726
  %v4768 = vsub.f32 %v4699, %v4727
  %v4769 = vsub.f32 %v4700, %v4727
  %v4770 = vsub.f32 %v4701, %v4727
  %v4771 = vsub.f32 %v4702, %v4727
  %v4772 = vsub.f32 %v4703, %v4727
  %v4773 = vsub.f32 %v4704, %v4727
  %v4774 = vadd.f32 %v4760, 1e-12
  %v4775 = vadd.f32 %v4761, 1e-12
  %v4776 = vrsqrt.pop %v4774
  %v4777 = vmul.f32 %v4776, %v4774
  %v4778 = vmul.f32 %v4777, %v4776
  %v4779 = vmul.f32 0.5, %v4778
  %v4780 = vsub.f32 1.5, %v4779
  %v4781 = vmul.f32 %v4776, %v4780
  %vm4782 = vweird.f32 %v4774
  %vm4783 = vweird.f32 %v4776
  %vm4784 = vmor %vm4782, %vm4783
  %v4785 = vsel %vm4784, %v4776, %v4781
  %v4786 = vrsqrt.pop %v4775
  %v4787 = vmul.f32 %v4786, %v4775
  %v4788 = vmul.f32 %v4787, %v4786
  %v4789 = vmul.f32 0.5, %v4788
  %v4790 = vsub.f32 1.5, %v4789
  %v4791 = vmul.f32 %v4786, %v4790
  %vm4792 = vweird.f32 %v4775
  %vm4793 = vweird.f32 %v4786
  %vm4794 = vmor %vm4792, %vm4793
  %v4795 = vsel %vm4794, %v4786, %v4791
  %v4796 = vmul.f32 %v4762, %v4785
  %v4797 = vmul.f32 %v4763, %v4785
  %v4798 = vmul.f32 %v4764, %v4785
  %v4799 = vmul.f32 %v4765, %v4785
  %v4800 = vmul.f32 %v4766, %v4785
  %v4801 = vmul.f32 %v4767, %v4785
  %v4802 = vmul.f32 %v4768, %v4795
  %v4803 = vmul.f32 %v4769, %v4795
  %v4804 = vmul.f32 %v4770, %v4795
  %v4805 = vmul.f32 %v4771, %v4795
  %v4806 = vmul.f32 %v4772, %v4795
  %v4807 = vmul.f32 %v4773, %v4795
  %v4808 = vld [vmem:[%s5] sm:$0x3f]
  %v4810 = vperm.slane %v4808, 0
  %v4811 = vperm.slane %v4808, 1
  %v4812 = vperm.slane %v4808, 2
  %v4813 = vperm.slane %v4808, 3
  %v4814 = vperm.slane %v4808, 4
  %v4815 = vperm.slane %v4808, 5
  %v4822 = vmul.f32 %v4796, %v4810
  %v4823 = vmul.f32 %v4797, %v4811
  %v4824 = vmul.f32 %v4798, %v4812
  %v4825 = vmul.f32 %v4799, %v4813
  %v4826 = vmul.f32 %v4800, %v4814
  %v4827 = vmul.f32 %v4801, %v4815
  %v4828 = vmul.f32 %v4802, %v4810
  %v4829 = vmul.f32 %v4803, %v4811
  %v4830 = vmul.f32 %v4804, %v4812
  %v4831 = vmul.f32 %v4805, %v4813
  %v4832 = vmul.f32 %v4806, %v4814
  %v4833 = vmul.f32 %v4807, %v4815
  %v4834 = vld [vmem:[%s6] sm:$0x3f]
  %v4836 = vperm.slane %v4834, 0
  %v4837 = vperm.slane %v4834, 1
  %v4838 = vperm.slane %v4834, 2
  %v4839 = vperm.slane %v4834, 3
  %v4840 = vperm.slane %v4834, 4
  %v4841 = vperm.slane %v4834, 5
  %v4848 = vadd.f32 %v4822, %v4836
  %v4849 = vadd.f32 %v4823, %v4837
  %v4850 = vadd.f32 %v4824, %v4838
  %v4851 = vadd.f32 %v4825, %v4839
  %v4852 = vadd.f32 %v4826, %v4840
  %v4853 = vadd.f32 %v4827, %v4841
  %v4854 = vadd.f32 %v4828, %v4836
  %v4855 = vadd.f32 %v4829, %v4837
  %v4856 = vadd.f32 %v4830, %v4838
  %v4857 = vadd.f32 %v4831, %v4839
  %v4858 = vadd.f32 %v4832, %v4840
  %v4859 = vadd.f32 %v4833, %v4841
  %v4860 = vpack.c.bf16 %v4854, %v4848
  %v4861 = vpack.c.bf16 %v4855, %v4849
  %v4862 = vpack.c.bf16 %v4856, %v4850
  %v4863 = vpack.c.bf16 %v4857, %v4851
  %v4864 = vpack.c.bf16 %v4858, %v4852
  %v4865 = vpack.c.bf16 %v4859, %v4853
  %v4866 = vld [vmem:[%s7] sm:$0xf]
  %v4867 = vld [vmem:[%s7 + $0x4] sm:$0xf]
  %v4868 = vld [vmem:[%s7 + $0x8] sm:$0xf]
  %v4869 = vld [vmem:[%s7 + $0xc] sm:$0xf]
  %v4870 = vld [vmem:[%s7 + $0x10] sm:$0xf]
  %v4871 = vld [vmem:[%s7 + $0x14] sm:$0xf]
  %v4872 = vld [vmem:[%s7 + $0x18] sm:$0xf]
  %v4873 = vld [vmem:[%s7 + $0x1c] sm:$0xf]
  %v4874 = vld [vmem:[%s7 + $0x20] sm:$0xf]
  %v4875 = vld [vmem:[%s7 + $0x24] sm:$0xf]
  %v4876 = vld [vmem:[%s7 + $0x28] sm:$0xf]
  %v4877 = vld [vmem:[%s7 + $0x2c] sm:$0xf]
  %v4878 = vld [vmem:[%s7 + $0x30] sm:$0xf]
  %v4879 = vld [vmem:[%s7 + $0x34] sm:$0xf]
  %v4880 = vld [vmem:[%s7 + $0x38] sm:$0xf]
  %v4881 = vld [vmem:[%s7 + $0x3c] sm:$0xf]
  %v4882 = vld [vmem:[%s7 + $0x40] sm:$0xf]
  %v4883 = vld [vmem:[%s7 + $0x44] sm:$0xf]
  %v4884 = vld [vmem:[%s7 + $0x48] sm:$0xf]
  %v4885 = vld [vmem:[%s7 + $0x4c] sm:$0xf]
  %v4886 = vld [vmem:[%s7 + $0x50] sm:$0xf]
  %v4887 = vld [vmem:[%s7 + $0x54] sm:$0xf]
  %v4888 = vld [vmem:[%s7 + $0x58] sm:$0xf]
  %v4889 = vld [vmem:[%s7 + $0x5c] sm:$0xf]
  %v4890 = vld [vmem:[%s7 + $0x60] sm:$0xf]
  %v4891 = vld [vmem:[%s7 + $0x64] sm:$0xf]
  %v4892 = vld [vmem:[%s7 + $0x68] sm:$0xf]
  %v4893 = vld [vmem:[%s7 + $0x6c] sm:$0xf]
  %v4894 = vld [vmem:[%s7 + $0x70] sm:$0xf]
  %v4895 = vld [vmem:[%s7 + $0x74] sm:$0xf]
  %v4896 = vld [vmem:[%s7 + $0x78] sm:$0xf]
  %v4897 = vld [vmem:[%s7 + $0x7c] sm:$0xf]
  %v4898 = vld [vmem:[%s7 + $0x80] sm:$0xf]
  %v4899 = vld [vmem:[%s7 + $0x84] sm:$0xf]
  %v4900 = vld [vmem:[%s7 + $0x88] sm:$0xf]
  %v4901 = vld [vmem:[%s7 + $0x8c] sm:$0xf]
  %v4902 = vld [vmem:[%s7 + $0x90] sm:$0xf]
  %v4903 = vld [vmem:[%s7 + $0x94] sm:$0xf]
  %v4904 = vld [vmem:[%s7 + $0x98] sm:$0xf]
  %v4905 = vld [vmem:[%s7 + $0x9c] sm:$0xf]
  %v4906 = vld [vmem:[%s7 + $0xa0] sm:$0xf]
  %v4907 = vld [vmem:[%s7 + $0xa4] sm:$0xf]
  %v4908 = vld [vmem:[%s7 + $0xa8] sm:$0xf]
  %v4909 = vld [vmem:[%s7 + $0xac] sm:$0xf]
  %v4910 = vld [vmem:[%s7 + $0xb0] sm:$0xf]
  %v4911 = vld [vmem:[%s7 + $0xb4] sm:$0xf]
  %v4912 = vld [vmem:[%s7 + $0xb8] sm:$0xf]
  %v4913 = vld [vmem:[%s7 + $0xbc] sm:$0xf]
  %v4914 = vld [vmem:[%s7 + $0xc0] sm:$0xf]
  %v4915 = vld [vmem:[%s7 + $0xc4] sm:$0xf]
  %v4916 = vld [vmem:[%s7 + $0xc8] sm:$0xf]
  %v4917 = vld [vmem:[%s7 + $0xcc] sm:$0xf]
  %v4918 = vld [vmem:[%s7 + $0xd0] sm:$0xf]
  %v4919 = vld [vmem:[%s7 + $0xd4] sm:$0xf]
  %v4920 = vld [vmem:[%s7 + $0xd8] sm:$0xf]
  %v4921 = vld [vmem:[%s7 + $0xdc] sm:$0xf]
  %v4922 = vld [vmem:[%s7 + $0xe0] sm:$0xf]
  %v4923 = vld [vmem:[%s7 + $0xe4] sm:$0xf]
  %v4924 = vld [vmem:[%s7 + $0xe8] sm:$0xf]
  %v4925 = vld [vmem:[%s7 + $0xec] sm:$0xf]
  %v4926 = vld [vmem:[%s7 + $0xf0] sm:$0xf]
  %v4927 = vld [vmem:[%s7 + $0xf4] sm:$0xf]
  %v4928 = vld [vmem:[%s7 + $0xf8] sm:$0xf]
  %v4929 = vld [vmem:[%s7 + $0xfc] sm:$0xf]
  %v4930 = vld [vmem:[%s7 + $0x100] sm:$0xf]
  %v4931 = vld [vmem:[%s7 + $0x104] sm:$0xf]
  %v4932 = vld [vmem:[%s7 + $0x108] sm:$0xf]
  %v4933 = vld [vmem:[%s7 + $0x10c] sm:$0xf]
  %v4934 = vld [vmem:[%s7 + $0x110] sm:$0xf]
  %v4935 = vld [vmem:[%s7 + $0x114] sm:$0xf]
  %v4936 = vld [vmem:[%s7 + $0x118] sm:$0xf]
  %v4937 = vld [vmem:[%s7 + $0x11c] sm:$0xf]
  %v4938 = vld [vmem:[%s7 + $0x120] sm:$0xf]
  %v4939 = vld [vmem:[%s7 + $0x124] sm:$0xf]
  %v4940 = vld [vmem:[%s7 + $0x128] sm:$0xf]
  %v4941 = vld [vmem:[%s7 + $0x12c] sm:$0xf]
  %v4942 = vld [vmem:[%s7 + $0x130] sm:$0xf]
  %v4943 = vld [vmem:[%s7 + $0x134] sm:$0xf]
  %v4944 = vld [vmem:[%s7 + $0x138] sm:$0xf]
  %v4945 = vld [vmem:[%s7 + $0x13c] sm:$0xf]
  %v4946 = vld [vmem:[%s7 + $0x140] sm:$0xf]
  %v4947 = vld [vmem:[%s7 + $0x144] sm:$0xf]
  %v4948 = vld [vmem:[%s7 + $0x148] sm:$0xf]
  %v4949 = vld [vmem:[%s7 + $0x14c] sm:$0xf]
  %v4950 = vld [vmem:[%s7 + $0x150] sm:$0xf]
  %v4951 = vld [vmem:[%s7 + $0x154] sm:$0xf]
  %v4952 = vld [vmem:[%s7 + $0x158] sm:$0xf]
  %v4953 = vld [vmem:[%s7 + $0x15c] sm:$0xf]
  %v4954 = vld [vmem:[%s7 + $0x160] sm:$0xf]
  %v4955 = vld [vmem:[%s7 + $0x164] sm:$0xf]
  %v4956 = vld [vmem:[%s7 + $0x168] sm:$0xf]
  %v4957 = vld [vmem:[%s7 + $0x16c] sm:$0xf]
  %v4958 = vld [vmem:[%s7 + $0x170] sm:$0xf]
  %v4959 = vld [vmem:[%s7 + $0x174] sm:$0xf]
  %v4960 = vld [vmem:[%s7 + $0x178] sm:$0xf]
  %v4961 = vld [vmem:[%s7 + $0x17c] sm:$0xf]
  %v4962 = vld [vmem:[%s8] sm:$0x1]
  %v4964 = vperm.slane %v4962, 0
  %v5062 = vunpack.c.l.b16 %v4866
  %v5063 = vunpack.c.l.b16 %v4867
  %v5064 = vunpack.c.l.b16 %v4868
  %v5065 = vunpack.c.l.b16 %v4869
  %v5066 = vunpack.c.l.b16 %v4870
  %v5067 = vunpack.c.l.b16 %v4871
  %v5068 = vunpack.c.l.b16 %v4872
  %v5069 = vunpack.c.l.b16 %v4873
  %v5070 = vunpack.c.l.b16 %v4874
  %v5071 = vunpack.c.l.b16 %v4875
  %v5072 = vunpack.c.l.b16 %v4876
  %v5073 = vunpack.c.l.b16 %v4877
  %v5074 = vunpack.c.l.b16 %v4878
  %v5075 = vunpack.c.l.b16 %v4879
  %v5076 = vunpack.c.l.b16 %v4880
  %v5077 = vunpack.c.l.b16 %v4881
  %v5078 = vunpack.c.l.b16 %v4882
  %v5079 = vunpack.c.l.b16 %v4883
  %v5080 = vunpack.c.l.b16 %v4884
  %v5081 = vunpack.c.l.b16 %v4885
  %v5082 = vunpack.c.l.b16 %v4886
  %v5083 = vunpack.c.l.b16 %v4887
  %v5084 = vunpack.c.l.b16 %v4888
  %v5085 = vunpack.c.l.b16 %v4889
  %v5086 = vunpack.c.l.b16 %v4890
  %v5087 = vunpack.c.l.b16 %v4891
  %v5088 = vunpack.c.l.b16 %v4892
  %v5089 = vunpack.c.l.b16 %v4893
  %v5090 = vunpack.c.l.b16 %v4894
  %v5091 = vunpack.c.l.b16 %v4895
  %v5092 = vunpack.c.l.b16 %v4896
  %v5093 = vunpack.c.l.b16 %v4897
  %v5094 = vunpack.c.l.b16 %v4898
  %v5095 = vunpack.c.l.b16 %v4899
  %v5096 = vunpack.c.l.b16 %v4900
  %v5097 = vunpack.c.l.b16 %v4901
  %v5098 = vunpack.c.l.b16 %v4902
  %v5099 = vunpack.c.l.b16 %v4903
  %v5100 = vunpack.c.l.b16 %v4904
  %v5101 = vunpack.c.l.b16 %v4905
  %v5102 = vunpack.c.l.b16 %v4906
  %v5103 = vunpack.c.l.b16 %v4907
  %v5104 = vunpack.c.l.b16 %v4908
  %v5105 = vunpack.c.l.b16 %v4909
  %v5106 = vunpack.c.l.b16 %v4910
  %v5107 = vunpack.c.l.b16 %v4911
  %v5108 = vunpack.c.l.b16 %v4912
  %v5109 = vunpack.c.l.b16 %v4913
  %v5110 = vunpack.c.l.b16 %v4914
  %v5111 = vunpack.c.l.b16 %v4915
  %v5112 = vunpack.c.l.b16 %v4916
  %v5113 = vunpack.c.l.b16 %v4917
  %v5114 = vunpack.c.l.b16 %v4918
  %v5115 = vunpack.c.l.b16 %v4919
  %v5116 = vunpack.c.l.b16 %v4920
  %v5117 = vunpack.c.l.b16 %v4921
  %v5118 = vunpack.c.l.b16 %v4922
  %v5119 = vunpack.c.l.b16 %v4923
  %v5120 = vunpack.c.l.b16 %v4924
  %v5121 = vunpack.c.l.b16 %v4925
  %v5122 = vunpack.c.l.b16 %v4926
  %v5123 = vunpack.c.l.b16 %v4927
  %v5124 = vunpack.c.l.b16 %v4928
  %v5125 = vunpack.c.l.b16 %v4929
  %v5126 = vunpack.c.l.b16 %v4930
  %v5127 = vunpack.c.l.b16 %v4931
  %v5128 = vunpack.c.l.b16 %v4932
  %v5129 = vunpack.c.l.b16 %v4933
  %v5130 = vunpack.c.l.b16 %v4934
  %v5131 = vunpack.c.l.b16 %v4935
  %v5132 = vunpack.c.l.b16 %v4936
  %v5133 = vunpack.c.l.b16 %v4937
  %v5134 = vunpack.c.l.b16 %v4938
  %v5135 = vunpack.c.l.b16 %v4939
  %v5136 = vunpack.c.l.b16 %v4940
  %v5137 = vunpack.c.l.b16 %v4941
  %v5138 = vunpack.c.l.b16 %v4942
  %v5139 = vunpack.c.l.b16 %v4943
  %v5140 = vunpack.c.l.b16 %v4944
  %v5141 = vunpack.c.l.b16 %v4945
  %v5142 = vunpack.c.l.b16 %v4946
  %v5143 = vunpack.c.l.b16 %v4947
  %v5144 = vunpack.c.l.b16 %v4948
  %v5145 = vunpack.c.l.b16 %v4949
  %v5146 = vunpack.c.l.b16 %v4950
  %v5147 = vunpack.c.l.b16 %v4951
  %v5148 = vunpack.c.l.b16 %v4952
  %v5149 = vunpack.c.l.b16 %v4953
  %v5150 = vunpack.c.l.b16 %v4954
  %v5151 = vunpack.c.l.b16 %v4955
  %v5152 = vunpack.c.l.b16 %v4956
  %v5153 = vunpack.c.l.b16 %v4957
  %v5154 = vunpack.c.l.b16 %v4958
  %v5155 = vunpack.c.l.b16 %v4959
  %v5156 = vunpack.c.l.b16 %v4960
  %v5157 = vunpack.c.l.b16 %v4961
  %v5158 = vpack.c.b16 %v5063, %v5062
  %v5159 = vpack.c.b16 %v5065, %v5064
  %v5160 = vpack.c.b16 %v5067, %v5066
  %v5161 = vpack.c.b16 %v5069, %v5068
  %v5162 = vpack.c.b16 %v5071, %v5070
  %v5163 = vpack.c.b16 %v5073, %v5072
  %v5164 = vpack.c.b16 %v5075, %v5074
  %v5165 = vpack.c.b16 %v5077, %v5076
  %v5166 = vpack.c.b16 %v5079, %v5078
  %v5167 = vpack.c.b16 %v5081, %v5080
  %v5168 = vpack.c.b16 %v5083, %v5082
  %v5169 = vpack.c.b16 %v5085, %v5084
  %v5170 = vpack.c.b16 %v5087, %v5086
  %v5171 = vpack.c.b16 %v5089, %v5088
  %v5172 = vpack.c.b16 %v5091, %v5090
  %v5173 = vpack.c.b16 %v5093, %v5092
  %v5174 = vpack.c.b16 %v5095, %v5094
  %v5175 = vpack.c.b16 %v5097, %v5096
  %v5176 = vpack.c.b16 %v5099, %v5098
  %v5177 = vpack.c.b16 %v5101, %v5100
  %v5178 = vpack.c.b16 %v5103, %v5102
  %v5179 = vpack.c.b16 %v5105, %v5104
  %v5180 = vpack.c.b16 %v5107, %v5106
  %v5181 = vpack.c.b16 %v5109, %v5108
  %v5182 = vpack.c.b16 %v5111, %v5110
  %v5183 = vpack.c.b16 %v5113, %v5112
  %v5184 = vpack.c.b16 %v5115, %v5114
  %v5185 = vpack.c.b16 %v5117, %v5116
  %v5186 = vpack.c.b16 %v5119, %v5118
  %v5187 = vpack.c.b16 %v5121, %v5120
  %v5188 = vpack.c.b16 %v5123, %v5122
  %v5189 = vpack.c.b16 %v5125, %v5124
  %v5190 = vpack.c.b16 %v5127, %v5126
  %v5191 = vpack.c.b16 %v5129, %v5128
  %v5192 = vpack.c.b16 %v5131, %v5130
  %v5193 = vpack.c.b16 %v5133, %v5132
  %v5194 = vpack.c.b16 %v5135, %v5134
  %v5195 = vpack.c.b16 %v5137, %v5136
  %v5196 = vpack.c.b16 %v5139, %v5138
  %v5197 = vpack.c.b16 %v5141, %v5140
  %v5198 = vpack.c.b16 %v5143, %v5142
  %v5199 = vpack.c.b16 %v5145, %v5144
  %v5200 = vpack.c.b16 %v5147, %v5146
  %v5201 = vpack.c.b16 %v5149, %v5148
  %v5202 = vpack.c.b16 %v5151, %v5150
  %v5203 = vpack.c.b16 %v5153, %v5152
  %v5204 = vpack.c.b16 %v5155, %v5154
  %v5205 = vpack.c.b16 %v5157, %v5156
  %5254 = vmatpush.bf16.msra.mxu0 %v5165
  %5255 = vmatpush.bf16.msra.mxu0 %v5164
  %5256 = vmatpush.bf16.msra.mxu0 %v5163
  %5257 = vmatpush.bf16.msra.mxu0 %v5162
  %5258 = vmatpush.bf16.msra.mxu0 %v5161
  %5259 = vmatpush.bf16.msra.mxu0 %v5160
  %5260 = vmatpush.bf16.msra.mxu0 %v5159
  %5261 = vmatpush.bf16.msra.mxu0 %v5158
  %5262 = vmatmul.bf16.gmra.mxu0 %v4860
  %v5263 = vpop.f32.mrf.mxu0
  %v5264 = vadd.f32 %v4964, %v5263
  %v5265 = vpop.f32.mrf.mxu0
  %v5266 = vadd.f32 %v4964, %v5265
  %5267 = vdwg.mxu0
  %5268 = vmatpush.bf16.msra.mxu0 %v5173
  %5269 = vmatpush.bf16.msra.mxu0 %v5172
  %5270 = vmatpush.bf16.msra.mxu0 %v5171
  %5271 = vmatpush.bf16.msra.mxu0 %v5170
  %5272 = vmatpush.bf16.msra.mxu0 %v5169
  %5273 = vmatpush.bf16.msra.mxu0 %v5168
  %5274 = vmatpush.bf16.msra.mxu0 %v5167
  %5275 = vmatpush.bf16.msra.mxu0 %v5166
  %5276 = vmatmul.bf16.gmra.mxu0 %v4861
  %v5277 = vpop.f32.mrf.mxu0
  %v5278 = vadd.f32 %v5264, %v5277
  %v5279 = vpop.f32.mrf.mxu0
  %v5280 = vadd.f32 %v5266, %v5279
  %5281 = vdwg.mxu0
  %5282 = vmatpush.bf16.msra.mxu0 %v5181
  %5283 = vmatpush.bf16.msra.mxu0 %v5180
  %5284 = vmatpush.bf16.msra.mxu0 %v5179
  %5285 = vmatpush.bf16.msra.mxu0 %v5178
  %5286 = vmatpush.bf16.msra.mxu0 %v5177
  %5287 = vmatpush.bf16.msra.mxu0 %v5176
  %5288 = vmatpush.bf16.msra.mxu0 %v5175
  %5289 = vmatpush.bf16.msra.mxu0 %v5174
  %5290 = vmatmul.bf16.gmra.mxu0 %v4862
  %v5291 = vpop.f32.mrf.mxu0
  %v5292 = vadd.f32 %v5278, %v5291
  %v5293 = vpop.f32.mrf.mxu0
  %v5294 = vadd.f32 %v5280, %v5293
  %5295 = vdwg.mxu0
  %5296 = vmatpush.bf16.msra.mxu0 %v5189
  %5297 = vmatpush.bf16.msra.mxu0 %v5188
  %5298 = vmatpush.bf16.msra.mxu0 %v5187
  %5299 = vmatpush.bf16.msra.mxu0 %v5186
  %5300 = vmatpush.bf16.msra.mxu0 %v5185
  %5301 = vmatpush.bf16.msra.mxu0 %v5184
  %5302 = vmatpush.bf16.msra.mxu0 %v5183
  %5303 = vmatpush.bf16.msra.mxu0 %v5182
  %5304 = vmatmul.bf16.gmra.mxu0 %v4863
  %v5305 = vpop.f32.mrf.mxu0
  %v5306 = vadd.f32 %v5292, %v5305
  %v5307 = vpop.f32.mrf.mxu0
  %v5308 = vadd.f32 %v5294, %v5307
  %5309 = vdwg.mxu0
  %5310 = vmatpush.bf16.msra.mxu0 %v5197
  %5311 = vmatpush.bf16.msra.mxu0 %v5196
  %5312 = vmatpush.bf16.msra.mxu0 %v5195
  %5313 = vmatpush.bf16.msra.mxu0 %v5194
  %5314 = vmatpush.bf16.msra.mxu0 %v5193
  %5315 = vmatpush.bf16.msra.mxu0 %v5192
  %5316 = vmatpush.bf16.msra.mxu0 %v5191
  %5317 = vmatpush.bf16.msra.mxu0 %v5190
  %5318 = vmatmul.bf16.gmra.mxu0 %v4864
  %v5319 = vpop.f32.mrf.mxu0
  %v5320 = vadd.f32 %v5306, %v5319
  %v5321 = vpop.f32.mrf.mxu0
  %v5322 = vadd.f32 %v5308, %v5321
  %5323 = vdwg.mxu0
  %5324 = vmatpush.bf16.msra.mxu0 %v5205
  %5325 = vmatpush.bf16.msra.mxu0 %v5204
  %5326 = vmatpush.bf16.msra.mxu0 %v5203
  %5327 = vmatpush.bf16.msra.mxu0 %v5202
  %5328 = vmatpush.bf16.msra.mxu0 %v5201
  %5329 = vmatpush.bf16.msra.mxu0 %v5200
  %5330 = vmatpush.bf16.msra.mxu0 %v5199
  %5331 = vmatpush.bf16.msra.mxu0 %v5198
  %5332 = vmatmul.bf16.gmra.mxu0 %v4865
  %v5333 = vpop.f32.mrf.mxu0
  %v5334 = vadd.f32 %v5320, %v5333
  %v5335 = vpop.f32.mrf.mxu0
  %v5336 = vadd.f32 %v5322, %v5335
  %5337 = vdwg.mxu0
  %v5338 = vlaneseq
  %v5339 = vand.u32 %v5338, 127
  %vm5340 = vcmp.lt.s32.totalorder %v5339, 2
  %v5341 = vsel %vm5340, %v5334, -1e+30
  %v5342 = vsel %vm5340, %v5336, -1e+30
  %5343 = vmax.xlane.f32.xlu0 %v5341
  %v5344 = vpop.xlane.xlu0 %5343
  %5345 = vmax.xlane.f32.xlu0 %v5342
  %v5346 = vpop.xlane.xlu0 %5345
  %v5347 = vsub.f32 %v5341, %v5344
  %v5348 = vsub.f32 %v5342, %v5346
  %v5349 = vmul.f32 %v5347, 1.442695
  %v5350 = vpow.pop %v5349
  %v5351 = vmul.f32 %v5348, 1.442695
  %v5352 = vpow.pop %v5351
  %5353 = vadd.xlane.f32.xlu0 %v5350
  %v5354 = vpop.xlane.xlu0 %5353
  %5355 = vadd.xlane.f32.xlu0 %v5352
  %v5356 = vpop.xlane.xlu0 %5355
  %v5357 = vlog2.pop %v5354
  %v5358 = vmul.f32 %v5357, 0.6931472
  %v5359 = vlog2.pop %v5356
  %v5360 = vmul.f32 %v5359, 0.6931472
  %v5361 = vadd.f32 %v5344, %v5358
  %v5362 = vadd.f32 %v5346, %v5360
  %v5363 = vsub.f32 %v5334, %v5361
  %v5364 = vsub.f32 %v5336, %v5362
  %v5365 = vld [vmem:[%s9] sm:$0xff]
  %v5366 = vld [vmem:[%s9 + $0x8] sm:$0xff]
  %5367 = vset.pattern.permute.xlu0 0
  %5368 = vperm.xlu0 %5367, %v5365
  %v5369 = vpop.permute.xlu0 %5368
  %5370 = vset.pattern.permute.xlu0 0
  %5371 = vperm.xlu0 %5370, %v5366
  %v5372 = vpop.permute.xlu0 %5371
  %vm5373 = vcmp.eq.s32.totalorder %v5339, %v5369
  %vm5374 = vcmp.eq.s32.totalorder %v5339, %v5372
  %v5375 = vsel %vm5373, %v5363, 0.0
  %v5376 = vsel %vm5374, %v5364, 0.0
  %5377 = vadd.xlane.f32.xlu0 %v5375
  %v5378 = vpop.xlane.xlu0 %5377
  %5379 = vadd.xlane.f32.xlu0 %v5376
  %v5380 = vpop.xlane.xlu0 %5379
  %v5381 = vsub.f32 0.0, %v5378
  %v5382 = vsub.f32 0.0, %v5380
  %vm5383 = vcmp.eq.s32.totalorder %v5339, 2
  %v5384 = vsel %vm5383, %v5381, %v5334
  %v5385 = vsel %vm5383, %v5382, %v5336
  %5386 = vst [vmem:[%s10] sm:$0xff] %v5384
  %5387 = vst [vmem:[%s10 + $0x8] sm:$0xff] %v5385
  // Predicated region
  $region42: #{forward.1} parent=0 // pred_check
    _
  $region43: #{forward.1} parent=0 // pred_check_branch
    %5389 = sbr.rel (0) target = $region45
  $region44: #{forward.1} parent=0 // pred_region
    _
  $region45: #{forward.1} parent=0 // pred_fallthru
    _
  // Predicated region
  $region46: #{forward.1} parent=0 // pred_check
    _
  $region47: #{forward.1} parent=0 // pred_check_branch
    %5391 = sbr.rel (0) target = $region49
  $region48: #{forward.1} parent=0 // pred_region
    _
  $region49: #{forward.1} parent=0 // pred_fallthru
    _

</llo_original>
